<compile_context>
chip_gen: v7x
topology: tpu7x:2x2x1
jax: 0.10.0
libtpu: 0.0.40
codegen_flags: <defaults>
</compile_context>

<pallas_src>
import math
import jax
import jax.numpy as jnp
from jax.experimental import pallas as pl
from jax.experimental.pallas import tpu as pltpu

F32 = jnp.float32

# ----------------------------- config ---------------------------------------
N_ENT = 16          # entity-graph nodes
E_ENT = 40          # entity-graph edges
INP_DIM = 16        # args.inp_dim
HID = 32            # args.hid_dim_ent == args.hid_dim_rel
NUM_HEAD = 4        # args.num_head
DIM_HID = HID // NUM_HEAD
NUM_REL = 8         # args.aug_num_rels == rel-graph nodes
E_REL = 24          # rel-graph edges
NUM_BIN = 5         # args.num_bin
NUM_LAYER_ENT = 2   # args.num_layer_ent
NUM_LAYER_REL = 2   # args.num_layer_rel
E_AUG = E_ENT + N_ENT   # entity edges + one self loop per node

# head selection / expansion matrices (shared by all layers)
_SEL = ((jnp.arange(HID) // DIM_HID)[:, None] == jnp.arange(NUM_HEAD)[None, :])
ATTN_SEL = _SEL.astype(F32)          # (HID, NUM_HEAD): sums dh-chunks per head
ATTN_EXP = ATTN_SEL.T                # (NUM_HEAD, HID): repeats head value over dh lanes


# --------------------------- in-kernel helpers --------------------------------
def _leaky(x):
    return jnp.where(x > 0, x, 0.2 * x)           # LeakyReLU(negative_slope=0.2)


def _dot(a, b):
    return jnp.dot(a, b, preferred_element_type=F32)


def _segment_softmax(raw_nh, G, Gt, aexp):
    """Per-head segment softmax over groups given by one-hot G.

    raw_nh : (E, NUM_HEAD) per-edge per-head logits
    G      : (E, Nodes)  one-hot group (gather = G @ node_vals)
    Gt     : (Nodes, E)  == G.T        (scatter = Gt @ edge_vals)
    aexp   : (NUM_HEAD, HID) 0/1 head -> lane-block expansion
    returns: (E, HID) softmax weights, each head repeated over its DIM_HID lanes

    A single global per-head max is subtracted instead of the per-group max:
    softmax is shift-invariant within each group, so the result is identical
    (groups whose max logit is >~80 below the global max would underflow to
    the 1e-16 guard, which does not occur at these magnitudes).
    """
    gmax = jnp.max(raw_nh, axis=0, keepdims=True)                 # (1, NH)
    av = jnp.exp(_dot(raw_nh - gmax, aexp))                       # (E, HID)
    sums = _dot(Gt, av)                                           # (Nodes, HID)
    denom = _dot(G, sums) + 1e-16                                 # (E, HID)
    return av * pl.reciprocal(denom, approx=True)


# ------------------------------ fused kernel ----------------------------------
def _fused_encoder_kernel(
        feat_ref, w1_ref, emb_rel0_ref,
        rel_HT_ref, rel_Ht_ref,
        ent_TH_ref, ent_Tt_ref, ent_Reff_ref,
        aexp_ref,
        rel_W_ref, rel_asel_ref, rel_bin_ref, rel_rw_ref, rel_rb_ref,
        ent_W_ref, ent_asel_ref, ent_rw_ref, ent_rb_ref,
        out_ref):
    aexp = aexp_ref[...]

    # ent_proj1 (bias folded: ones column on feat, bias row on w1)
    emb_ent = _dot(feat_ref[...], w1_ref[...])                    # (N_ENT, HID)
    # rel_emb lookup done in the glue (plain gather)
    emb_rel = emb_rel0_ref[...]                                   # (NUM_REL, HID)

    # ---- relation-graph layers (softmax grouped by HEAD node), res fused ----
    rel_H = rel_HT_ref[0]                                         # (E_REL, NUM_REL)
    rel_T = rel_HT_ref[1]
    rel_Ht = rel_Ht_ref[...]                                      # (NUM_REL, E_REL)
    ones_rel = jnp.ones((E_REL, 1), F32)

    for l in range(NUM_LAYER_REL):
        xh = _dot(rel_H, emb_rel)                                 # emb_rel[head]
        xt = _dot(rel_T, emb_rel)                                 # emb_rel[tail]
        cat = jnp.concatenate([xh, xt, ones_rel], axis=-1)        # (E_REL, 2H+1)
        fused = _dot(cat, rel_W_ref[l])                           # (E_REL, 2H): [pre | aggr]
        pre, aggr = fused[:, :HID], fused[:, HID:]
        raw = _dot(_leaky(pre), rel_asel_ref[l]) + rel_bin_ref[l]  # (E_REL, NH)
        beta = _segment_softmax(raw, rel_H, rel_Ht, aexp)
        lay = _dot(rel_Ht, beta * aggr)                           # scatter-add by head
        emb_rel = jnp.maximum(
            lay + _dot(emb_rel, rel_rw_ref[l]) + rel_rb_ref[l], 0.0)

    # edge relation features of the self-loop-augmented entity graph; emb_rel
    # is now fixed, so compute once and reuse across both entity layers.
    er_aug = _dot(ent_Reff_ref[...], emb_rel)                     # (E_AUG, HID)

    # ---- entity-graph layers (softmax grouped by TAIL node), res fused ------
    ent_T = ent_TH_ref[0]                                         # (E_AUG, N_ENT)
    ent_H = ent_TH_ref[1]
    ent_Tt = ent_Tt_ref[...]                                      # (N_ENT, E_AUG)
    ones_ent = jnp.ones((E_AUG, 1), F32)

    for l in range(NUM_LAYER_ENT):
        xt = _dot(ent_T, emb_ent)                                 # emb_ent[tail] (incl. self loops)
        xh = _dot(ent_H, emb_ent)                                 # emb_ent[head]
        cat = jnp.concatenate([xt, xh, er_aug, ones_ent], axis=-1)  # (E_AUG, 3H+1)
        fused = _dot(cat, ent_W_ref[l])                           # (E_AUG, 2H): [pre | aggr]
        pre, aggr = fused[:, :HID], fused[:, HID:]
        raw = _dot(_leaky(pre), ent_asel_ref[l])                  # (E_AUG, NH)
        beta = _segment_softmax(raw, ent_T, ent_Tt, aexp)
        lay = _dot(ent_Tt, beta * aggr)                           # scatter-add by tail
        emb_ent = jnp.maximum(
            lay + _dot(emb_ent, ent_rw_ref[l]) + ent_rb_ref[l], 0.0)

    out_ref[:N_ENT, :] = emb_ent
    out_ref[N_ENT:, :] = emb_rel


# ------------------------------ JAX glue --------------------------------------
def build_graph_constants(head_ent, tail_ent, rel_type, head_rel, tail_rel, bins):
    """Dense one-hot scatter/gather matrices (plain-JAX graph bookkeeping)."""
    ent_T = jax.nn.one_hot(tail_ent, N_ENT, dtype=F32)            # (E, N)
    ent_H = jax.nn.one_hot(head_ent, N_ENT, dtype=F32)
    ent_R = jax.nn.one_hot(rel_type, NUM_REL, dtype=F32)          # (E, NUM_REL)
    eye_n = jnp.eye(N_ENT, dtype=F32)

    # real-edge in-degree; clamp guards zero-degree nodes (NaN in the torch ref)
    freq = jnp.maximum(jnp.sum(ent_T, axis=0)[:, None], 1.0)      # (N, 1)
    Ttn = ent_T.T / freq                                          # (N, E)

    # self-loop augmented edge set (mirrors the torch.cat of arange indices)
    ent_Taug = jnp.concatenate([ent_T, eye_n], axis=0)            # (E_AUG, N)
    ent_Haug = jnp.concatenate([ent_H, eye_n], axis=0)
    # real edges select emb_rel[type]; self loops select the degree-normalized
    # average of incoming relation embeddings (== self_rel), all in one matmul.
    ent_R_eff = jnp.concatenate([ent_R, Ttn @ ent_R], axis=0)     # (E_AUG, NUM_REL)

    rel_H = jax.nn.one_hot(head_rel, NUM_REL, dtype=F32)          # (E_REL, NUM_REL)
    rel_T = jax.nn.one_hot(tail_rel, NUM_REL, dtype=F32)
    rel_B = jax.nn.one_hot(bins, NUM_BIN, dtype=F32)              # (E_REL, NUM_BIN)
    return dict(
        rel_HT=jnp.stack([rel_H, rel_T], axis=0),                 # (2, E_REL, NUM_REL)
        rel_Ht=rel_H.T,                                           # (NUM_REL, E_REL)
        rel_B=rel_B,
        ent_TH=jnp.stack([ent_Taug, ent_Haug], axis=0),           # (2, E_AUG, N_ENT)
        ent_Tt=ent_Taug.T,                                        # (N_ENT, E_AUG)
        ent_Reff=ent_R_eff,                                       # (E_AUG, NUM_REL)
    )


def _pack_rel_layer(p):
    """Block weight (2H+1, 2H): cols [0:H)=attn pre, [H:2H)=aggr; last row = biases."""
    W = jnp.zeros((2 * HID + 1, 2 * HID), F32)
    W = W.at[0:HID, 0:HID].set(p['watt_h'])
    W = W.at[HID:2 * HID, 0:HID].set(p['watt_t'])
    W = W.at[HID:2 * HID, HID:2 * HID].set(p['wagg'])
    W = W.at[2 * HID, 0:HID].set(p['batt'][0])
    W = W.at[2 * HID, HID:2 * HID].set(p['bagg'][0])
    return W


def _pack_ent_layer(p):
    """Block weight (3H+1, 2H): input order [tail | head | rel | 1]."""
    W = jnp.zeros((3 * HID + 1, 2 * HID), F32)
    W = W.at[0:HID, 0:HID].set(p['watt_t'])
    W = W.at[HID:2 * HID, 0:HID].set(p['watt_h'])
    W = W.at[2 * HID:3 * HID, 0:HID].set(p['watt_r'])
    W = W.at[HID:2 * HID, HID:2 * HID].set(p['wagg_h'])
    W = W.at[2 * HID:3 * HID, HID:2 * HID].set(p['wagg_r'])
    W = W.at[3 * HID, 0:HID].set(p['batt'][0])
    W = W.at[3 * HID, HID:2 * HID].set(p['bagg'][0])
    return W


def encoder_forward(params, feat, feat_rel, G):
    # ent_proj1 bias folded via ones column / bias row
    feat_aug = jnp.concatenate([feat, jnp.ones((feat.shape[0], 1), F32)], axis=1)
    w1_aug = jnp.concatenate(
        [params['ent_proj1']['w'], params['ent_proj1']['b']], axis=0)
    # nn.Embedding lookup (plain gather, graph bookkeeping)
    emb_rel0 = params['rel_emb'][feat_rel]

    # per-layer params stacked into slabs (one operand per kind, not per layer)
    rel_W = jnp.stack([_pack_rel_layer(p) for p in params['layers_rel']])
    rel_asel = jnp.stack([ATTN_SEL * p['attn_vec'].T for p in params['layers_rel']])
    rel_bin = jnp.stack([G['rel_B'] @ p['attn_bin'] for p in params['layers_rel']])
    rel_rw = jnp.stack([rp['w'] for rp in params['res_proj_rel']])
    rel_rb = jnp.stack([rp['b'] for rp in params['res_proj_rel']])

    ent_W = jnp.stack([_pack_ent_layer(p) for p in params['layers_ent']])
    ent_asel = jnp.stack([ATTN_SEL * p['attn_vec'].T for p in params['layers_ent']])
    ent_rw = jnp.stack([rp['w'] for rp in params['res_proj_ent']])
    ent_rb = jnp.stack([rp['b'] for rp in params['res_proj_ent']])

    inputs = [feat_aug, w1_aug, emb_rel0,
              G['rel_HT'], G['rel_Ht'],
              G['ent_TH'], G['ent_Tt'], G['ent_Reff'],
              ATTN_EXP,
              rel_W, rel_asel, rel_bin, rel_rw, rel_rb,
              ent_W, ent_asel, ent_rw, ent_rb]

    out = pl.pallas_call(
        _fused_encoder_kernel,
        out_shape=jax.ShapeDtypeStruct((N_ENT + NUM_REL, HID), F32),
        in_specs=[pl.BlockSpec(memory_space=pltpu.MemorySpace.VMEM)
                  for _ in range(len(inputs))],
        out_specs=pl.BlockSpec(memory_space=pltpu.MemorySpace.VMEM),
    )(*inputs)
    return out[:N_ENT], out[N_ENT:]


# --------------------------- parameter init -----------------------------------
def _xavier(key, shape, fan_in, fan_out, gain=math.sqrt(2.0)):
    std = gain * math.sqrt(2.0 / (fan_in + fan_out))
    return (std * jax.random.normal(key, shape)).astype(F32)


def init_params(key):
    keys = iter(jax.random.split(key, 64))
    params = {}
    params['ent_proj1'] = {
        'w': _xavier(next(keys), (INP_DIM, HID), INP_DIM, HID),
        'b': jnp.zeros((1, HID), F32),
    }
    params['rel_emb'] = jax.random.normal(next(keys), (NUM_REL, HID)).astype(F32)

    params['layers_rel'] = []
    params['res_proj_rel'] = []
    for _ in range(NUM_LAYER_REL):
        d = HID
        params['layers_rel'].append({
            # attn_proj weight (Dout, 2*d) split into [head | tail] blocks
            'watt_h': _xavier(next(keys), (d, d), 2 * d, d),
            'watt_t': _xavier(next(keys), (d, d), 2 * d, d),
            'batt': jnp.zeros((1, d), F32),
            'attn_vec': _xavier(next(keys), (1, d), NUM_HEAD * DIM_HID, DIM_HID),
            'attn_bin': _xavier(next(keys), (NUM_BIN, NUM_HEAD), NUM_HEAD, NUM_BIN),
            'wagg': _xavier(next(keys), (d, d), d, d),
            'bagg': jnp.zeros((1, d), F32),
        })
        params['res_proj_rel'].append({
            'w': _xavier(next(keys), (d, d), d, d),
            'b': jnp.zeros((1, d), F32),
        })

    params['layers_ent'] = []
    params['res_proj_ent'] = []
    for _ in range(NUM_LAYER_ENT):
        d = HID
        params['layers_ent'].append({
            # attn_proj weight (Dout, 2*d + d_rel) split into [tail | head | rel]
            'watt_t': _xavier(next(keys), (d, d), 3 * d, d),
            'watt_h': _xavier(next(keys), (d, d), 3 * d, d),
            'watt_r': _xavier(next(keys), (d, d), 3 * d, d),
            'batt': jnp.zeros((1, d), F32),
            'attn_vec': _xavier(next(keys), (1, d), NUM_HEAD * DIM_HID, DIM_HID),
            # aggr_proj weight (Dout, d + d_rel) split into [head | rel]
            'wagg_h': _xavier(next(keys), (d, d), 2 * d, d),
            'wagg_r': _xavier(next(keys), (d, d), 2 * d, d),
            'bagg': jnp.zeros((1, d), F32),
        })
        params['res_proj_ent'].append({
            'w': _xavier(next(keys), (d, d), d, d),
            'b': jnp.zeros((1, d), F32),
        })
    return params


# -------------------------------- main ----------------------------------------
if __name__ == "__main__":
    key = jax.random.PRNGKey(0)
    ks = jax.random.split(key, 16)

    # entity graph (single graph in the "batch"): every node is a tail at least
    # once so the softmax / in-degree normalization is well defined everywhere.
    head_ent = jax.random.randint(ks[0], (E_ENT,), 0, N_ENT)
    tail_ent = jnp.concatenate([
        jnp.arange(N_ENT, dtype=jnp.int32),
        jax.random.randint(ks[1], (E_ENT - N_ENT,), 0, N_ENT),
    ])
    rel_type = jax.random.randint(ks[2], (E_ENT,), 0, NUM_REL)

    # relation graph
    head_rel = jax.random.randint(ks[3], (E_REL,), 0, NUM_REL)
    tail_rel = jax.random.randint(ks[4], (E_REL,), 0, NUM_REL)
    bins = jax.random.randint(ks[5], (E_REL,), 0, NUM_BIN)

    feat = jax.random.normal(ks[6], (N_ENT, INP_DIM)).astype(F32)
    feat_rel = jnp.arange(NUM_REL, dtype=jnp.int32)  # embedding ids of rel nodes

    G = build_graph_constants(head_ent, tail_ent, rel_type,
                              head_rel, tail_rel, bins)
    params = init_params(ks[7])

    fwd = jax.jit(encoder_forward)
    emb_ent_out, emb_rel_out = fwd(params, feat, feat_rel, G)
    jax.block_until_ready((emb_ent_out, emb_rel_out))

    assert emb_ent_out.shape == (N_ENT, HID)
    assert emb_rel_out.shape == (NUM_REL, HID)
    assert bool(jnp.all(jnp.isfinite(emb_ent_out)))
    assert bool(jnp.all(jnp.isfinite(emb_rel_out)))
    print("KERNEL_OK")
</pallas_src>

<mosaic_0001>
module attributes {stable_mosaic.version = 11 : i64} {
  func.func @_fused_encoder_kernel(%arg0: memref<16x17xf32, #tpu.memory_space<vmem>>, %arg1: memref<17x32xf32, #tpu.memory_space<vmem>>, %arg2: memref<8x32xf32, #tpu.memory_space<vmem>>, %arg3: memref<2x24x8xf32, #tpu.memory_space<vmem>>, %arg4: memref<8x24xf32, #tpu.memory_space<vmem>>, %arg5: memref<2x56x16xf32, #tpu.memory_space<vmem>>, %arg6: memref<16x56xf32, #tpu.memory_space<vmem>>, %arg7: memref<56x8xf32, #tpu.memory_space<vmem>>, %arg8: memref<4x32xf32, #tpu.memory_space<vmem>>, %arg9: memref<2x65x64xf32, #tpu.memory_space<vmem>>, %arg10: memref<2x32x4xf32, #tpu.memory_space<vmem>>, %arg11: memref<2x24x4xf32, #tpu.memory_space<vmem>>, %arg12: memref<2x32x32xf32, #tpu.memory_space<vmem>>, %arg13: memref<2x1x32xf32, #tpu.memory_space<vmem>>, %arg14: memref<2x97x64xf32, #tpu.memory_space<vmem>>, %arg15: memref<2x32x4xf32, #tpu.memory_space<vmem>>, %arg16: memref<2x32x32xf32, #tpu.memory_space<vmem>>, %arg17: memref<2x1x32xf32, #tpu.memory_space<vmem>>, %arg18: memref<24x32xf32, #tpu.memory_space<vmem>>) attributes {dimension_semantics = [], scalar_prefetch = 0 : i64, scratch_operands = 0 : i64, tpu.core_type = #tpu.core_type<tc>} {
    %c0 = arith.constant 0 : index
    %c0_0 = arith.constant 0 : index
    %0 = vector.load %arg8[%c0, %c0_0] : memref<4x32xf32, #tpu.memory_space<vmem>>, vector<4x32xf32>
    %c0_1 = arith.constant 0 : index
    %c0_2 = arith.constant 0 : index
    %1 = vector.load %arg0[%c0_1, %c0_2] : memref<16x17xf32, #tpu.memory_space<vmem>>, vector<16x17xf32>
    %c0_3 = arith.constant 0 : index
    %c0_4 = arith.constant 0 : index
    %2 = vector.load %arg1[%c0_3, %c0_4] : memref<17x32xf32, #tpu.memory_space<vmem>>, vector<17x32xf32>
    %cst = arith.constant dense<0.000000e+00> : vector<16x32xf32>
    %3 = tpu.matmul %1, %2, %cst {dimension_numbers = #tpu.dot_dimension_numbers<[1], [0], [0], [1], [0, 0, 1, 1], [], []>} : vector<16x17xf32>, vector<17x32xf32>, vector<16x32xf32> -> vector<16x32xf32>
    %c0_5 = arith.constant 0 : index
    %c0_6 = arith.constant 0 : index
    %4 = vector.load %arg2[%c0_5, %c0_6] : memref<8x32xf32, #tpu.memory_space<vmem>>, vector<8x32xf32>
    %c0_7 = arith.constant 0 : index
    %c0_8 = arith.constant 0 : index
    %c0_9 = arith.constant 0 : index
    %5 = vector.load %arg3[%c0_7, %c0_8, %c0_9] : memref<2x24x8xf32, #tpu.memory_space<vmem>>, vector<1x24x8xf32>
    %6 = vector.shape_cast %5 : vector<1x24x8xf32> to vector<24x8xf32>
    %c1 = arith.constant 1 : index
    %c0_10 = arith.constant 0 : index
    %c0_11 = arith.constant 0 : index
    %7 = vector.load %arg3[%c1, %c0_10, %c0_11] : memref<2x24x8xf32, #tpu.memory_space<vmem>>, vector<1x24x8xf32>
    %8 = vector.shape_cast %7 : vector<1x24x8xf32> to vector<24x8xf32>
    %c0_12 = arith.constant 0 : index
    %c0_13 = arith.constant 0 : index
    %9 = vector.load %arg4[%c0_12, %c0_13] : memref<8x24xf32, #tpu.memory_space<vmem>>, vector<8x24xf32>
    %cst_14 = arith.constant 1.000000e+00 : f32
    %10 = vector.broadcast %cst_14 : f32 to vector<24x1xf32>
    %cst_15 = arith.constant dense<0.000000e+00> : vector<24x32xf32>
    %11 = tpu.matmul %6, %4, %cst_15 {dimension_numbers = #tpu.dot_dimension_numbers<[1], [0], [0], [1], [0, 0, 1, 1], [], []>} : vector<24x8xf32>, vector<8x32xf32>, vector<24x32xf32> -> vector<24x32xf32>
    %cst_16 = arith.constant dense<0.000000e+00> : vector<24x32xf32>
    %12 = tpu.matmul %8, %4, %cst_16 {dimension_numbers = #tpu.dot_dimension_numbers<[1], [0], [0], [1], [0, 0, 1, 1], [], []>} : vector<24x8xf32>, vector<8x32xf32>, vector<24x32xf32> -> vector<24x32xf32>
    %13 = tpu.concatenate %11, %12, %10 in 1 : vector<24x32xf32>, vector<24x32xf32>, vector<24x1xf32> -> vector<24x65xf32>
    %c0_17 = arith.constant 0 : index
    %c0_18 = arith.constant 0 : index
    %c0_19 = arith.constant 0 : index
    %14 = vector.load %arg9[%c0_17, %c0_18, %c0_19] : memref<2x65x64xf32, #tpu.memory_space<vmem>>, vector<1x65x64xf32>
    %15 = vector.shape_cast %14 : vector<1x65x64xf32> to vector<65x64xf32>
    %cst_20 = arith.constant dense<0.000000e+00> : vector<24x64xf32>
    %16 = tpu.matmul %13, %15, %cst_20 {dimension_numbers = #tpu.dot_dimension_numbers<[1], [0], [0], [1], [0, 0, 1, 1], [], []>} : vector<24x65xf32>, vector<65x64xf32>, vector<24x64xf32> -> vector<24x64xf32>
    %17 = vector.extract_strided_slice %16 {offsets = [0, 0], sizes = [24, 32], strides = [1, 1]} : vector<24x64xf32> to vector<24x32xf32>
    %18 = vector.extract_strided_slice %16 {offsets = [0, 32], sizes = [24, 32], strides = [1, 1]} : vector<24x64xf32> to vector<24x32xf32>
    %cst_21 = arith.constant 0.000000e+00 : f32
    %19 = vector.broadcast %cst_21 : f32 to vector<24x32xf32>
    %20 = arith.cmpf ogt, %17, %19 : vector<24x32xf32>
    %cst_22 = arith.constant 2.000000e-01 : f32
    %21 = vector.broadcast %cst_22 : f32 to vector<24x32xf32>
    %22 = arith.mulf %21, %17 : vector<24x32xf32>
    %23 = arith.select %20, %17, %22 : vector<24x32xi1>, vector<24x32xf32>
    %c0_23 = arith.constant 0 : index
    %c0_24 = arith.constant 0 : index
    %c0_25 = arith.constant 0 : index
    %24 = vector.load %arg10[%c0_23, %c0_24, %c0_25] : memref<2x32x4xf32, #tpu.memory_space<vmem>>, vector<1x32x4xf32>
    %25 = vector.shape_cast %24 : vector<1x32x4xf32> to vector<32x4xf32>
    %cst_26 = arith.constant dense<0.000000e+00> : vector<24x4xf32>
    %26 = tpu.matmul %23, %25, %cst_26 {dimension_numbers = #tpu.dot_dimension_numbers<[1], [0], [0], [1], [0, 0, 1, 1], [], []>} : vector<24x32xf32>, vector<32x4xf32>, vector<24x4xf32> -> vector<24x4xf32>
    %c0_27 = arith.constant 0 : index
    %c0_28 = arith.constant 0 : index
    %c0_29 = arith.constant 0 : index
    %27 = vector.load %arg11[%c0_27, %c0_28, %c0_29] : memref<2x24x4xf32, #tpu.memory_space<vmem>>, vector<1x24x4xf32>
    %28 = vector.shape_cast %27 : vector<1x24x4xf32> to vector<24x4xf32>
    %29 = arith.addf %26, %28 : vector<24x4xf32>
    %cst_30 = arith.constant dense<0xFF800000> : vector<4xf32>
    %30 = vector.multi_reduction <maximumf>, %29, %cst_30 [0] : vector<24x4xf32> to vector<4xf32>
    %31 = vector.shape_cast %30 : vector<4xf32> to vector<1x4xf32>
    %32 = vector.broadcast %31 : vector<1x4xf32> to vector<24x4xf32>
    %33 = arith.subf %29, %32 : vector<24x4xf32>
    %cst_31 = arith.constant dense<0.000000e+00> : vector<24x32xf32>
    %34 = tpu.matmul %33, %0, %cst_31 {dimension_numbers = #tpu.dot_dimension_numbers<[1], [0], [0], [1], [0, 0, 1, 1], [], []>} : vector<24x4xf32>, vector<4x32xf32>, vector<24x32xf32> -> vector<24x32xf32>
    %35 = math.exp %34 : vector<24x32xf32>
    %cst_32 = arith.constant dense<0.000000e+00> : vector<8x32xf32>
    %36 = tpu.matmul %9, %35, %cst_32 {dimension_numbers = #tpu.dot_dimension_numbers<[1], [0], [0], [1], [0, 0, 1, 1], [], []>} : vector<8x24xf32>, vector<24x32xf32>, vector<8x32xf32> -> vector<8x32xf32>
    %cst_33 = arith.constant dense<0.000000e+00> : vector<24x32xf32>
    %37 = tpu.matmul %6, %36, %cst_33 {dimension_numbers = #tpu.dot_dimension_numbers<[1], [0], [0], [1], [0, 0, 1, 1], [], []>} : vector<24x8xf32>, vector<8x32xf32>, vector<24x32xf32> -> vector<24x32xf32>
    %cst_34 = arith.constant 1.000000e-16 : f32
    %38 = vector.broadcast %cst_34 : f32 to vector<24x32xf32>
    %39 = arith.addf %37, %38 : vector<24x32xf32>
    %40 = tpu.reciprocal %39 {approx = true} : vector<24x32xf32> -> vector<24x32xf32>
    %41 = arith.mulf %35, %40 : vector<24x32xf32>
    %42 = arith.mulf %41, %18 : vector<24x32xf32>
    %cst_35 = arith.constant dense<0.000000e+00> : vector<8x32xf32>
    %43 = tpu.matmul %9, %42, %cst_35 {dimension_numbers = #tpu.dot_dimension_numbers<[1], [0], [0], [1], [0, 0, 1, 1], [], []>} : vector<8x24xf32>, vector<24x32xf32>, vector<8x32xf32> -> vector<8x32xf32>
    %c0_36 = arith.constant 0 : index
    %c0_37 = arith.constant 0 : index
    %c0_38 = arith.constant 0 : index
    %44 = vector.load %arg12[%c0_36, %c0_37, %c0_38] : memref<2x32x32xf32, #tpu.memory_space<vmem>>, vector<1x32x32xf32>
    %45 = vector.shape_cast %44 : vector<1x32x32xf32> to vector<32x32xf32>
    %cst_39 = arith.constant dense<0.000000e+00> : vector<8x32xf32>
    %46 = tpu.matmul %4, %45, %cst_39 {dimension_numbers = #tpu.dot_dimension_numbers<[1], [0], [0], [1], [0, 0, 1, 1], [], []>} : vector<8x32xf32>, vector<32x32xf32>, vector<8x32xf32> -> vector<8x32xf32>
    %47 = arith.addf %43, %46 : vector<8x32xf32>
    %c0_40 = arith.constant 0 : index
    %c0_41 = arith.constant 0 : index
    %c0_42 = arith.constant 0 : index
    %48 = vector.load %arg13[%c0_40, %c0_41, %c0_42] : memref<2x1x32xf32, #tpu.memory_space<vmem>>, vector<1x1x32xf32>
    %49 = vector.shape_cast %48 : vector<1x1x32xf32> to vector<1x32xf32>
    %50 = vector.broadcast %49 : vector<1x32xf32> to vector<8x32xf32>
    %51 = arith.addf %47, %50 : vector<8x32xf32>
    %cst_43 = arith.constant 0.000000e+00 : f32
    %52 = vector.broadcast %cst_43 : f32 to vector<8x32xf32>
    %53 = arith.maximumf %51, %52 : vector<8x32xf32>
    %cst_44 = arith.constant dense<0.000000e+00> : vector<24x32xf32>
    %54 = tpu.matmul %6, %53, %cst_44 {dimension_numbers = #tpu.dot_dimension_numbers<[1], [0], [0], [1], [0, 0, 1, 1], [], []>} : vector<24x8xf32>, vector<8x32xf32>, vector<24x32xf32> -> vector<24x32xf32>
    %cst_45 = arith.constant dense<0.000000e+00> : vector<24x32xf32>
    %55 = tpu.matmul %8, %53, %cst_45 {dimension_numbers = #tpu.dot_dimension_numbers<[1], [0], [0], [1], [0, 0, 1, 1], [], []>} : vector<24x8xf32>, vector<8x32xf32>, vector<24x32xf32> -> vector<24x32xf32>
    %56 = tpu.concatenate %54, %55, %10 in 1 : vector<24x32xf32>, vector<24x32xf32>, vector<24x1xf32> -> vector<24x65xf32>
    %c1_46 = arith.constant 1 : index
    %c0_47 = arith.constant 0 : index
    %c0_48 = arith.constant 0 : index
    %57 = vector.load %arg9[%c1_46, %c0_47, %c0_48] : memref<2x65x64xf32, #tpu.memory_space<vmem>>, vector<1x65x64xf32>
    %58 = vector.shape_cast %57 : vector<1x65x64xf32> to vector<65x64xf32>
    %cst_49 = arith.constant dense<0.000000e+00> : vector<24x64xf32>
    %59 = tpu.matmul %56, %58, %cst_49 {dimension_numbers = #tpu.dot_dimension_numbers<[1], [0], [0], [1], [0, 0, 1, 1], [], []>} : vector<24x65xf32>, vector<65x64xf32>, vector<24x64xf32> -> vector<24x64xf32>
    %60 = vector.extract_strided_slice %59 {offsets = [0, 0], sizes = [24, 32], strides = [1, 1]} : vector<24x64xf32> to vector<24x32xf32>
    %61 = vector.extract_strided_slice %59 {offsets = [0, 32], sizes = [24, 32], strides = [1, 1]} : vector<24x64xf32> to vector<24x32xf32>
    %cst_50 = arith.constant 0.000000e+00 : f32
    %62 = vector.broadcast %cst_50 : f32 to vector<24x32xf32>
    %63 = arith.cmpf ogt, %60, %62 : vector<24x32xf32>
    %cst_51 = arith.constant 2.000000e-01 : f32
    %64 = vector.broadcast %cst_51 : f32 to vector<24x32xf32>
    %65 = arith.mulf %64, %60 : vector<24x32xf32>
    %66 = arith.select %63, %60, %65 : vector<24x32xi1>, vector<24x32xf32>
    %c1_52 = arith.constant 1 : index
    %c0_53 = arith.constant 0 : index
    %c0_54 = arith.constant 0 : index
    %67 = vector.load %arg10[%c1_52, %c0_53, %c0_54] : memref<2x32x4xf32, #tpu.memory_space<vmem>>, vector<1x32x4xf32>
    %68 = vector.shape_cast %67 : vector<1x32x4xf32> to vector<32x4xf32>
    %cst_55 = arith.constant dense<0.000000e+00> : vector<24x4xf32>
    %69 = tpu.matmul %66, %68, %cst_55 {dimension_numbers = #tpu.dot_dimension_numbers<[1], [0], [0], [1], [0, 0, 1, 1], [], []>} : vector<24x32xf32>, vector<32x4xf32>, vector<24x4xf32> -> vector<24x4xf32>
    %c1_56 = arith.constant 1 : index
    %c0_57 = arith.constant 0 : index
    %c0_58 = arith.constant 0 : index
    %70 = vector.load %arg11[%c1_56, %c0_57, %c0_58] : memref<2x24x4xf32, #tpu.memory_space<vmem>>, vector<1x24x4xf32>
    %71 = vector.shape_cast %70 : vector<1x24x4xf32> to vector<24x4xf32>
    %72 = arith.addf %69, %71 : vector<24x4xf32>
    %cst_59 = arith.constant dense<0xFF800000> : vector<4xf32>
    %73 = vector.multi_reduction <maximumf>, %72, %cst_59 [0] : vector<24x4xf32> to vector<4xf32>
    %74 = vector.shape_cast %73 : vector<4xf32> to vector<1x4xf32>
    %75 = vector.broadcast %74 : vector<1x4xf32> to vector<24x4xf32>
    %76 = arith.subf %72, %75 : vector<24x4xf32>
    %cst_60 = arith.constant dense<0.000000e+00> : vector<24x32xf32>
    %77 = tpu.matmul %76, %0, %cst_60 {dimension_numbers = #tpu.dot_dimension_numbers<[1], [0], [0], [1], [0, 0, 1, 1], [], []>} : vector<24x4xf32>, vector<4x32xf32>, vector<24x32xf32> -> vector<24x32xf32>
    %78 = math.exp %77 : vector<24x32xf32>
    %cst_61 = arith.constant dense<0.000000e+00> : vector<8x32xf32>
    %79 = tpu.matmul %9, %78, %cst_61 {dimension_numbers = #tpu.dot_dimension_numbers<[1], [0], [0], [1], [0, 0, 1, 1], [], []>} : vector<8x24xf32>, vector<24x32xf32>, vector<8x32xf32> -> vector<8x32xf32>
    %cst_62 = arith.constant dense<0.000000e+00> : vector<24x32xf32>
    %80 = tpu.matmul %6, %79, %cst_62 {dimension_numbers = #tpu.dot_dimension_numbers<[1], [0], [0], [1], [0, 0, 1, 1], [], []>} : vector<24x8xf32>, vector<8x32xf32>, vector<24x32xf32> -> vector<24x32xf32>
    %cst_63 = arith.constant 1.000000e-16 : f32
    %81 = vector.broadcast %cst_63 : f32 to vector<24x32xf32>
    %82 = arith.addf %80, %81 : vector<24x32xf32>
    %83 = tpu.reciprocal %82 {approx = true} : vector<24x32xf32> -> vector<24x32xf32>
    %84 = arith.mulf %78, %83 : vector<24x32xf32>
    %85 = arith.mulf %84, %61 : vector<24x32xf32>
    %cst_64 = arith.constant dense<0.000000e+00> : vector<8x32xf32>
    %86 = tpu.matmul %9, %85, %cst_64 {dimension_numbers = #tpu.dot_dimension_numbers<[1], [0], [0], [1], [0, 0, 1, 1], [], []>} : vector<8x24xf32>, vector<24x32xf32>, vector<8x32xf32> -> vector<8x32xf32>
    %c1_65 = arith.constant 1 : index
    %c0_66 = arith.constant 0 : index
    %c0_67 = arith.constant 0 : index
    %87 = vector.load %arg12[%c1_65, %c0_66, %c0_67] : memref<2x32x32xf32, #tpu.memory_space<vmem>>, vector<1x32x32xf32>
    %88 = vector.shape_cast %87 : vector<1x32x32xf32> to vector<32x32xf32>
    %cst_68 = arith.constant dense<0.000000e+00> : vector<8x32xf32>
    %89 = tpu.matmul %53, %88, %cst_68 {dimension_numbers = #tpu.dot_dimension_numbers<[1], [0], [0], [1], [0, 0, 1, 1], [], []>} : vector<8x32xf32>, vector<32x32xf32>, vector<8x32xf32> -> vector<8x32xf32>
    %90 = arith.addf %86, %89 : vector<8x32xf32>
    %c1_69 = arith.constant 1 : index
    %c0_70 = arith.constant 0 : index
    %c0_71 = arith.constant 0 : index
    %91 = vector.load %arg13[%c1_69, %c0_70, %c0_71] : memref<2x1x32xf32, #tpu.memory_space<vmem>>, vector<1x1x32xf32>
    %92 = vector.shape_cast %91 : vector<1x1x32xf32> to vector<1x32xf32>
    %93 = vector.broadcast %92 : vector<1x32xf32> to vector<8x32xf32>
    %94 = arith.addf %90, %93 : vector<8x32xf32>
    %cst_72 = arith.constant 0.000000e+00 : f32
    %95 = vector.broadcast %cst_72 : f32 to vector<8x32xf32>
    %96 = arith.maximumf %94, %95 : vector<8x32xf32>
    %c0_73 = arith.constant 0 : index
    %c0_74 = arith.constant 0 : index
    %97 = vector.load %arg7[%c0_73, %c0_74] : memref<56x8xf32, #tpu.memory_space<vmem>>, vector<56x8xf32>
    %cst_75 = arith.constant dense<0.000000e+00> : vector<56x32xf32>
    %98 = tpu.matmul %97, %96, %cst_75 {dimension_numbers = #tpu.dot_dimension_numbers<[1], [0], [0], [1], [0, 0, 1, 1], [], []>} : vector<56x8xf32>, vector<8x32xf32>, vector<56x32xf32> -> vector<56x32xf32>
    %c0_76 = arith.constant 0 : index
    %c0_77 = arith.constant 0 : index
    %c0_78 = arith.constant 0 : index
    %99 = vector.load %arg5[%c0_76, %c0_77, %c0_78] : memref<2x56x16xf32, #tpu.memory_space<vmem>>, vector<1x56x16xf32>
    %100 = vector.shape_cast %99 : vector<1x56x16xf32> to vector<56x16xf32>
    %c1_79 = arith.constant 1 : index
    %c0_80 = arith.constant 0 : index
    %c0_81 = arith.constant 0 : index
    %101 = vector.load %arg5[%c1_79, %c0_80, %c0_81] : memref<2x56x16xf32, #tpu.memory_space<vmem>>, vector<1x56x16xf32>
    %102 = vector.shape_cast %101 : vector<1x56x16xf32> to vector<56x16xf32>
    %c0_82 = arith.constant 0 : index
    %c0_83 = arith.constant 0 : index
    %103 = vector.load %arg6[%c0_82, %c0_83] : memref<16x56xf32, #tpu.memory_space<vmem>>, vector<16x56xf32>
    %cst_84 = arith.constant 1.000000e+00 : f32
    %104 = vector.broadcast %cst_84 : f32 to vector<56x1xf32>
    %cst_85 = arith.constant dense<0.000000e+00> : vector<56x32xf32>
    %105 = tpu.matmul %100, %3, %cst_85 {dimension_numbers = #tpu.dot_dimension_numbers<[1], [0], [0], [1], [0, 0, 1, 1], [], []>} : vector<56x16xf32>, vector<16x32xf32>, vector<56x32xf32> -> vector<56x32xf32>
    %cst_86 = arith.constant dense<0.000000e+00> : vector<56x32xf32>
    %106 = tpu.matmul %102, %3, %cst_86 {dimension_numbers = #tpu.dot_dimension_numbers<[1], [0], [0], [1], [0, 0, 1, 1], [], []>} : vector<56x16xf32>, vector<16x32xf32>, vector<56x32xf32> -> vector<56x32xf32>
    %107 = tpu.concatenate %105, %106, %98, %104 in 1 : vector<56x32xf32>, vector<56x32xf32>, vector<56x32xf32>, vector<56x1xf32> -> vector<56x97xf32>
    %c0_87 = arith.constant 0 : index
    %c0_88 = arith.constant 0 : index
    %c0_89 = arith.constant 0 : index
    %108 = vector.load %arg14[%c0_87, %c0_88, %c0_89] : memref<2x97x64xf32, #tpu.memory_space<vmem>>, vector<1x97x64xf32>
    %109 = vector.shape_cast %108 : vector<1x97x64xf32> to vector<97x64xf32>
    %cst_90 = arith.constant dense<0.000000e+00> : vector<56x64xf32>
    %110 = tpu.matmul %107, %109, %cst_90 {dimension_numbers = #tpu.dot_dimension_numbers<[1], [0], [0], [1], [0, 0, 1, 1], [], []>} : vector<56x97xf32>, vector<97x64xf32>, vector<56x64xf32> -> vector<56x64xf32>
    %111 = vector.extract_strided_slice %110 {offsets = [0, 0], sizes = [56, 32], strides = [1, 1]} : vector<56x64xf32> to vector<56x32xf32>
    %112 = vector.extract_strided_slice %110 {offsets = [0, 32], sizes = [56, 32], strides = [1, 1]} : vector<56x64xf32> to vector<56x32xf32>
    %cst_91 = arith.constant 0.000000e+00 : f32
    %113 = vector.broadcast %cst_91 : f32 to vector<56x32xf32>
    %114 = arith.cmpf ogt, %111, %113 : vector<56x32xf32>
    %cst_92 = arith.constant 2.000000e-01 : f32
    %115 = vector.broadcast %cst_92 : f32 to vector<56x32xf32>
    %116 = arith.mulf %115, %111 : vector<56x32xf32>
    %117 = arith.select %114, %111, %116 : vector<56x32xi1>, vector<56x32xf32>
    %c0_93 = arith.constant 0 : index
    %c0_94 = arith.constant 0 : index
    %c0_95 = arith.constant 0 : index
    %118 = vector.load %arg15[%c0_93, %c0_94, %c0_95] : memref<2x32x4xf32, #tpu.memory_space<vmem>>, vector<1x32x4xf32>
    %119 = vector.shape_cast %118 : vector<1x32x4xf32> to vector<32x4xf32>
    %cst_96 = arith.constant dense<0.000000e+00> : vector<56x4xf32>
    %120 = tpu.matmul %117, %119, %cst_96 {dimension_numbers = #tpu.dot_dimension_numbers<[1], [0], [0], [1], [0, 0, 1, 1], [], []>} : vector<56x32xf32>, vector<32x4xf32>, vector<56x4xf32> -> vector<56x4xf32>
    %cst_97 = arith.constant dense<0xFF800000> : vector<4xf32>
    %121 = vector.multi_reduction <maximumf>, %120, %cst_97 [0] : vector<56x4xf32> to vector<4xf32>
    %122 = vector.shape_cast %121 : vector<4xf32> to vector<1x4xf32>
    %123 = vector.broadcast %122 : vector<1x4xf32> to vector<56x4xf32>
    %124 = arith.subf %120, %123 : vector<56x4xf32>
    %cst_98 = arith.constant dense<0.000000e+00> : vector<56x32xf32>
    %125 = tpu.matmul %124, %0, %cst_98 {dimension_numbers = #tpu.dot_dimension_numbers<[1], [0], [0], [1], [0, 0, 1, 1], [], []>} : vector<56x4xf32>, vector<4x32xf32>, vector<56x32xf32> -> vector<56x32xf32>
    %126 = math.exp %125 : vector<56x32xf32>
    %cst_99 = arith.constant dense<0.000000e+00> : vector<16x32xf32>
    %127 = tpu.matmul %103, %126, %cst_99 {dimension_numbers = #tpu.dot_dimension_numbers<[1], [0], [0], [1], [0, 0, 1, 1], [], []>} : vector<16x56xf32>, vector<56x32xf32>, vector<16x32xf32> -> vector<16x32xf32>
    %cst_100 = arith.constant dense<0.000000e+00> : vector<56x32xf32>
    %128 = tpu.matmul %100, %127, %cst_100 {dimension_numbers = #tpu.dot_dimension_numbers<[1], [0], [0], [1], [0, 0, 1, 1], [], []>} : vector<56x16xf32>, vector<16x32xf32>, vector<56x32xf32> -> vector<56x32xf32>
    %cst_101 = arith.constant 1.000000e-16 : f32
    %129 = vector.broadcast %cst_101 : f32 to vector<56x32xf32>
    %130 = arith.addf %128, %129 : vector<56x32xf32>
    %131 = tpu.reciprocal %130 {approx = true} : vector<56x32xf32> -> vector<56x32xf32>
    %132 = arith.mulf %126, %131 : vector<56x32xf32>
    %133 = arith.mulf %132, %112 : vector<56x32xf32>
    %cst_102 = arith.constant dense<0.000000e+00> : vector<16x32xf32>
    %134 = tpu.matmul %103, %133, %cst_102 {dimension_numbers = #tpu.dot_dimension_numbers<[1], [0], [0], [1], [0, 0, 1, 1], [], []>} : vector<16x56xf32>, vector<56x32xf32>, vector<16x32xf32> -> vector<16x32xf32>
    %c0_103 = arith.constant 0 : index
    %c0_104 = arith.constant 0 : index
    %c0_105 = arith.constant 0 : index
    %135 = vector.load %arg16[%c0_103, %c0_104, %c0_105] : memref<2x32x32xf32, #tpu.memory_space<vmem>>, vector<1x32x32xf32>
    %136 = vector.shape_cast %135 : vector<1x32x32xf32> to vector<32x32xf32>
    %cst_106 = arith.constant dense<0.000000e+00> : vector<16x32xf32>
    %137 = tpu.matmul %3, %136, %cst_106 {dimension_numbers = #tpu.dot_dimension_numbers<[1], [0], [0], [1], [0, 0, 1, 1], [], []>} : vector<16x32xf32>, vector<32x32xf32>, vector<16x32xf32> -> vector<16x32xf32>
    %138 = arith.addf %134, %137 : vector<16x32xf32>
    %c0_107 = arith.constant 0 : index
    %c0_108 = arith.constant 0 : index
    %c0_109 = arith.constant 0 : index
    %139 = vector.load %arg17[%c0_107, %c0_108, %c0_109] : memref<2x1x32xf32, #tpu.memory_space<vmem>>, vector<1x1x32xf32>
    %140 = vector.shape_cast %139 : vector<1x1x32xf32> to vector<1x32xf32>
    %141 = vector.broadcast %140 : vector<1x32xf32> to vector<16x32xf32>
    %142 = arith.addf %138, %141 : vector<16x32xf32>
    %cst_110 = arith.constant 0.000000e+00 : f32
    %143 = vector.broadcast %cst_110 : f32 to vector<16x32xf32>
    %144 = arith.maximumf %142, %143 : vector<16x32xf32>
    %cst_111 = arith.constant dense<0.000000e+00> : vector<56x32xf32>
    %145 = tpu.matmul %100, %144, %cst_111 {dimension_numbers = #tpu.dot_dimension_numbers<[1], [0], [0], [1], [0, 0, 1, 1], [], []>} : vector<56x16xf32>, vector<16x32xf32>, vector<56x32xf32> -> vector<56x32xf32>
    %cst_112 = arith.constant dense<0.000000e+00> : vector<56x32xf32>
    %146 = tpu.matmul %102, %144, %cst_112 {dimension_numbers = #tpu.dot_dimension_numbers<[1], [0], [0], [1], [0, 0, 1, 1], [], []>} : vector<56x16xf32>, vector<16x32xf32>, vector<56x32xf32> -> vector<56x32xf32>
    %147 = tpu.concatenate %145, %146, %98, %104 in 1 : vector<56x32xf32>, vector<56x32xf32>, vector<56x32xf32>, vector<56x1xf32> -> vector<56x97xf32>
    %c1_113 = arith.constant 1 : index
    %c0_114 = arith.constant 0 : index
    %c0_115 = arith.constant 0 : index
    %148 = vector.load %arg14[%c1_113, %c0_114, %c0_115] : memref<2x97x64xf32, #tpu.memory_space<vmem>>, vector<1x97x64xf32>
    %149 = vector.shape_cast %148 : vector<1x97x64xf32> to vector<97x64xf32>
    %cst_116 = arith.constant dense<0.000000e+00> : vector<56x64xf32>
    %150 = tpu.matmul %147, %149, %cst_116 {dimension_numbers = #tpu.dot_dimension_numbers<[1], [0], [0], [1], [0, 0, 1, 1], [], []>} : vector<56x97xf32>, vector<97x64xf32>, vector<56x64xf32> -> vector<56x64xf32>
    %151 = vector.extract_strided_slice %150 {offsets = [0, 0], sizes = [56, 32], strides = [1, 1]} : vector<56x64xf32> to vector<56x32xf32>
    %152 = vector.extract_strided_slice %150 {offsets = [0, 32], sizes = [56, 32], strides = [1, 1]} : vector<56x64xf32> to vector<56x32xf32>
    %cst_117 = arith.constant 0.000000e+00 : f32
    %153 = vector.broadcast %cst_117 : f32 to vector<56x32xf32>
    %154 = arith.cmpf ogt, %151, %153 : vector<56x32xf32>
    %cst_118 = arith.constant 2.000000e-01 : f32
    %155 = vector.broadcast %cst_118 : f32 to vector<56x32xf32>
    %156 = arith.mulf %155, %151 : vector<56x32xf32>
    %157 = arith.select %154, %151, %156 : vector<56x32xi1>, vector<56x32xf32>
    %c1_119 = arith.constant 1 : index
    %c0_120 = arith.constant 0 : index
    %c0_121 = arith.constant 0 : index
    %158 = vector.load %arg15[%c1_119, %c0_120, %c0_121] : memref<2x32x4xf32, #tpu.memory_space<vmem>>, vector<1x32x4xf32>
    %159 = vector.shape_cast %158 : vector<1x32x4xf32> to vector<32x4xf32>
    %cst_122 = arith.constant dense<0.000000e+00> : vector<56x4xf32>
    %160 = tpu.matmul %157, %159, %cst_122 {dimension_numbers = #tpu.dot_dimension_numbers<[1], [0], [0], [1], [0, 0, 1, 1], [], []>} : vector<56x32xf32>, vector<32x4xf32>, vector<56x4xf32> -> vector<56x4xf32>
    %cst_123 = arith.constant dense<0xFF800000> : vector<4xf32>
    %161 = vector.multi_reduction <maximumf>, %160, %cst_123 [0] : vector<56x4xf32> to vector<4xf32>
    %162 = vector.shape_cast %161 : vector<4xf32> to vector<1x4xf32>
    %163 = vector.broadcast %162 : vector<1x4xf32> to vector<56x4xf32>
    %164 = arith.subf %160, %163 : vector<56x4xf32>
    %cst_124 = arith.constant dense<0.000000e+00> : vector<56x32xf32>
    %165 = tpu.matmul %164, %0, %cst_124 {dimension_numbers = #tpu.dot_dimension_numbers<[1], [0], [0], [1], [0, 0, 1, 1], [], []>} : vector<56x4xf32>, vector<4x32xf32>, vector<56x32xf32> -> vector<56x32xf32>
    %166 = math.exp %165 : vector<56x32xf32>
    %cst_125 = arith.constant dense<0.000000e+00> : vector<16x32xf32>
    %167 = tpu.matmul %103, %166, %cst_125 {dimension_numbers = #tpu.dot_dimension_numbers<[1], [0], [0], [1], [0, 0, 1, 1], [], []>} : vector<16x56xf32>, vector<56x32xf32>, vector<16x32xf32> -> vector<16x32xf32>
    %cst_126 = arith.constant dense<0.000000e+00> : vector<56x32xf32>
    %168 = tpu.matmul %100, %167, %cst_126 {dimension_numbers = #tpu.dot_dimension_numbers<[1], [0], [0], [1], [0, 0, 1, 1], [], []>} : vector<56x16xf32>, vector<16x32xf32>, vector<56x32xf32> -> vector<56x32xf32>
    %cst_127 = arith.constant 1.000000e-16 : f32
    %169 = vector.broadcast %cst_127 : f32 to vector<56x32xf32>
    %170 = arith.addf %168, %169 : vector<56x32xf32>
    %171 = tpu.reciprocal %170 {approx = true} : vector<56x32xf32> -> vector<56x32xf32>
    %172 = arith.mulf %166, %171 : vector<56x32xf32>
    %173 = arith.mulf %172, %152 : vector<56x32xf32>
    %cst_128 = arith.constant dense<0.000000e+00> : vector<16x32xf32>
    %174 = tpu.matmul %103, %173, %cst_128 {dimension_numbers = #tpu.dot_dimension_numbers<[1], [0], [0], [1], [0, 0, 1, 1], [], []>} : vector<16x56xf32>, vector<56x32xf32>, vector<16x32xf32> -> vector<16x32xf32>
    %c1_129 = arith.constant 1 : index
    %c0_130 = arith.constant 0 : index
    %c0_131 = arith.constant 0 : index
    %175 = vector.load %arg16[%c1_129, %c0_130, %c0_131] : memref<2x32x32xf32, #tpu.memory_space<vmem>>, vector<1x32x32xf32>
    %176 = vector.shape_cast %175 : vector<1x32x32xf32> to vector<32x32xf32>
    %cst_132 = arith.constant dense<0.000000e+00> : vector<16x32xf32>
    %177 = tpu.matmul %144, %176, %cst_132 {dimension_numbers = #tpu.dot_dimension_numbers<[1], [0], [0], [1], [0, 0, 1, 1], [], []>} : vector<16x32xf32>, vector<32x32xf32>, vector<16x32xf32> -> vector<16x32xf32>
    %178 = arith.addf %174, %177 : vector<16x32xf32>
    %c1_133 = arith.constant 1 : index
    %c0_134 = arith.constant 0 : index
    %c0_135 = arith.constant 0 : index
    %179 = vector.load %arg17[%c1_133, %c0_134, %c0_135] : memref<2x1x32xf32, #tpu.memory_space<vmem>>, vector<1x1x32xf32>
    %180 = vector.shape_cast %179 : vector<1x1x32xf32> to vector<1x32xf32>
    %181 = vector.broadcast %180 : vector<1x32xf32> to vector<16x32xf32>
    %182 = arith.addf %178, %181 : vector<16x32xf32>
    %cst_136 = arith.constant 0.000000e+00 : f32
    %183 = vector.broadcast %cst_136 : f32 to vector<16x32xf32>
    %184 = arith.maximumf %182, %183 : vector<16x32xf32>
    %c0_137 = arith.constant 0 : index
    %c0_138 = arith.constant 0 : index
    %185 = vector.load %arg18[%c0_137, %c0_138] : memref<24x32xf32, #tpu.memory_space<vmem>>, vector<16x32xf32>
    tpu.vector_store %arg18[%c0_137, %c0_138], %184 {strides = array<i32>} : memref<24x32xf32, #tpu.memory_space<vmem>>, vector<16x32xf32>,
    %c16 = arith.constant 16 : index
    %c0_139 = arith.constant 0 : index
    %186 = vector.load %arg18[%c16, %c0_139] : memref<24x32xf32, #tpu.memory_space<vmem>>, vector<8x32xf32>
    tpu.vector_store %arg18[%c16, %c0_139], %96 {strides = array<i32>} : memref<24x32xf32, #tpu.memory_space<vmem>>, vector<8x32xf32>,
    return
  }
}

</mosaic_0001>

<llo_original>
// kernel: encoder_forward.1
$region0: #{encoder_forward.1}
  #allocation0 [shape = 'u32[]', space=smem, size = 0x4, offset = 0x4, fixed_abs, tag = 'smem constant byte address 0x4 - core index']
  #allocation1 [shape = 'u32[144,128]{1,0:T(1,128)}', space=vmem, size = 0x12000, scoped, tag = 'internal scratch']
  %s0 = inlined_call_operand.vmem [shape: f32[16,17], index: 0, kind: input, shape index: {}]
  %s1 = inlined_call_operand.vmem [shape: f32[17,32], index: 1, kind: input, shape index: {}]
  %s2 = inlined_call_operand.vmem [shape: f32[8,32], index: 2, kind: input, shape index: {}]
  %s3 = inlined_call_operand.vmem [shape: f32[2,24,8], index: 3, kind: input, shape index: {}]
  %s4 = inlined_call_operand.vmem [shape: f32[8,24], index: 4, kind: input, shape index: {}]
  %s5 = inlined_call_operand.vmem [shape: f32[2,56,16], index: 5, kind: input, shape index: {}]
  %s6 = inlined_call_operand.vmem [shape: f32[16,56], index: 6, kind: input, shape index: {}]
  %s7 = inlined_call_operand.vmem [shape: f32[56,8], index: 7, kind: input, shape index: {}]
  %s8 = inlined_call_operand.vmem [shape: f32[4,32], index: 8, kind: input, shape index: {}]
  %s9 = inlined_call_operand.vmem [shape: f32[2,65,64], index: 9, kind: input, shape index: {}]
  %s10 = inlined_call_operand.vmem [shape: f32[2,32,4], index: 10, kind: input, shape index: {}]
  %s11 = inlined_call_operand.vmem [shape: f32[2,24,4], index: 11, kind: input, shape index: {}]
  %s12 = inlined_call_operand.vmem [shape: f32[2,32,32], index: 12, kind: input, shape index: {}]
  %s13 = inlined_call_operand.vmem [shape: f32[2,1,32], index: 13, kind: input, shape index: {}]
  %s14 = inlined_call_operand.vmem [shape: f32[2,97,64], index: 14, kind: input, shape index: {}]
  %s15 = inlined_call_operand.vmem [shape: f32[2,32,4], index: 15, kind: input, shape index: {}]
  %s16 = inlined_call_operand.vmem [shape: f32[2,32,32], index: 16, kind: input, shape index: {}]
  %s17 = inlined_call_operand.vmem [shape: f32[2,1,32], index: 17, kind: input, shape index: {}]
  %s18 = inlined_call_operand.vmem [shape: f32[24,32], index: 18, kind: output, shape index: {}]
  %s19 = sld [smem:[#allocation0]]
  $region82: #{encoder_forward.1} parent=0
    _
  %s21 = ssub.s32 1, %s19
  %s22 = scalar_select 0, %s21, %s19
  // Predicated region
  $region2: #{encoder_forward.1} parent=0 // pred_check
    _
  $region3: #{encoder_forward.1} parent=0 // pred_check_branch
    %24 = sbr.rel (0) target = $region5
  $region4: #{encoder_forward.1} parent=0 // pred_region
    _
  $region5: #{encoder_forward.1} parent=0 // pred_fallthru
    _
  // Predicated region
  $region6: #{encoder_forward.1} parent=0 // pred_check
    _
  $region7: #{encoder_forward.1} parent=0 // pred_check_branch
    %26 = sbr.rel (0) target = $region9
  $region8: #{encoder_forward.1} parent=0 // pred_region
    _
  $region9: #{encoder_forward.1} parent=0 // pred_fallthru
    _
  // Predicated region
  $region10: #{encoder_forward.1} parent=0 // pred_check
    _
  $region11: #{encoder_forward.1} parent=0 // pred_check_branch
    %28 = sbr.rel (0) target = $region13
  $region12: #{encoder_forward.1} parent=0 // pred_region
    _
  $region13: #{encoder_forward.1} parent=0 // pred_fallthru
    _
  // Predicated region
  $region14: #{encoder_forward.1} parent=0 // pred_check
    _
  $region15: #{encoder_forward.1} parent=0 // pred_check_branch
    %30 = sbr.rel (0) target = $region17
  $region16: #{encoder_forward.1} parent=0 // pred_region
    _
  $region17: #{encoder_forward.1} parent=0 // pred_fallthru
    _
  // Predicated region
  $region18: #{encoder_forward.1} parent=0 // pred_check
    _
  $region19: #{encoder_forward.1} parent=0 // pred_check_branch
    %32 = sbr.rel (0) target = $region21
  $region20: #{encoder_forward.1} parent=0 // pred_region
    _
  $region21: #{encoder_forward.1} parent=0 // pred_fallthru
    _
  // Predicated region
  $region22: #{encoder_forward.1} parent=0 // pred_check
    _
  $region23: #{encoder_forward.1} parent=0 // pred_check_branch
    %34 = sbr.rel (0) target = $region25
  $region24: #{encoder_forward.1} parent=0 // pred_region
    _
  $region25: #{encoder_forward.1} parent=0 // pred_fallthru
    _
  // Predicated region
  $region26: #{encoder_forward.1} parent=0 // pred_check
    _
  $region27: #{encoder_forward.1} parent=0 // pred_check_branch
    %36 = sbr.rel (0) target = $region29
  $region28: #{encoder_forward.1} parent=0 // pred_region
    _
  $region29: #{encoder_forward.1} parent=0 // pred_fallthru
    _
  // Predicated region
  $region30: #{encoder_forward.1} parent=0 // pred_check
    _
  $region31: #{encoder_forward.1} parent=0 // pred_check_branch
    %38 = sbr.rel (0) target = $region33
  $region32: #{encoder_forward.1} parent=0 // pred_region
    _
  $region33: #{encoder_forward.1} parent=0 // pred_fallthru
    _
  // Predicated region
  $region34: #{encoder_forward.1} parent=0 // pred_check
    _
  $region35: #{encoder_forward.1} parent=0 // pred_check_branch
    %40 = sbr.rel (0) target = $region37
  $region36: #{encoder_forward.1} parent=0 // pred_region
    _
  $region37: #{encoder_forward.1} parent=0 // pred_fallthru
    _
  // Predicated region
  $region38: #{encoder_forward.1} parent=0 // pred_check
    _
  $region39: #{encoder_forward.1} parent=0 // pred_check_branch
    %42 = sbr.rel (0) target = $region41
  $region40: #{encoder_forward.1} parent=0 // pred_region
    _
  $region41: #{encoder_forward.1} parent=0 // pred_fallthru
    _
  // Predicated region
  $region42: #{encoder_forward.1} parent=0 // pred_check
    _
  $region43: #{encoder_forward.1} parent=0 // pred_check_branch
    %44 = sbr.rel (0) target = $region45
  $region44: #{encoder_forward.1} parent=0 // pred_region
    _
  $region45: #{encoder_forward.1} parent=0 // pred_fallthru
    _
  // Predicated region
  $region46: #{encoder_forward.1} parent=0 // pred_check
    _
  $region47: #{encoder_forward.1} parent=0 // pred_check_branch
    %46 = sbr.rel (0) target = $region49
  $region48: #{encoder_forward.1} parent=0 // pred_region
    _
  $region49: #{encoder_forward.1} parent=0 // pred_fallthru
    _
  // Predicated region
  $region50: #{encoder_forward.1} parent=0 // pred_check
    _
  $region51: #{encoder_forward.1} parent=0 // pred_check_branch
    %48 = sbr.rel (0) target = $region53
  $region52: #{encoder_forward.1} parent=0 // pred_region
    _
  $region53: #{encoder_forward.1} parent=0 // pred_fallthru
    _
  // Predicated region
  $region54: #{encoder_forward.1} parent=0 // pred_check
    _
  $region55: #{encoder_forward.1} parent=0 // pred_check_branch
    %50 = sbr.rel (0) target = $region57
  $region56: #{encoder_forward.1} parent=0 // pred_region
    _
  $region57: #{encoder_forward.1} parent=0 // pred_fallthru
    _
  // Predicated region
  $region58: #{encoder_forward.1} parent=0 // pred_check
    _
  $region59: #{encoder_forward.1} parent=0 // pred_check_branch
    %52 = sbr.rel (0) target = $region61
  $region60: #{encoder_forward.1} parent=0 // pred_region
    _
  $region61: #{encoder_forward.1} parent=0 // pred_fallthru
    _
  // Predicated region
  $region62: #{encoder_forward.1} parent=0 // pred_check
    _
  $region63: #{encoder_forward.1} parent=0 // pred_check_branch
    %54 = sbr.rel (0) target = $region65
  $region64: #{encoder_forward.1} parent=0 // pred_region
    _
  $region65: #{encoder_forward.1} parent=0 // pred_fallthru
    _
  // Predicated region
  $region66: #{encoder_forward.1} parent=0 // pred_check
    _
  $region67: #{encoder_forward.1} parent=0 // pred_check_branch
    %56 = sbr.rel (0) target = $region69
  $region68: #{encoder_forward.1} parent=0 // pred_region
    _
  $region69: #{encoder_forward.1} parent=0 // pred_fallthru
    _
  // Predicated region
  $region70: #{encoder_forward.1} parent=0 // pred_check
    _
  $region71: #{encoder_forward.1} parent=0 // pred_check_branch
    %58 = sbr.rel (0) target = $region73
  $region72: #{encoder_forward.1} parent=0 // pred_region
    _
  $region73: #{encoder_forward.1} parent=0 // pred_fallthru
    _
  %v59 = vld [vmem:[%s8] sm:$0xf]
  %v60 = vld [vmem:[%s0] sm:$0xff]
  %v61 = vld [vmem:[%s0 + $0x8] sm:$0xff]
  %v62 = vld [vmem:[%s1] sm:$0xff]
  %v63 = vld [vmem:[%s1 + $0x8] sm:$0xff]
  %v64 = vld [vmem:[%s1 + $0x10] sm:$0x1]
  %vm65 = vcmask 138240
  %v67 = vsel %vm65, %v60, 0
  %v70 = vsel %vm65, %v61, 0
  %vm72 = vcmask 1040384
  %v74 = vsel %vm72, %v64, 0
  %76 = vmatprep.subr.mxu0 0.0
  %77 = vmatpush1.msra.mxu0 %v62
  %78 = vmatprep.subr.mxu0 0.0
  %79 = vmatpush1.msra.mxu0 %v63
  %80 = vmatprep.subr.mxu0 0.0
  %81 = vmatpush1.msra.mxu0 %v74
  %82 = vmatprep.subr.mxu0 0.0
  %83 = vmatpush1.msra.mxu0 0.0
  %84 = vmatprep.subr.mxu0 0.0
  %85 = vmatpush1.msra.mxu0 0.0
  %86 = vmatprep.subr.mxu0 0.0
  %87 = vmatpush1.msra.mxu0 0.0
  %88 = vmatprep.subr.mxu0 0.0
  %89 = vmatpush1.msra.mxu0 0.0
  %90 = vmatprep.subr.mxu0 0.0
  %91 = vmatpush1.msra.mxu0 0.0
  %92 = vmatprep.subr.mxu0 0.0
  %93 = vmatpush1.msra.mxu0 0.0
  %94 = vmatprep.subr.mxu0 0.0
  %95 = vmatpush1.msra.mxu0 0.0
  %96 = vmatprep.subr.mxu0 0.0
  %97 = vmatpush1.msra.mxu0 0.0
  %98 = vmatprep.subr.mxu0 0.0
  %99 = vmatpush1.msra.mxu0 0.0
  %100 = vmatprep.subr.mxu0 0.0
  %101 = vmatpush1.msra.mxu0 0.0
  %102 = vmatprep.subr.mxu0 0.0
  %103 = vmatpush1.msra.mxu0 0.0
  %104 = vmatprep.subr.mxu0 0.0
  %105 = vmatpush1.msra.mxu0 0.0
  %106 = vmatprep.subr.mxu0 0.0
  %107 = vmatpush1.msra.mxu0 0.0
  %108 = vmatprep.subr.mxu0 0.0
  %109 = vmatpush1.msra.mxu0 0.0
  %110 = vmatprep.subr.mxu0 0.0
  %111 = vmatpush1.msra.mxu0 0.0
  %112 = vmatprep.subr.mxu0 0.0
  %113 = vmatpush1.msra.mxu0 0.0
  %114 = vmatprep.subr.mxu0 0.0
  %115 = vmatpush1.msra.mxu0 0.0
  %116 = vmatprep.subr.mxu0 0.0
  %117 = vmatpush1.msra.mxu0 0.0
  %118 = vmatprep.subr.mxu0 0.0
  %119 = vmatpush1.msra.mxu0 0.0
  %120 = vmatprep.subr.mxu0 0.0
  %121 = vmatpush1.msra.mxu0 0.0
  %122 = vmatprep.subr.mxu0 0.0
  %123 = vmatpush1.msra.mxu0 0.0
  %124 = vmatprep.subr.mxu0 0.0
  %125 = vmatpush1.msra.mxu0 0.0
  %126 = vmatprep.subr.mxu0 0.0
  %127 = vmatpush1.msra.mxu0 0.0
  %128 = vmatprep.subr.mxu0 0.0
  %129 = vmatpush1.msra.mxu0 0.0
  %130 = vmatprep.subr.mxu0 0.0
  %131 = vmatpush1.msra.mxu0 0.0
  %132 = vmatprep.subr.mxu0 0.0
  %133 = vmatpush1.msra.mxu0 0.0
  %134 = vmatprep.subr.mxu0 0.0
  %135 = vmatpush1.msra.mxu0 0.0
  %136 = vmatprep.subr.mxu0 0.0
  %137 = vmatpush1.msra.mxu0 0.0
  %138 = vmatprep.subr.mxu0 0.0
  %139 = vmatpush1.msra.mxu0 0.0
  %140 = vmatprep.mubr.f32.mxu0 0.0
  %141 = vmatmul.mubr.f32.gmra.mrb[0].mxu0 %v67
  %v142 = vpop.f32.mrb[0].mxu0
  %v143 = vadd.f32 0.0, %v142
  %v144 = vpop.f32.mrb[0].mxu0
  %145 = vmatprep.mubr.f32.mxu0 0.0
  %146 = vmatmul.mubr.f32.gmra.mrb[0].mxu0 %v70
  %v147 = vpop.f32.mrb[0].mxu0
  %v148 = vadd.f32 0.0, %v147
  %v149 = vpop.f32.mrb[0].mxu0
  %150 = vdwg.mxu0
  %v151 = vld [vmem:[%s2] sm:$0xff]
  %v152 = vld [vmem:[%s3] sm:$0xff]
  %v153 = vld [vmem:[%s3 + $0x8] sm:$0xff]
  %v154 = vld [vmem:[%s3 + $0x10] sm:$0xff]
  %s155 = scalar_lea.vmem %s3, 24
  %v156 = vld [vmem:[%s155] sm:$0xff]
  %v157 = vld [vmem:[%s155 + $0x8] sm:$0xff]
  %v158 = vld [vmem:[%s155 + $0x10] sm:$0xff]
  %v159 = vld [vmem:[%s4] sm:$0xff]
  %vm160 = vcmask 64512
  %v162 = vsel %vm160, %v152, 0
  %v165 = vsel %vm160, %v153, 0
  %v168 = vsel %vm160, %v154, 0
  %170 = vmatprep.subr.mxu0 0.0
  %171 = vmatpush1.msra.mxu0 %v151
  %172 = vmatprep.subr.mxu0 0.0
  %173 = vmatpush1.msra.mxu0 0.0
  %174 = vmatprep.subr.mxu0 0.0
  %175 = vmatpush1.msra.mxu0 0.0
  %176 = vmatprep.subr.mxu0 0.0
  %177 = vmatpush1.msra.mxu0 0.0
  %178 = vmatprep.subr.mxu0 0.0
  %179 = vmatpush1.msra.mxu0 0.0
  %180 = vmatprep.subr.mxu0 0.0
  %181 = vmatpush1.msra.mxu0 0.0
  %182 = vmatprep.subr.mxu0 0.0
  %183 = vmatpush1.msra.mxu0 0.0
  %184 = vmatprep.subr.mxu0 0.0
  %185 = vmatpush1.msra.mxu0 0.0
  %186 = vmatprep.subr.mxu0 0.0
  %187 = vmatpush1.msra.mxu0 0.0
  %188 = vmatprep.subr.mxu0 0.0
  %189 = vmatpush1.msra.mxu0 0.0
  %190 = vmatprep.subr.mxu0 0.0
  %191 = vmatpush1.msra.mxu0 0.0
  %192 = vmatprep.subr.mxu0 0.0
  %193 = vmatpush1.msra.mxu0 0.0
  %194 = vmatprep.subr.mxu0 0.0
  %195 = vmatpush1.msra.mxu0 0.0
  %196 = vmatprep.subr.mxu0 0.0
  %197 = vmatpush1.msra.mxu0 0.0
  %198 = vmatprep.subr.mxu0 0.0
  %199 = vmatpush1.msra.mxu0 0.0
  %200 = vmatprep.subr.mxu0 0.0
  %201 = vmatpush1.msra.mxu0 0.0
  %202 = vmatprep.subr.mxu0 0.0
  %203 = vmatpush1.msra.mxu0 0.0
  %204 = vmatprep.subr.mxu0 0.0
  %205 = vmatpush1.msra.mxu0 0.0
  %206 = vmatprep.subr.mxu0 0.0
  %207 = vmatpush1.msra.mxu0 0.0
  %208 = vmatprep.subr.mxu0 0.0
  %209 = vmatpush1.msra.mxu0 0.0
  %210 = vmatprep.subr.mxu0 0.0
  %211 = vmatpush1.msra.mxu0 0.0
  %212 = vmatprep.subr.mxu0 0.0
  %213 = vmatpush1.msra.mxu0 0.0
  %214 = vmatprep.subr.mxu0 0.0
  %215 = vmatpush1.msra.mxu0 0.0
  %216 = vmatprep.subr.mxu0 0.0
  %217 = vmatpush1.msra.mxu0 0.0
  %218 = vmatprep.subr.mxu0 0.0
  %219 = vmatpush1.msra.mxu0 0.0
  %220 = vmatprep.subr.mxu0 0.0
  %221 = vmatpush1.msra.mxu0 0.0
  %222 = vmatprep.subr.mxu0 0.0
  %223 = vmatpush1.msra.mxu0 0.0
  %224 = vmatprep.subr.mxu0 0.0
  %225 = vmatpush1.msra.mxu0 0.0
  %226 = vmatprep.subr.mxu0 0.0
  %227 = vmatpush1.msra.mxu0 0.0
  %228 = vmatprep.subr.mxu0 0.0
  %229 = vmatpush1.msra.mxu0 0.0
  %230 = vmatprep.subr.mxu0 0.0
  %231 = vmatpush1.msra.mxu0 0.0
  %232 = vmatprep.subr.mxu0 0.0
  %233 = vmatpush1.msra.mxu0 0.0
  %234 = vmatprep.mubr.f32.mxu0 0.0
  %235 = vmatmul.mubr.f32.gmra.mrb[0].mxu0 %v162
  %v236 = vpop.f32.mrb[0].mxu0
  %v237 = vadd.f32 0.0, %v236
  %v238 = vpop.f32.mrb[0].mxu0
  %239 = vmatprep.mubr.f32.mxu0 0.0
  %240 = vmatmul.mubr.f32.gmra.mrb[0].mxu0 %v165
  %v241 = vpop.f32.mrb[0].mxu0
  %v242 = vadd.f32 0.0, %v241
  %v243 = vpop.f32.mrb[0].mxu0
  %244 = vmatprep.mubr.f32.mxu0 0.0
  %245 = vmatmul.mubr.f32.gmra.mrb[0].mxu0 %v168
  %v246 = vpop.f32.mrb[0].mxu0
  %v247 = vadd.f32 0.0, %v246
  %v248 = vpop.f32.mrb[0].mxu0
  %249 = vdwg.mxu0
  %v251 = vsel %vm160, %v156, 0
  %v254 = vsel %vm160, %v157, 0
  %v257 = vsel %vm160, %v158, 0
  %259 = vmatprep.subr.mxu0 0.0
  %260 = vmatpush1.msra.mxu0 %v151
  %261 = vmatprep.subr.mxu0 0.0
  %262 = vmatpush1.msra.mxu0 0.0
  %263 = vmatprep.subr.mxu0 0.0
  %264 = vmatpush1.msra.mxu0 0.0
  %265 = vmatprep.subr.mxu0 0.0
  %266 = vmatpush1.msra.mxu0 0.0
  %267 = vmatprep.subr.mxu0 0.0
  %268 = vmatpush1.msra.mxu0 0.0
  %269 = vmatprep.subr.mxu0 0.0
  %270 = vmatpush1.msra.mxu0 0.0
  %271 = vmatprep.subr.mxu0 0.0
  %272 = vmatpush1.msra.mxu0 0.0
  %273 = vmatprep.subr.mxu0 0.0
  %274 = vmatpush1.msra.mxu0 0.0
  %275 = vmatprep.subr.mxu0 0.0
  %276 = vmatpush1.msra.mxu0 0.0
  %277 = vmatprep.subr.mxu0 0.0
  %278 = vmatpush1.msra.mxu0 0.0
  %279 = vmatprep.subr.mxu0 0.0
  %280 = vmatpush1.msra.mxu0 0.0
  %281 = vmatprep.subr.mxu0 0.0
  %282 = vmatpush1.msra.mxu0 0.0
  %283 = vmatprep.subr.mxu0 0.0
  %284 = vmatpush1.msra.mxu0 0.0
  %285 = vmatprep.subr.mxu0 0.0
  %286 = vmatpush1.msra.mxu0 0.0
  %287 = vmatprep.subr.mxu0 0.0
  %288 = vmatpush1.msra.mxu0 0.0
  %289 = vmatprep.subr.mxu0 0.0
  %290 = vmatpush1.msra.mxu0 0.0
  %291 = vmatprep.subr.mxu0 0.0
  %292 = vmatpush1.msra.mxu0 0.0
  %293 = vmatprep.subr.mxu0 0.0
  %294 = vmatpush1.msra.mxu0 0.0
  %295 = vmatprep.subr.mxu0 0.0
  %296 = vmatpush1.msra.mxu0 0.0
  %297 = vmatprep.subr.mxu0 0.0
  %298 = vmatpush1.msra.mxu0 0.0
  %299 = vmatprep.subr.mxu0 0.0
  %300 = vmatpush1.msra.mxu0 0.0
  %301 = vmatprep.subr.mxu0 0.0
  %302 = vmatpush1.msra.mxu0 0.0
  %303 = vmatprep.subr.mxu0 0.0
  %304 = vmatpush1.msra.mxu0 0.0
  %305 = vmatprep.subr.mxu0 0.0
  %306 = vmatpush1.msra.mxu0 0.0
  %307 = vmatprep.subr.mxu0 0.0
  %308 = vmatpush1.msra.mxu0 0.0
  %309 = vmatprep.subr.mxu0 0.0
  %310 = vmatpush1.msra.mxu0 0.0
  %311 = vmatprep.subr.mxu0 0.0
  %312 = vmatpush1.msra.mxu0 0.0
  %313 = vmatprep.subr.mxu0 0.0
  %314 = vmatpush1.msra.mxu0 0.0
  %315 = vmatprep.subr.mxu0 0.0
  %316 = vmatpush1.msra.mxu0 0.0
  %317 = vmatprep.subr.mxu0 0.0
  %318 = vmatpush1.msra.mxu0 0.0
  %319 = vmatprep.subr.mxu0 0.0
  %320 = vmatpush1.msra.mxu0 0.0
  %321 = vmatprep.subr.mxu0 0.0
  %322 = vmatpush1.msra.mxu0 0.0
  %323 = vmatprep.mubr.f32.mxu0 0.0
  %324 = vmatmul.mubr.f32.gmra.mrb[0].mxu0 %v251
  %v325 = vpop.f32.mrb[0].mxu0
  %v326 = vadd.f32 0.0, %v325
  %v327 = vpop.f32.mrb[0].mxu0
  %328 = vmatprep.mubr.f32.mxu0 0.0
  %329 = vmatmul.mubr.f32.gmra.mrb[0].mxu0 %v254
  %v330 = vpop.f32.mrb[0].mxu0
  %v331 = vadd.f32 0.0, %v330
  %v332 = vpop.f32.mrb[0].mxu0
  %333 = vmatprep.mubr.f32.mxu0 0.0
  %334 = vmatmul.mubr.f32.gmra.mrb[0].mxu0 %v257
  %v335 = vpop.f32.mrb[0].mxu0
  %v336 = vadd.f32 0.0, %v335
  %v337 = vpop.f32.mrb[0].mxu0
  %338 = vdwg.mxu0
  %342 = vrot.lane.b32.xlu0 %v326, 32
  %v343 = vpop.permute.xlu0 %342
  %344 = vrot.lane.b32.xlu0 %v331, 32
  %v345 = vpop.permute.xlu0 %344
  %346 = vrot.lane.b32.xlu0 %v336, 32
  %v347 = vpop.permute.xlu0 %346
  %vm351 = vcmask 261120
  %v352 = vsel %vm351, %v237, %v343
  %v353 = vsel %vm351, %v242, %v345
  %v354 = vsel %vm351, %v247, %v347
  %vm355 = vcmask 523264
  %v356 = vsel %vm355, %v352, 1.0
  %v357 = vsel %vm355, %v353, 1.0
  %v358 = vsel %vm355, %v354, 1.0
  %v359 = vld [vmem:[%s9] sm:$0xff]
  %v360 = vld [vmem:[%s9 + $0x8] sm:$0xff]
  %v361 = vld [vmem:[%s9 + $0x10] sm:$0xff]
  %v362 = vld [vmem:[%s9 + $0x18] sm:$0xff]
  %v363 = vld [vmem:[%s9 + $0x20] sm:$0xff]
  %v364 = vld [vmem:[%s9 + $0x28] sm:$0xff]
  %v365 = vld [vmem:[%s9 + $0x30] sm:$0xff]
  %v366 = vld [vmem:[%s9 + $0x38] sm:$0xff]
  %v367 = vld [vmem:[%s9 + $0x40] sm:$0x1]
  %vm368 = vcmask 531456
  %v370 = vsel %vm368, %v356, 0
  %v373 = vsel %vm368, %v357, 0
  %v376 = vsel %vm368, %v358, 0
  %v379 = vsel %vm72, %v367, 0
  %381 = vmatprep.subr.mxu0 0.0
  %382 = vmatpush1.msra.mxu0 %v359
  %383 = vmatprep.subr.mxu0 0.0
  %384 = vmatpush1.msra.mxu0 %v360
  %385 = vmatprep.subr.mxu0 0.0
  %386 = vmatpush1.msra.mxu0 %v361
  %387 = vmatprep.subr.mxu0 0.0
  %388 = vmatpush1.msra.mxu0 %v362
  %389 = vmatprep.subr.mxu0 0.0
  %390 = vmatpush1.msra.mxu0 %v363
  %391 = vmatprep.subr.mxu0 0.0
  %392 = vmatpush1.msra.mxu0 %v364
  %393 = vmatprep.subr.mxu0 0.0
  %394 = vmatpush1.msra.mxu0 %v365
  %395 = vmatprep.subr.mxu0 0.0
  %396 = vmatpush1.msra.mxu0 %v366
  %397 = vmatprep.subr.mxu0 0.0
  %398 = vmatpush1.msra.mxu0 %v379
  %399 = vmatprep.subr.mxu0 0.0
  %400 = vmatpush1.msra.mxu0 0.0
  %401 = vmatprep.subr.mxu0 0.0
  %402 = vmatpush1.msra.mxu0 0.0
  %403 = vmatprep.subr.mxu0 0.0
  %404 = vmatpush1.msra.mxu0 0.0
  %405 = vmatprep.subr.mxu0 0.0
  %406 = vmatpush1.msra.mxu0 0.0
  %407 = vmatprep.subr.mxu0 0.0
  %408 = vmatpush1.msra.mxu0 0.0
  %409 = vmatprep.subr.mxu0 0.0
  %410 = vmatpush1.msra.mxu0 0.0
  %411 = vmatprep.subr.mxu0 0.0
  %412 = vmatpush1.msra.mxu0 0.0
  %413 = vmatprep.subr.mxu0 0.0
  %414 = vmatpush1.msra.mxu0 0.0
  %415 = vmatprep.subr.mxu0 0.0
  %416 = vmatpush1.msra.mxu0 0.0
  %417 = vmatprep.subr.mxu0 0.0
  %418 = vmatpush1.msra.mxu0 0.0
  %419 = vmatprep.subr.mxu0 0.0
  %420 = vmatpush1.msra.mxu0 0.0
  %421 = vmatprep.subr.mxu0 0.0
  %422 = vmatpush1.msra.mxu0 0.0
  %423 = vmatprep.subr.mxu0 0.0
  %424 = vmatpush1.msra.mxu0 0.0
  %425 = vmatprep.subr.mxu0 0.0
  %426 = vmatpush1.msra.mxu0 0.0
  %427 = vmatprep.subr.mxu0 0.0
  %428 = vmatpush1.msra.mxu0 0.0
  %429 = vmatprep.subr.mxu0 0.0
  %430 = vmatpush1.msra.mxu0 0.0
  %431 = vmatprep.subr.mxu0 0.0
  %432 = vmatpush1.msra.mxu0 0.0
  %433 = vmatprep.subr.mxu0 0.0
  %434 = vmatpush1.msra.mxu0 0.0
  %435 = vmatprep.subr.mxu0 0.0
  %436 = vmatpush1.msra.mxu0 0.0
  %437 = vmatprep.subr.mxu0 0.0
  %438 = vmatpush1.msra.mxu0 0.0
  %439 = vmatprep.subr.mxu0 0.0
  %440 = vmatpush1.msra.mxu0 0.0
  %441 = vmatprep.subr.mxu0 0.0
  %442 = vmatpush1.msra.mxu0 0.0
  %443 = vmatprep.subr.mxu0 0.0
  %444 = vmatpush1.msra.mxu0 0.0
  %445 = vmatprep.mubr.f32.mxu0 0.0
  %446 = vmatmul.mubr.f32.gmra.mrb[0].mxu0 %v370
  %v447 = vpop.f32.mrb[0].mxu0
  %v448 = vadd.f32 0.0, %v447
  %v449 = vpop.f32.mrb[0].mxu0
  %450 = vmatprep.mubr.f32.mxu0 0.0
  %451 = vmatmul.mubr.f32.gmra.mrb[0].mxu0 %v373
  %v452 = vpop.f32.mrb[0].mxu0
  %v453 = vadd.f32 0.0, %v452
  %v454 = vpop.f32.mrb[0].mxu0
  %455 = vmatprep.mubr.f32.mxu0 0.0
  %456 = vmatmul.mubr.f32.gmra.mrb[0].mxu0 %v376
  %v457 = vpop.f32.mrb[0].mxu0
  %v458 = vadd.f32 0.0, %v457
  %v459 = vpop.f32.mrb[0].mxu0
  %460 = vdwg.mxu0
  %vm461 = vcmp.gt.f32.partialorder %v448, 0.0
  %vm462 = vcmp.gt.f32.partialorder %v453, 0.0
  %vm463 = vcmp.gt.f32.partialorder %v458, 0.0
  %v464 = vmul.f32 %v448, 0.2
  %v465 = vmul.f32 %v453, 0.2
  %v466 = vmul.f32 %v458, 0.2
  %v467 = vsel %vm461, %v448, %v464
  %v468 = vsel %vm462, %v453, %v465
  %v469 = vsel %vm463, %v458, %v466
  %v470 = vld [vmem:[%s10] sm:$0xff]
  %v471 = vld [vmem:[%s10 + $0x8] sm:$0xff]
  %v472 = vld [vmem:[%s10 + $0x10] sm:$0xff]
  %v473 = vld [vmem:[%s10 + $0x18] sm:$0xff]
  %v474 = vld [vmem:[%s11] sm:$0xff]
  %v475 = vld [vmem:[%s11 + $0x8] sm:$0xff]
  %v476 = vld [vmem:[%s11 + $0x10] sm:$0xff]
  %v478 = vsel %vm351, %v467, 0
  %v481 = vsel %vm351, %v468, 0
  %v484 = vsel %vm351, %v469, 0
  %486 = vmatprep.subr.mxu0 0.0
  %487 = vmatpush1.msra.mxu0 %v470
  %488 = vmatprep.subr.mxu0 0.0
  %489 = vmatpush1.msra.mxu0 %v471
  %490 = vmatprep.subr.mxu0 0.0
  %491 = vmatpush1.msra.mxu0 %v472
  %492 = vmatprep.subr.mxu0 0.0
  %493 = vmatpush1.msra.mxu0 %v473
  %494 = vmatprep.subr.mxu0 0.0
  %495 = vmatpush1.msra.mxu0 0.0
  %496 = vmatprep.subr.mxu0 0.0
  %497 = vmatpush1.msra.mxu0 0.0
  %498 = vmatprep.subr.mxu0 0.0
  %499 = vmatpush1.msra.mxu0 0.0
  %500 = vmatprep.subr.mxu0 0.0
  %501 = vmatpush1.msra.mxu0 0.0
  %502 = vmatprep.subr.mxu0 0.0
  %503 = vmatpush1.msra.mxu0 0.0
  %504 = vmatprep.subr.mxu0 0.0
  %505 = vmatpush1.msra.mxu0 0.0
  %506 = vmatprep.subr.mxu0 0.0
  %507 = vmatpush1.msra.mxu0 0.0
  %508 = vmatprep.subr.mxu0 0.0
  %509 = vmatpush1.msra.mxu0 0.0
  %510 = vmatprep.subr.mxu0 0.0
  %511 = vmatpush1.msra.mxu0 0.0
  %512 = vmatprep.subr.mxu0 0.0
  %513 = vmatpush1.msra.mxu0 0.0
  %514 = vmatprep.subr.mxu0 0.0
  %515 = vmatpush1.msra.mxu0 0.0
  %516 = vmatprep.subr.mxu0 0.0
  %517 = vmatpush1.msra.mxu0 0.0
  %518 = vmatprep.subr.mxu0 0.0
  %519 = vmatpush1.msra.mxu0 0.0
  %520 = vmatprep.subr.mxu0 0.0
  %521 = vmatpush1.msra.mxu0 0.0
  %522 = vmatprep.subr.mxu0 0.0
  %523 = vmatpush1.msra.mxu0 0.0
  %524 = vmatprep.subr.mxu0 0.0
  %525 = vmatpush1.msra.mxu0 0.0
  %526 = vmatprep.subr.mxu0 0.0
  %527 = vmatpush1.msra.mxu0 0.0
  %528 = vmatprep.subr.mxu0 0.0
  %529 = vmatpush1.msra.mxu0 0.0
  %530 = vmatprep.subr.mxu0 0.0
  %531 = vmatpush1.msra.mxu0 0.0
  %532 = vmatprep.subr.mxu0 0.0
  %533 = vmatpush1.msra.mxu0 0.0
  %534 = vmatprep.subr.mxu0 0.0
  %535 = vmatpush1.msra.mxu0 0.0
  %536 = vmatprep.subr.mxu0 0.0
  %537 = vmatpush1.msra.mxu0 0.0
  %538 = vmatprep.subr.mxu0 0.0
  %539 = vmatpush1.msra.mxu0 0.0
  %540 = vmatprep.subr.mxu0 0.0
  %541 = vmatpush1.msra.mxu0 0.0
  %542 = vmatprep.subr.mxu0 0.0
  %543 = vmatpush1.msra.mxu0 0.0
  %544 = vmatprep.subr.mxu0 0.0
  %545 = vmatpush1.msra.mxu0 0.0
  %546 = vmatprep.subr.mxu0 0.0
  %547 = vmatpush1.msra.mxu0 0.0
  %548 = vmatprep.subr.mxu0 0.0
  %549 = vmatpush1.msra.mxu0 0.0
  %550 = vmatprep.mubr.f32.mxu0 0.0
  %551 = vmatmul.mubr.f32.gmra.mrb[0].mxu0 %v478
  %v552 = vpop.f32.mrb[0].mxu0
  %v553 = vadd.f32 %v474, %v552
  %v554 = vpop.f32.mrb[0].mxu0
  %555 = vmatprep.mubr.f32.mxu0 0.0
  %556 = vmatmul.mubr.f32.gmra.mrb[0].mxu0 %v481
  %v557 = vpop.f32.mrb[0].mxu0
  %v558 = vadd.f32 %v475, %v557
  %v559 = vpop.f32.mrb[0].mxu0
  %560 = vmatprep.mubr.f32.mxu0 0.0
  %561 = vmatmul.mubr.f32.gmra.mrb[0].mxu0 %v484
  %v562 = vpop.f32.mrb[0].mxu0
  %v563 = vadd.f32 %v476, %v562
  %v564 = vpop.f32.mrb[0].mxu0
  %565 = vdwg.mxu0
  %vm566 = vcmask 31744
  %v567 = vsel %vm566, %v553, -inf
  %v568 = vsel %vm566, %v558, -inf
  %v569 = vsel %vm566, %v563, -inf
  %v570 = vmax.f32 %v567, %v568
  %v571 = vmax.f32 %v570, %v569
  %v572 = vrot.slane %v571, 4
  %v573 = vmax.f32 %v571, %v572
  %v574 = vrot.slane %v573, 2
  %v575 = vmax.f32 %v573, %v574
  %v576 = vrot.slane %v575, 1
  %v577 = vmax.f32 %v575, %v576
  %v578 = vsub.f32 %v553, %v577
  %v579 = vsub.f32 %v558, %v577
  %v580 = vsub.f32 %v563, %v577
  %v582 = vsel %vm566, %v578, 0
  %v585 = vsel %vm566, %v579, 0
  %v588 = vsel %vm566, %v580, 0
  %vm590 = vcmask 1043456
  %v592 = vsel %vm590, %v59, 0
  %594 = vmatprep.subr.mxu0 0.0
  %595 = vmatpush1.msra.mxu0 %v592
  %596 = vmatprep.subr.mxu0 0.0
  %597 = vmatpush1.msra.mxu0 0.0
  %598 = vmatprep.subr.mxu0 0.0
  %599 = vmatpush1.msra.mxu0 0.0
  %600 = vmatprep.subr.mxu0 0.0
  %601 = vmatpush1.msra.mxu0 0.0
  %602 = vmatprep.subr.mxu0 0.0
  %603 = vmatpush1.msra.mxu0 0.0
  %604 = vmatprep.subr.mxu0 0.0
  %605 = vmatpush1.msra.mxu0 0.0
  %606 = vmatprep.subr.mxu0 0.0
  %607 = vmatpush1.msra.mxu0 0.0
  %608 = vmatprep.subr.mxu0 0.0
  %609 = vmatpush1.msra.mxu0 0.0
  %610 = vmatprep.subr.mxu0 0.0
  %611 = vmatpush1.msra.mxu0 0.0
  %612 = vmatprep.subr.mxu0 0.0
  %613 = vmatpush1.msra.mxu0 0.0
  %614 = vmatprep.subr.mxu0 0.0
  %615 = vmatpush1.msra.mxu0 0.0
  %616 = vmatprep.subr.mxu0 0.0
  %617 = vmatpush1.msra.mxu0 0.0
  %618 = vmatprep.subr.mxu0 0.0
  %619 = vmatpush1.msra.mxu0 0.0
  %620 = vmatprep.subr.mxu0 0.0
  %621 = vmatpush1.msra.mxu0 0.0
  %622 = vmatprep.subr.mxu0 0.0
  %623 = vmatpush1.msra.mxu0 0.0
  %624 = vmatprep.subr.mxu0 0.0
  %625 = vmatpush1.msra.mxu0 0.0
  %626 = vmatprep.subr.mxu0 0.0
  %627 = vmatpush1.msra.mxu0 0.0
  %628 = vmatprep.subr.mxu0 0.0
  %629 = vmatpush1.msra.mxu0 0.0
  %630 = vmatprep.subr.mxu0 0.0
  %631 = vmatpush1.msra.mxu0 0.0
  %632 = vmatprep.subr.mxu0 0.0
  %633 = vmatpush1.msra.mxu0 0.0
  %634 = vmatprep.subr.mxu0 0.0
  %635 = vmatpush1.msra.mxu0 0.0
  %636 = vmatprep.subr.mxu0 0.0
  %637 = vmatpush1.msra.mxu0 0.0
  %638 = vmatprep.subr.mxu0 0.0
  %639 = vmatpush1.msra.mxu0 0.0
  %640 = vmatprep.subr.mxu0 0.0
  %641 = vmatpush1.msra.mxu0 0.0
  %642 = vmatprep.subr.mxu0 0.0
  %643 = vmatpush1.msra.mxu0 0.0
  %644 = vmatprep.subr.mxu0 0.0
  %645 = vmatpush1.msra.mxu0 0.0
  %646 = vmatprep.subr.mxu0 0.0
  %647 = vmatpush1.msra.mxu0 0.0
  %648 = vmatprep.subr.mxu0 0.0
  %649 = vmatpush1.msra.mxu0 0.0
  %650 = vmatprep.subr.mxu0 0.0
  %651 = vmatpush1.msra.mxu0 0.0
  %652 = vmatprep.subr.mxu0 0.0
  %653 = vmatpush1.msra.mxu0 0.0
  %654 = vmatprep.subr.mxu0 0.0
  %655 = vmatpush1.msra.mxu0 0.0
  %656 = vmatprep.subr.mxu0 0.0
  %657 = vmatpush1.msra.mxu0 0.0
  %658 = vmatprep.mubr.f32.mxu0 0.0
  %659 = vmatmul.mubr.f32.gmra.mrb[0].mxu0 %v582
  %v660 = vpop.f32.mrb[0].mxu0
  %v661 = vadd.f32 0.0, %v660
  %v662 = vpop.f32.mrb[0].mxu0
  %663 = vmatprep.mubr.f32.mxu0 0.0
  %664 = vmatmul.mubr.f32.gmra.mrb[0].mxu0 %v585
  %v665 = vpop.f32.mrb[0].mxu0
  %v666 = vadd.f32 0.0, %v665
  %v667 = vpop.f32.mrb[0].mxu0
  %668 = vmatprep.mubr.f32.mxu0 0.0
  %669 = vmatmul.mubr.f32.gmra.mrb[0].mxu0 %v588
  %v670 = vpop.f32.mrb[0].mxu0
  %v671 = vadd.f32 0.0, %v670
  %v672 = vpop.f32.mrb[0].mxu0
  %673 = vdwg.mxu0
  %v674 = vmul.f32 %v661, 1.442695
  %v675 = vpow.pop %v674
  %v676 = vmul.f32 %v666, 1.442695
  %v677 = vpow.pop %v676
  %v678 = vmul.f32 %v671, 1.442695
  %v679 = vpow.pop %v678
  %vm680 = vcmask 195584
  %v682 = vsel %vm680, %v159, 0
  %684 = vmatprep.subr.mxu0 0.0
  %685 = vmatpush1.msra.mxu0 %v675
  %686 = vmatprep.subr.mxu0 0.0
  %687 = vmatpush1.msra.mxu0 %v677
  %688 = vmatprep.subr.mxu0 0.0
  %689 = vmatpush1.msra.mxu0 %v679
  %690 = vmatprep.subr.mxu0 0.0
  %691 = vmatpush1.msra.mxu0 0.0
  %692 = vmatprep.subr.mxu0 0.0
  %693 = vmatpush1.msra.mxu0 0.0
  %694 = vmatprep.subr.mxu0 0.0
  %695 = vmatpush1.msra.mxu0 0.0
  %696 = vmatprep.subr.mxu0 0.0
  %697 = vmatpush1.msra.mxu0 0.0
  %698 = vmatprep.subr.mxu0 0.0
  %699 = vmatpush1.msra.mxu0 0.0
  %700 = vmatprep.subr.mxu0 0.0
  %701 = vmatpush1.msra.mxu0 0.0
  %702 = vmatprep.subr.mxu0 0.0
  %703 = vmatpush1.msra.mxu0 0.0
  %704 = vmatprep.subr.mxu0 0.0
  %705 = vmatpush1.msra.mxu0 0.0
  %706 = vmatprep.subr.mxu0 0.0
  %707 = vmatpush1.msra.mxu0 0.0
  %708 = vmatprep.subr.mxu0 0.0
  %709 = vmatpush1.msra.mxu0 0.0
  %710 = vmatprep.subr.mxu0 0.0
  %711 = vmatpush1.msra.mxu0 0.0
  %712 = vmatprep.subr.mxu0 0.0
  %713 = vmatpush1.msra.mxu0 0.0
  %714 = vmatprep.subr.mxu0 0.0
  %715 = vmatpush1.msra.mxu0 0.0
  %716 = vmatprep.subr.mxu0 0.0
  %717 = vmatpush1.msra.mxu0 0.0
  %718 = vmatprep.subr.mxu0 0.0
  %719 = vmatpush1.msra.mxu0 0.0
  %720 = vmatprep.subr.mxu0 0.0
  %721 = vmatpush1.msra.mxu0 0.0
  %722 = vmatprep.subr.mxu0 0.0
  %723 = vmatpush1.msra.mxu0 0.0
  %724 = vmatprep.subr.mxu0 0.0
  %725 = vmatpush1.msra.mxu0 0.0
  %726 = vmatprep.subr.mxu0 0.0
  %727 = vmatpush1.msra.mxu0 0.0
  %728 = vmatprep.subr.mxu0 0.0
  %729 = vmatpush1.msra.mxu0 0.0
  %730 = vmatprep.subr.mxu0 0.0
  %731 = vmatpush1.msra.mxu0 0.0
  %732 = vmatprep.subr.mxu0 0.0
  %733 = vmatpush1.msra.mxu0 0.0
  %734 = vmatprep.subr.mxu0 0.0
  %735 = vmatpush1.msra.mxu0 0.0
  %736 = vmatprep.subr.mxu0 0.0
  %737 = vmatpush1.msra.mxu0 0.0
  %738 = vmatprep.subr.mxu0 0.0
  %739 = vmatpush1.msra.mxu0 0.0
  %740 = vmatprep.subr.mxu0 0.0
  %741 = vmatpush1.msra.mxu0 0.0
  %742 = vmatprep.subr.mxu0 0.0
  %743 = vmatpush1.msra.mxu0 0.0
  %744 = vmatprep.subr.mxu0 0.0
  %745 = vmatpush1.msra.mxu0 0.0
  %746 = vmatprep.subr.mxu0 0.0
  %747 = vmatpush1.msra.mxu0 0.0
  %748 = vmatprep.mubr.f32.mxu0 0.0
  %749 = vmatmul.mubr.f32.gmra.mrb[0].mxu0 %v682
  %v750 = vpop.f32.mrb[0].mxu0
  %v751 = vadd.f32 0.0, %v750
  %v752 = vpop.f32.mrb[0].mxu0
  %753 = vdwg.mxu0
  %754 = vmatprep.subr.mxu0 0.0
  %755 = vmatpush1.msra.mxu0 %v751
  %756 = vmatprep.subr.mxu0 0.0
  %757 = vmatpush1.msra.mxu0 0.0
  %758 = vmatprep.subr.mxu0 0.0
  %759 = vmatpush1.msra.mxu0 0.0
  %760 = vmatprep.subr.mxu0 0.0
  %761 = vmatpush1.msra.mxu0 0.0
  %762 = vmatprep.subr.mxu0 0.0
  %763 = vmatpush1.msra.mxu0 0.0
  %764 = vmatprep.subr.mxu0 0.0
  %765 = vmatpush1.msra.mxu0 0.0
  %766 = vmatprep.subr.mxu0 0.0
  %767 = vmatpush1.msra.mxu0 0.0
  %768 = vmatprep.subr.mxu0 0.0
  %769 = vmatpush1.msra.mxu0 0.0
  %770 = vmatprep.subr.mxu0 0.0
  %771 = vmatpush1.msra.mxu0 0.0
  %772 = vmatprep.subr.mxu0 0.0
  %773 = vmatpush1.msra.mxu0 0.0
  %774 = vmatprep.subr.mxu0 0.0
  %775 = vmatpush1.msra.mxu0 0.0
  %776 = vmatprep.subr.mxu0 0.0
  %777 = vmatpush1.msra.mxu0 0.0
  %778 = vmatprep.subr.mxu0 0.0
  %779 = vmatpush1.msra.mxu0 0.0
  %780 = vmatprep.subr.mxu0 0.0
  %781 = vmatpush1.msra.mxu0 0.0
  %782 = vmatprep.subr.mxu0 0.0
  %783 = vmatpush1.msra.mxu0 0.0
  %784 = vmatprep.subr.mxu0 0.0
  %785 = vmatpush1.msra.mxu0 0.0
  %786 = vmatprep.subr.mxu0 0.0
  %787 = vmatpush1.msra.mxu0 0.0
  %788 = vmatprep.subr.mxu0 0.0
  %789 = vmatpush1.msra.mxu0 0.0
  %790 = vmatprep.subr.mxu0 0.0
  %791 = vmatpush1.msra.mxu0 0.0
  %792 = vmatprep.subr.mxu0 0.0
  %793 = vmatpush1.msra.mxu0 0.0
  %794 = vmatprep.subr.mxu0 0.0
  %795 = vmatpush1.msra.mxu0 0.0
  %796 = vmatprep.subr.mxu0 0.0
  %797 = vmatpush1.msra.mxu0 0.0
  %798 = vmatprep.subr.mxu0 0.0
  %799 = vmatpush1.msra.mxu0 0.0
  %800 = vmatprep.subr.mxu0 0.0
  %801 = vmatpush1.msra.mxu0 0.0
  %802 = vmatprep.subr.mxu0 0.0
  %803 = vmatpush1.msra.mxu0 0.0
  %804 = vmatprep.subr.mxu0 0.0
  %805 = vmatpush1.msra.mxu0 0.0
  %806 = vmatprep.subr.mxu0 0.0
  %807 = vmatpush1.msra.mxu0 0.0
  %808 = vmatprep.subr.mxu0 0.0
  %809 = vmatpush1.msra.mxu0 0.0
  %810 = vmatprep.subr.mxu0 0.0
  %811 = vmatpush1.msra.mxu0 0.0
  %812 = vmatprep.subr.mxu0 0.0
  %813 = vmatpush1.msra.mxu0 0.0
  %814 = vmatprep.subr.mxu0 0.0
  %815 = vmatpush1.msra.mxu0 0.0
  %816 = vmatprep.subr.mxu0 0.0
  %817 = vmatpush1.msra.mxu0 0.0
  %818 = vmatprep.mubr.f32.mxu0 0.0
  %819 = vmatmul.mubr.f32.gmra.mrb[0].mxu0 %v162
  %v820 = vpop.f32.mrb[0].mxu0
  %v821 = vadd.f32 1e-16, %v820
  %v822 = vpop.f32.mrb[0].mxu0
  %823 = vmatprep.mubr.f32.mxu0 0.0
  %824 = vmatmul.mubr.f32.gmra.mrb[0].mxu0 %v165
  %v825 = vpop.f32.mrb[0].mxu0
  %v826 = vadd.f32 1e-16, %v825
  %v827 = vpop.f32.mrb[0].mxu0
  %828 = vmatprep.mubr.f32.mxu0 0.0
  %829 = vmatmul.mubr.f32.gmra.mrb[0].mxu0 %v168
  %v830 = vpop.f32.mrb[0].mxu0
  %v831 = vadd.f32 1e-16, %v830
  %v832 = vpop.f32.mrb[0].mxu0
  %833 = vdwg.mxu0
  %v834 = vrcp.pop %v821
  %v835 = vrcp.pop %v826
  %v836 = vrcp.pop %v831
  %v837 = vmul.f32 %v675, %v834
  %v838 = vmul.f32 %v677, %v835
  %v839 = vmul.f32 %v679, %v836
  %843 = vrot.lane.b32.xlu0 %v448, 96
  %v844 = vpop.permute.xlu0 %843
  %845 = vrot.lane.b32.xlu0 %v453, 96
  %v846 = vpop.permute.xlu0 %845
  %847 = vrot.lane.b32.xlu0 %v458, 96
  %v848 = vpop.permute.xlu0 %847
  %v852 = vmul.f32 %v837, %v844
  %v853 = vmul.f32 %v838, %v846
  %v854 = vmul.f32 %v839, %v848
  %v855 = vld [vmem:[%s12] sm:$0xff]
  %v856 = vld [vmem:[%s12 + $0x8] sm:$0xff]
  %v857 = vld [vmem:[%s12 + $0x10] sm:$0xff]
  %v858 = vld [vmem:[%s12 + $0x18] sm:$0xff]
  %v860 = vsel %vm351, %v151, 0
  %862 = vmatprep.subr.mxu0 0.0
  %863 = vmatpush1.msra.mxu0 %v855
  %864 = vmatprep.subr.mxu0 0.0
  %865 = vmatpush1.msra.mxu0 %v856
  %866 = vmatprep.subr.mxu0 0.0
  %867 = vmatpush1.msra.mxu0 %v857
  %868 = vmatprep.subr.mxu0 0.0
  %869 = vmatpush1.msra.mxu0 %v858
  %870 = vmatprep.subr.mxu0 0.0
  %871 = vmatpush1.msra.mxu0 0.0
  %872 = vmatprep.subr.mxu0 0.0
  %873 = vmatpush1.msra.mxu0 0.0
  %874 = vmatprep.subr.mxu0 0.0
  %875 = vmatpush1.msra.mxu0 0.0
  %876 = vmatprep.subr.mxu0 0.0
  %877 = vmatpush1.msra.mxu0 0.0
  %878 = vmatprep.subr.mxu0 0.0
  %879 = vmatpush1.msra.mxu0 0.0
  %880 = vmatprep.subr.mxu0 0.0
  %881 = vmatpush1.msra.mxu0 0.0
  %882 = vmatprep.subr.mxu0 0.0
  %883 = vmatpush1.msra.mxu0 0.0
  %884 = vmatprep.subr.mxu0 0.0
  %885 = vmatpush1.msra.mxu0 0.0
  %886 = vmatprep.subr.mxu0 0.0
  %887 = vmatpush1.msra.mxu0 0.0
  %888 = vmatprep.subr.mxu0 0.0
  %889 = vmatpush1.msra.mxu0 0.0
  %890 = vmatprep.subr.mxu0 0.0
  %891 = vmatpush1.msra.mxu0 0.0
  %892 = vmatprep.subr.mxu0 0.0
  %893 = vmatpush1.msra.mxu0 0.0
  %894 = vmatprep.subr.mxu0 0.0
  %895 = vmatpush1.msra.mxu0 0.0
  %896 = vmatprep.subr.mxu0 0.0
  %897 = vmatpush1.msra.mxu0 0.0
  %898 = vmatprep.subr.mxu0 0.0
  %899 = vmatpush1.msra.mxu0 0.0
  %900 = vmatprep.subr.mxu0 0.0
  %901 = vmatpush1.msra.mxu0 0.0
  %902 = vmatprep.subr.mxu0 0.0
  %903 = vmatpush1.msra.mxu0 0.0
  %904 = vmatprep.subr.mxu0 0.0
  %905 = vmatpush1.msra.mxu0 0.0
  %906 = vmatprep.subr.mxu0 0.0
  %907 = vmatpush1.msra.mxu0 0.0
  %908 = vmatprep.subr.mxu0 0.0
  %909 = vmatpush1.msra.mxu0 0.0
  %910 = vmatprep.subr.mxu0 0.0
  %911 = vmatpush1.msra.mxu0 0.0
  %912 = vmatprep.subr.mxu0 0.0
  %913 = vmatpush1.msra.mxu0 0.0
  %914 = vmatprep.subr.mxu0 0.0
  %915 = vmatpush1.msra.mxu0 0.0
  %916 = vmatprep.subr.mxu0 0.0
  %917 = vmatpush1.msra.mxu0 0.0
  %918 = vmatprep.subr.mxu0 0.0
  %919 = vmatpush1.msra.mxu0 0.0
  %920 = vmatprep.subr.mxu0 0.0
  %921 = vmatpush1.msra.mxu0 0.0
  %922 = vmatprep.subr.mxu0 0.0
  %923 = vmatpush1.msra.mxu0 0.0
  %924 = vmatprep.subr.mxu0 0.0
  %925 = vmatpush1.msra.mxu0 0.0
  %926 = vmatprep.mubr.f32.mxu0 0.0
  %927 = vmatmul.mubr.f32.gmra.mrb[0].mxu0 %v860
  %v928 = vpop.f32.mrb[0].mxu0
  %v929 = vadd.f32 0.0, %v928
  %v930 = vpop.f32.mrb[0].mxu0
  %931 = vdwg.mxu0
  %932 = vmatprep.subr.mxu0 0.0
  %933 = vmatpush1.msra.mxu0 %v852
  %934 = vmatprep.subr.mxu0 0.0
  %935 = vmatpush1.msra.mxu0 %v853
  %936 = vmatprep.subr.mxu0 0.0
  %937 = vmatpush1.msra.mxu0 %v854
  %938 = vmatprep.subr.mxu0 0.0
  %939 = vmatpush1.msra.mxu0 0.0
  %940 = vmatprep.subr.mxu0 0.0
  %941 = vmatpush1.msra.mxu0 0.0
  %942 = vmatprep.subr.mxu0 0.0
  %943 = vmatpush1.msra.mxu0 0.0
  %944 = vmatprep.subr.mxu0 0.0
  %945 = vmatpush1.msra.mxu0 0.0
  %946 = vmatprep.subr.mxu0 0.0
  %947 = vmatpush1.msra.mxu0 0.0
  %948 = vmatprep.subr.mxu0 0.0
  %949 = vmatpush1.msra.mxu0 0.0
  %950 = vmatprep.subr.mxu0 0.0
  %951 = vmatpush1.msra.mxu0 0.0
  %952 = vmatprep.subr.mxu0 0.0
  %953 = vmatpush1.msra.mxu0 0.0
  %954 = vmatprep.subr.mxu0 0.0
  %955 = vmatpush1.msra.mxu0 0.0
  %956 = vmatprep.subr.mxu0 0.0
  %957 = vmatpush1.msra.mxu0 0.0
  %958 = vmatprep.subr.mxu0 0.0
  %959 = vmatpush1.msra.mxu0 0.0
  %960 = vmatprep.subr.mxu0 0.0
  %961 = vmatpush1.msra.mxu0 0.0
  %962 = vmatprep.subr.mxu0 0.0
  %963 = vmatpush1.msra.mxu0 0.0
  %964 = vmatprep.subr.mxu0 0.0
  %965 = vmatpush1.msra.mxu0 0.0
  %966 = vmatprep.subr.mxu0 0.0
  %967 = vmatpush1.msra.mxu0 0.0
  %968 = vmatprep.subr.mxu0 0.0
  %969 = vmatpush1.msra.mxu0 0.0
  %970 = vmatprep.subr.mxu0 0.0
  %971 = vmatpush1.msra.mxu0 0.0
  %972 = vmatprep.subr.mxu0 0.0
  %973 = vmatpush1.msra.mxu0 0.0
  %974 = vmatprep.subr.mxu0 0.0
  %975 = vmatpush1.msra.mxu0 0.0
  %976 = vmatprep.subr.mxu0 0.0
  %977 = vmatpush1.msra.mxu0 0.0
  %978 = vmatprep.subr.mxu0 0.0
  %979 = vmatpush1.msra.mxu0 0.0
  %980 = vmatprep.subr.mxu0 0.0
  %981 = vmatpush1.msra.mxu0 0.0
  %982 = vmatprep.subr.mxu0 0.0
  %983 = vmatpush1.msra.mxu0 0.0
  %984 = vmatprep.subr.mxu0 0.0
  %985 = vmatpush1.msra.mxu0 0.0
  %986 = vmatprep.subr.mxu0 0.0
  %987 = vmatpush1.msra.mxu0 0.0
  %988 = vmatprep.subr.mxu0 0.0
  %989 = vmatpush1.msra.mxu0 0.0
  %990 = vmatprep.subr.mxu0 0.0
  %991 = vmatpush1.msra.mxu0 0.0
  %992 = vmatprep.subr.mxu0 0.0
  %993 = vmatpush1.msra.mxu0 0.0
  %994 = vmatprep.subr.mxu0 0.0
  %995 = vmatpush1.msra.mxu0 0.0
  %996 = vmatprep.mubr.f32.mxu0 0.0
  %997 = vmatmul.mubr.f32.gmra.mrb[0].mxu0 %v682
  %v998 = vpop.f32.mrb[0].mxu0
  %v999 = vadd.f32 %v929, %v998
  %v1000 = vpop.f32.mrb[0].mxu0
  %1001 = vdwg.mxu0
  %v1002 = vld [vmem:[%s13] sm:$0x1]
  %v1004 = vlaneseq
  %v1005 = vshrl.u32 %v1004, 7
  %v1006 = vsub.s32 0, %v1005
  %v1007 = vrot.slane %v1002, %v1006
  %v1009 = vadd.f32 %v999, %v1007
  %v1010 = vmax.f32 %v1009, 0.0
  %1011 = vmatprep.subr.mxu0 0.0
  %1012 = vmatpush1.msra.mxu0 %v1010
  %1013 = vmatprep.subr.mxu0 0.0
  %1014 = vmatpush1.msra.mxu0 0.0
  %1015 = vmatprep.subr.mxu0 0.0
  %1016 = vmatpush1.msra.mxu0 0.0
  %1017 = vmatprep.subr.mxu0 0.0
  %1018 = vmatpush1.msra.mxu0 0.0
  %1019 = vmatprep.subr.mxu0 0.0
  %1020 = vmatpush1.msra.mxu0 0.0
  %1021 = vmatprep.subr.mxu0 0.0
  %1022 = vmatpush1.msra.mxu0 0.0
  %1023 = vmatprep.subr.mxu0 0.0
  %1024 = vmatpush1.msra.mxu0 0.0
  %1025 = vmatprep.subr.mxu0 0.0
  %1026 = vmatpush1.msra.mxu0 0.0
  %1027 = vmatprep.subr.mxu0 0.0
  %1028 = vmatpush1.msra.mxu0 0.0
  %1029 = vmatprep.subr.mxu0 0.0
  %1030 = vmatpush1.msra.mxu0 0.0
  %1031 = vmatprep.subr.mxu0 0.0
  %1032 = vmatpush1.msra.mxu0 0.0
  %1033 = vmatprep.subr.mxu0 0.0
  %1034 = vmatpush1.msra.mxu0 0.0
  %1035 = vmatprep.subr.mxu0 0.0
  %1036 = vmatpush1.msra.mxu0 0.0
  %1037 = vmatprep.subr.mxu0 0.0
  %1038 = vmatpush1.msra.mxu0 0.0
  %1039 = vmatprep.subr.mxu0 0.0
  %1040 = vmatpush1.msra.mxu0 0.0
  %1041 = vmatprep.subr.mxu0 0.0
  %1042 = vmatpush1.msra.mxu0 0.0
  %1043 = vmatprep.subr.mxu0 0.0
  %1044 = vmatpush1.msra.mxu0 0.0
  %1045 = vmatprep.subr.mxu0 0.0
  %1046 = vmatpush1.msra.mxu0 0.0
  %1047 = vmatprep.subr.mxu0 0.0
  %1048 = vmatpush1.msra.mxu0 0.0
  %1049 = vmatprep.subr.mxu0 0.0
  %1050 = vmatpush1.msra.mxu0 0.0
  %1051 = vmatprep.subr.mxu0 0.0
  %1052 = vmatpush1.msra.mxu0 0.0
  %1053 = vmatprep.subr.mxu0 0.0
  %1054 = vmatpush1.msra.mxu0 0.0
  %1055 = vmatprep.subr.mxu0 0.0
  %1056 = vmatpush1.msra.mxu0 0.0
  %1057 = vmatprep.subr.mxu0 0.0
  %1058 = vmatpush1.msra.mxu0 0.0
  %1059 = vmatprep.subr.mxu0 0.0
  %1060 = vmatpush1.msra.mxu0 0.0
  %1061 = vmatprep.subr.mxu0 0.0
  %1062 = vmatpush1.msra.mxu0 0.0
  %1063 = vmatprep.subr.mxu0 0.0
  %1064 = vmatpush1.msra.mxu0 0.0
  %1065 = vmatprep.subr.mxu0 0.0
  %1066 = vmatpush1.msra.mxu0 0.0
  %1067 = vmatprep.subr.mxu0 0.0
  %1068 = vmatpush1.msra.mxu0 0.0
  %1069 = vmatprep.subr.mxu0 0.0
  %1070 = vmatpush1.msra.mxu0 0.0
  %1071 = vmatprep.subr.mxu0 0.0
  %1072 = vmatpush1.msra.mxu0 0.0
  %1073 = vmatprep.subr.mxu0 0.0
  %1074 = vmatpush1.msra.mxu0 0.0
  %1075 = vmatprep.mubr.f32.mxu0 0.0
  %1076 = vmatmul.mubr.f32.gmra.mrb[0].mxu0 %v162
  %v1077 = vpop.f32.mrb[0].mxu0
  %v1078 = vadd.f32 0.0, %v1077
  %v1079 = vpop.f32.mrb[0].mxu0
  %1080 = vmatprep.mubr.f32.mxu0 0.0
  %1081 = vmatmul.mubr.f32.gmra.mrb[0].mxu0 %v165
  %v1082 = vpop.f32.mrb[0].mxu0
  %v1083 = vadd.f32 0.0, %v1082
  %v1084 = vpop.f32.mrb[0].mxu0
  %1085 = vmatprep.mubr.f32.mxu0 0.0
  %1086 = vmatmul.mubr.f32.gmra.mrb[0].mxu0 %v168
  %v1087 = vpop.f32.mrb[0].mxu0
  %v1088 = vadd.f32 0.0, %v1087
  %v1089 = vpop.f32.mrb[0].mxu0
  %1090 = vdwg.mxu0
  %1091 = vmatprep.subr.mxu0 0.0
  %1092 = vmatpush1.msra.mxu0 %v1010
  %1093 = vmatprep.subr.mxu0 0.0
  %1094 = vmatpush1.msra.mxu0 0.0
  %1095 = vmatprep.subr.mxu0 0.0
  %1096 = vmatpush1.msra.mxu0 0.0
  %1097 = vmatprep.subr.mxu0 0.0
  %1098 = vmatpush1.msra.mxu0 0.0
  %1099 = vmatprep.subr.mxu0 0.0
  %1100 = vmatpush1.msra.mxu0 0.0
  %1101 = vmatprep.subr.mxu0 0.0
  %1102 = vmatpush1.msra.mxu0 0.0
  %1103 = vmatprep.subr.mxu0 0.0
  %1104 = vmatpush1.msra.mxu0 0.0
  %1105 = vmatprep.subr.mxu0 0.0
  %1106 = vmatpush1.msra.mxu0 0.0
  %1107 = vmatprep.subr.mxu0 0.0
  %1108 = vmatpush1.msra.mxu0 0.0
  %1109 = vmatprep.subr.mxu0 0.0
  %1110 = vmatpush1.msra.mxu0 0.0
  %1111 = vmatprep.subr.mxu0 0.0
  %1112 = vmatpush1.msra.mxu0 0.0
  %1113 = vmatprep.subr.mxu0 0.0
  %1114 = vmatpush1.msra.mxu0 0.0
  %1115 = vmatprep.subr.mxu0 0.0
  %1116 = vmatpush1.msra.mxu0 0.0
  %1117 = vmatprep.subr.mxu0 0.0
  %1118 = vmatpush1.msra.mxu0 0.0
  %1119 = vmatprep.subr.mxu0 0.0
  %1120 = vmatpush1.msra.mxu0 0.0
  %1121 = vmatprep.subr.mxu0 0.0
  %1122 = vmatpush1.msra.mxu0 0.0
  %1123 = vmatprep.subr.mxu0 0.0
  %1124 = vmatpush1.msra.mxu0 0.0
  %1125 = vmatprep.subr.mxu0 0.0
  %1126 = vmatpush1.msra.mxu0 0.0
  %1127 = vmatprep.subr.mxu0 0.0
  %1128 = vmatpush1.msra.mxu0 0.0
  %1129 = vmatprep.subr.mxu0 0.0
  %1130 = vmatpush1.msra.mxu0 0.0
  %1131 = vmatprep.subr.mxu0 0.0
  %1132 = vmatpush1.msra.mxu0 0.0
  %1133 = vmatprep.subr.mxu0 0.0
  %1134 = vmatpush1.msra.mxu0 0.0
  %1135 = vmatprep.subr.mxu0 0.0
  %1136 = vmatpush1.msra.mxu0 0.0
  %1137 = vmatprep.subr.mxu0 0.0
  %1138 = vmatpush1.msra.mxu0 0.0
  %1139 = vmatprep.subr.mxu0 0.0
  %1140 = vmatpush1.msra.mxu0 0.0
  %1141 = vmatprep.subr.mxu0 0.0
  %1142 = vmatpush1.msra.mxu0 0.0
  %1143 = vmatprep.subr.mxu0 0.0
  %1144 = vmatpush1.msra.mxu0 0.0
  %1145 = vmatprep.subr.mxu0 0.0
  %1146 = vmatpush1.msra.mxu0 0.0
  %1147 = vmatprep.subr.mxu0 0.0
  %1148 = vmatpush1.msra.mxu0 0.0
  %1149 = vmatprep.subr.mxu0 0.0
  %1150 = vmatpush1.msra.mxu0 0.0
  %1151 = vmatprep.subr.mxu0 0.0
  %1152 = vmatpush1.msra.mxu0 0.0
  %1153 = vmatprep.subr.mxu0 0.0
  %1154 = vmatpush1.msra.mxu0 0.0
  %1155 = vmatprep.mubr.f32.mxu0 0.0
  %1156 = vmatmul.mubr.f32.gmra.mrb[0].mxu0 %v251
  %v1157 = vpop.f32.mrb[0].mxu0
  %v1158 = vadd.f32 0.0, %v1157
  %v1159 = vpop.f32.mrb[0].mxu0
  %1160 = vmatprep.mubr.f32.mxu0 0.0
  %1161 = vmatmul.mubr.f32.gmra.mrb[0].mxu0 %v254
  %v1162 = vpop.f32.mrb[0].mxu0
  %v1163 = vadd.f32 0.0, %v1162
  %v1164 = vpop.f32.mrb[0].mxu0
  %1165 = vmatprep.mubr.f32.mxu0 0.0
  %1166 = vmatmul.mubr.f32.gmra.mrb[0].mxu0 %v257
  %v1167 = vpop.f32.mrb[0].mxu0
  %v1168 = vadd.f32 0.0, %v1167
  %v1169 = vpop.f32.mrb[0].mxu0
  %1170 = vdwg.mxu0
  %1174 = vrot.lane.b32.xlu0 %v1158, 32
  %v1175 = vpop.permute.xlu0 %1174
  %1176 = vrot.lane.b32.xlu0 %v1163, 32
  %v1177 = vpop.permute.xlu0 %1176
  %1178 = vrot.lane.b32.xlu0 %v1168, 32
  %v1179 = vpop.permute.xlu0 %1178
  %v1183 = vsel %vm351, %v1078, %v1175
  %v1184 = vsel %vm351, %v1083, %v1177
  %v1185 = vsel %vm351, %v1088, %v1179
  %v1186 = vsel %vm355, %v1183, 1.0
  %v1187 = vsel %vm355, %v1184, 1.0
  %v1188 = vsel %vm355, %v1185, 1.0
  %s1189 = scalar_lea.vmem %s9, 72
  %v1190 = vld [vmem:[%s1189] sm:$0xff]
  %v1191 = vld [vmem:[%s1189 + $0x8] sm:$0xff]
  %v1192 = vld [vmem:[%s1189 + $0x10] sm:$0xff]
  %v1193 = vld [vmem:[%s1189 + $0x18] sm:$0xff]
  %v1194 = vld [vmem:[%s1189 + $0x20] sm:$0xff]
  %v1195 = vld [vmem:[%s1189 + $0x28] sm:$0xff]
  %v1196 = vld [vmem:[%s1189 + $0x30] sm:$0xff]
  %v1197 = vld [vmem:[%s1189 + $0x38] sm:$0xff]
  %v1198 = vld [vmem:[%s1189 + $0x40] sm:$0x1]
  %v1200 = vsel %vm368, %v1186, 0
  %v1203 = vsel %vm368, %v1187, 0
  %v1206 = vsel %vm368, %v1188, 0
  %v1209 = vsel %vm72, %v1198, 0
  %1211 = vmatprep.subr.mxu0 0.0
  %1212 = vmatpush1.msra.mxu0 %v1190
  %1213 = vmatprep.subr.mxu0 0.0
  %1214 = vmatpush1.msra.mxu0 %v1191
  %1215 = vmatprep.subr.mxu0 0.0
  %1216 = vmatpush1.msra.mxu0 %v1192
  %1217 = vmatprep.subr.mxu0 0.0
  %1218 = vmatpush1.msra.mxu0 %v1193
  %1219 = vmatprep.subr.mxu0 0.0
  %1220 = vmatpush1.msra.mxu0 %v1194
  %1221 = vmatprep.subr.mxu0 0.0
  %1222 = vmatpush1.msra.mxu0 %v1195
  %1223 = vmatprep.subr.mxu0 0.0
  %1224 = vmatpush1.msra.mxu0 %v1196
  %1225 = vmatprep.subr.mxu0 0.0
  %1226 = vmatpush1.msra.mxu0 %v1197
  %1227 = vmatprep.subr.mxu0 0.0
  %1228 = vmatpush1.msra.mxu0 %v1209
  %1229 = vmatprep.subr.mxu0 0.0
  %1230 = vmatpush1.msra.mxu0 0.0
  %1231 = vmatprep.subr.mxu0 0.0
  %1232 = vmatpush1.msra.mxu0 0.0
  %1233 = vmatprep.subr.mxu0 0.0
  %1234 = vmatpush1.msra.mxu0 0.0
  %1235 = vmatprep.subr.mxu0 0.0
  %1236 = vmatpush1.msra.mxu0 0.0
  %1237 = vmatprep.subr.mxu0 0.0
  %1238 = vmatpush1.msra.mxu0 0.0
  %1239 = vmatprep.subr.mxu0 0.0
  %1240 = vmatpush1.msra.mxu0 0.0
  %1241 = vmatprep.subr.mxu0 0.0
  %1242 = vmatpush1.msra.mxu0 0.0
  %1243 = vmatprep.subr.mxu0 0.0
  %1244 = vmatpush1.msra.mxu0 0.0
  %1245 = vmatprep.subr.mxu0 0.0
  %1246 = vmatpush1.msra.mxu0 0.0
  %1247 = vmatprep.subr.mxu0 0.0
  %1248 = vmatpush1.msra.mxu0 0.0
  %1249 = vmatprep.subr.mxu0 0.0
  %1250 = vmatpush1.msra.mxu0 0.0
  %1251 = vmatprep.subr.mxu0 0.0
  %1252 = vmatpush1.msra.mxu0 0.0
  %1253 = vmatprep.subr.mxu0 0.0
  %1254 = vmatpush1.msra.mxu0 0.0
  %1255 = vmatprep.subr.mxu0 0.0
  %1256 = vmatpush1.msra.mxu0 0.0
  %1257 = vmatprep.subr.mxu0 0.0
  %1258 = vmatpush1.msra.mxu0 0.0
  %1259 = vmatprep.subr.mxu0 0.0
  %1260 = vmatpush1.msra.mxu0 0.0
  %1261 = vmatprep.subr.mxu0 0.0
  %1262 = vmatpush1.msra.mxu0 0.0
  %1263 = vmatprep.subr.mxu0 0.0
  %1264 = vmatpush1.msra.mxu0 0.0
  %1265 = vmatprep.subr.mxu0 0.0
  %1266 = vmatpush1.msra.mxu0 0.0
  %1267 = vmatprep.subr.mxu0 0.0
  %1268 = vmatpush1.msra.mxu0 0.0
  %1269 = vmatprep.subr.mxu0 0.0
  %1270 = vmatpush1.msra.mxu0 0.0
  %1271 = vmatprep.subr.mxu0 0.0
  %1272 = vmatpush1.msra.mxu0 0.0
  %1273 = vmatprep.subr.mxu0 0.0
  %1274 = vmatpush1.msra.mxu0 0.0
  %1275 = vmatprep.mubr.f32.mxu0 0.0
  %1276 = vmatmul.mubr.f32.gmra.mrb[0].mxu0 %v1200
  %v1277 = vpop.f32.mrb[0].mxu0
  %v1278 = vadd.f32 0.0, %v1277
  %v1279 = vpop.f32.mrb[0].mxu0
  %1280 = vmatprep.mubr.f32.mxu0 0.0
  %1281 = vmatmul.mubr.f32.gmra.mrb[0].mxu0 %v1203
  %v1282 = vpop.f32.mrb[0].mxu0
  %v1283 = vadd.f32 0.0, %v1282
  %v1284 = vpop.f32.mrb[0].mxu0
  %1285 = vmatprep.mubr.f32.mxu0 0.0
  %1286 = vmatmul.mubr.f32.gmra.mrb[0].mxu0 %v1206
  %v1287 = vpop.f32.mrb[0].mxu0
  %v1288 = vadd.f32 0.0, %v1287
  %v1289 = vpop.f32.mrb[0].mxu0
  %1290 = vdwg.mxu0
  %vm1291 = vcmp.gt.f32.partialorder %v1278, 0.0
  %vm1292 = vcmp.gt.f32.partialorder %v1283, 0.0
  %vm1293 = vcmp.gt.f32.partialorder %v1288, 0.0
  %v1294 = vmul.f32 %v1278, 0.2
  %v1295 = vmul.f32 %v1283, 0.2
  %v1296 = vmul.f32 %v1288, 0.2
  %v1297 = vsel %vm1291, %v1278, %v1294
  %v1298 = vsel %vm1292, %v1283, %v1295
  %v1299 = vsel %vm1293, %v1288, %v1296
  %s1300 = scalar_lea.vmem %s10, 32
  %v1301 = vld [vmem:[%s1300] sm:$0xff]
  %v1302 = vld [vmem:[%s1300 + $0x8] sm:$0xff]
  %v1303 = vld [vmem:[%s1300 + $0x10] sm:$0xff]
  %v1304 = vld [vmem:[%s1300 + $0x18] sm:$0xff]
  %s1305 = scalar_lea.vmem %s11, 24
  %v1306 = vld [vmem:[%s1305] sm:$0xff]
  %v1307 = vld [vmem:[%s1305 + $0x8] sm:$0xff]
  %v1308 = vld [vmem:[%s1305 + $0x10] sm:$0xff]
  %v1310 = vsel %vm351, %v1297, 0
  %v1313 = vsel %vm351, %v1298, 0
  %v1316 = vsel %vm351, %v1299, 0
  %1318 = vmatprep.subr.mxu0 0.0
  %1319 = vmatpush1.msra.mxu0 %v1301
  %1320 = vmatprep.subr.mxu0 0.0
  %1321 = vmatpush1.msra.mxu0 %v1302
  %1322 = vmatprep.subr.mxu0 0.0
  %1323 = vmatpush1.msra.mxu0 %v1303
  %1324 = vmatprep.subr.mxu0 0.0
  %1325 = vmatpush1.msra.mxu0 %v1304
  %1326 = vmatprep.subr.mxu0 0.0
  %1327 = vmatpush1.msra.mxu0 0.0
  %1328 = vmatprep.subr.mxu0 0.0
  %1329 = vmatpush1.msra.mxu0 0.0
  %1330 = vmatprep.subr.mxu0 0.0
  %1331 = vmatpush1.msra.mxu0 0.0
  %1332 = vmatprep.subr.mxu0 0.0
  %1333 = vmatpush1.msra.mxu0 0.0
  %1334 = vmatprep.subr.mxu0 0.0
  %1335 = vmatpush1.msra.mxu0 0.0
  %1336 = vmatprep.subr.mxu0 0.0
  %1337 = vmatpush1.msra.mxu0 0.0
  %1338 = vmatprep.subr.mxu0 0.0
  %1339 = vmatpush1.msra.mxu0 0.0
  %1340 = vmatprep.subr.mxu0 0.0
  %1341 = vmatpush1.msra.mxu0 0.0
  %1342 = vmatprep.subr.mxu0 0.0
  %1343 = vmatpush1.msra.mxu0 0.0
  %1344 = vmatprep.subr.mxu0 0.0
  %1345 = vmatpush1.msra.mxu0 0.0
  %1346 = vmatprep.subr.mxu0 0.0
  %1347 = vmatpush1.msra.mxu0 0.0
  %1348 = vmatprep.subr.mxu0 0.0
  %1349 = vmatpush1.msra.mxu0 0.0
  %1350 = vmatprep.subr.mxu0 0.0
  %1351 = vmatpush1.msra.mxu0 0.0
  %1352 = vmatprep.subr.mxu0 0.0
  %1353 = vmatpush1.msra.mxu0 0.0
  %1354 = vmatprep.subr.mxu0 0.0
  %1355 = vmatpush1.msra.mxu0 0.0
  %1356 = vmatprep.subr.mxu0 0.0
  %1357 = vmatpush1.msra.mxu0 0.0
  %1358 = vmatprep.subr.mxu0 0.0
  %1359 = vmatpush1.msra.mxu0 0.0
  %1360 = vmatprep.subr.mxu0 0.0
  %1361 = vmatpush1.msra.mxu0 0.0
  %1362 = vmatprep.subr.mxu0 0.0
  %1363 = vmatpush1.msra.mxu0 0.0
  %1364 = vmatprep.subr.mxu0 0.0
  %1365 = vmatpush1.msra.mxu0 0.0
  %1366 = vmatprep.subr.mxu0 0.0
  %1367 = vmatpush1.msra.mxu0 0.0
  %1368 = vmatprep.subr.mxu0 0.0
  %1369 = vmatpush1.msra.mxu0 0.0
  %1370 = vmatprep.subr.mxu0 0.0
  %1371 = vmatpush1.msra.mxu0 0.0
  %1372 = vmatprep.subr.mxu0 0.0
  %1373 = vmatpush1.msra.mxu0 0.0
  %1374 = vmatprep.subr.mxu0 0.0
  %1375 = vmatpush1.msra.mxu0 0.0
  %1376 = vmatprep.subr.mxu0 0.0
  %1377 = vmatpush1.msra.mxu0 0.0
  %1378 = vmatprep.subr.mxu0 0.0
  %1379 = vmatpush1.msra.mxu0 0.0
  %1380 = vmatprep.subr.mxu0 0.0
  %1381 = vmatpush1.msra.mxu0 0.0
  %1382 = vmatprep.mubr.f32.mxu0 0.0
  %1383 = vmatmul.mubr.f32.gmra.mrb[0].mxu0 %v1310
  %v1384 = vpop.f32.mrb[0].mxu0
  %v1385 = vadd.f32 %v1306, %v1384
  %v1386 = vpop.f32.mrb[0].mxu0
  %1387 = vmatprep.mubr.f32.mxu0 0.0
  %1388 = vmatmul.mubr.f32.gmra.mrb[0].mxu0 %v1313
  %v1389 = vpop.f32.mrb[0].mxu0
  %v1390 = vadd.f32 %v1307, %v1389
  %v1391 = vpop.f32.mrb[0].mxu0
  %1392 = vmatprep.mubr.f32.mxu0 0.0
  %1393 = vmatmul.mubr.f32.gmra.mrb[0].mxu0 %v1316
  %v1394 = vpop.f32.mrb[0].mxu0
  %v1395 = vadd.f32 %v1308, %v1394
  %v1396 = vpop.f32.mrb[0].mxu0
  %1397 = vdwg.mxu0
  %v1398 = vsel %vm566, %v1385, -inf
  %v1399 = vsel %vm566, %v1390, -inf
  %v1400 = vsel %vm566, %v1395, -inf
  %v1401 = vmax.f32 %v1398, %v1399
  %v1402 = vmax.f32 %v1401, %v1400
  %v1403 = vrot.slane %v1402, 4
  %v1404 = vmax.f32 %v1402, %v1403
  %v1405 = vrot.slane %v1404, 2
  %v1406 = vmax.f32 %v1404, %v1405
  %v1407 = vrot.slane %v1406, 1
  %v1408 = vmax.f32 %v1406, %v1407
  %v1409 = vsub.f32 %v1385, %v1408
  %v1410 = vsub.f32 %v1390, %v1408
  %v1411 = vsub.f32 %v1395, %v1408
  %v1413 = vsel %vm566, %v1409, 0
  %v1416 = vsel %vm566, %v1410, 0
  %v1419 = vsel %vm566, %v1411, 0
  %1421 = vmatprep.subr.mxu0 0.0
  %1422 = vmatpush1.msra.mxu0 %v592
  %1423 = vmatprep.subr.mxu0 0.0
  %1424 = vmatpush1.msra.mxu0 0.0
  %1425 = vmatprep.subr.mxu0 0.0
  %1426 = vmatpush1.msra.mxu0 0.0
  %1427 = vmatprep.subr.mxu0 0.0
  %1428 = vmatpush1.msra.mxu0 0.0
  %1429 = vmatprep.subr.mxu0 0.0
  %1430 = vmatpush1.msra.mxu0 0.0
  %1431 = vmatprep.subr.mxu0 0.0
  %1432 = vmatpush1.msra.mxu0 0.0
  %1433 = vmatprep.subr.mxu0 0.0
  %1434 = vmatpush1.msra.mxu0 0.0
  %1435 = vmatprep.subr.mxu0 0.0
  %1436 = vmatpush1.msra.mxu0 0.0
  %1437 = vmatprep.subr.mxu0 0.0
  %1438 = vmatpush1.msra.mxu0 0.0
  %1439 = vmatprep.subr.mxu0 0.0
  %1440 = vmatpush1.msra.mxu0 0.0
  %1441 = vmatprep.subr.mxu0 0.0
  %1442 = vmatpush1.msra.mxu0 0.0
  %1443 = vmatprep.subr.mxu0 0.0
  %1444 = vmatpush1.msra.mxu0 0.0
  %1445 = vmatprep.subr.mxu0 0.0
  %1446 = vmatpush1.msra.mxu0 0.0
  %1447 = vmatprep.subr.mxu0 0.0
  %1448 = vmatpush1.msra.mxu0 0.0
  %1449 = vmatprep.subr.mxu0 0.0
  %1450 = vmatpush1.msra.mxu0 0.0
  %1451 = vmatprep.subr.mxu0 0.0
  %1452 = vmatpush1.msra.mxu0 0.0
  %1453 = vmatprep.subr.mxu0 0.0
  %1454 = vmatpush1.msra.mxu0 0.0
  %1455 = vmatprep.subr.mxu0 0.0
  %1456 = vmatpush1.msra.mxu0 0.0
  %1457 = vmatprep.subr.mxu0 0.0
  %1458 = vmatpush1.msra.mxu0 0.0
  %1459 = vmatprep.subr.mxu0 0.0
  %1460 = vmatpush1.msra.mxu0 0.0
  %1461 = vmatprep.subr.mxu0 0.0
  %1462 = vmatpush1.msra.mxu0 0.0
  %1463 = vmatprep.subr.mxu0 0.0
  %1464 = vmatpush1.msra.mxu0 0.0
  %1465 = vmatprep.subr.mxu0 0.0
  %1466 = vmatpush1.msra.mxu0 0.0
  %1467 = vmatprep.subr.mxu0 0.0
  %1468 = vmatpush1.msra.mxu0 0.0
  %1469 = vmatprep.subr.mxu0 0.0
  %1470 = vmatpush1.msra.mxu0 0.0
  %1471 = vmatprep.subr.mxu0 0.0
  %1472 = vmatpush1.msra.mxu0 0.0
  %1473 = vmatprep.subr.mxu0 0.0
  %1474 = vmatpush1.msra.mxu0 0.0
  %1475 = vmatprep.subr.mxu0 0.0
  %1476 = vmatpush1.msra.mxu0 0.0
  %1477 = vmatprep.subr.mxu0 0.0
  %1478 = vmatpush1.msra.mxu0 0.0
  %1479 = vmatprep.subr.mxu0 0.0
  %1480 = vmatpush1.msra.mxu0 0.0
  %1481 = vmatprep.subr.mxu0 0.0
  %1482 = vmatpush1.msra.mxu0 0.0
  %1483 = vmatprep.subr.mxu0 0.0
  %1484 = vmatpush1.msra.mxu0 0.0
  %1485 = vmatprep.mubr.f32.mxu0 0.0
  %1486 = vmatmul.mubr.f32.gmra.mrb[0].mxu0 %v1413
  %v1487 = vpop.f32.mrb[0].mxu0
  %v1488 = vadd.f32 0.0, %v1487
  %v1489 = vpop.f32.mrb[0].mxu0
  %1490 = vmatprep.mubr.f32.mxu0 0.0
  %1491 = vmatmul.mubr.f32.gmra.mrb[0].mxu0 %v1416
  %v1492 = vpop.f32.mrb[0].mxu0
  %v1493 = vadd.f32 0.0, %v1492
  %v1494 = vpop.f32.mrb[0].mxu0
  %1495 = vmatprep.mubr.f32.mxu0 0.0
  %1496 = vmatmul.mubr.f32.gmra.mrb[0].mxu0 %v1419
  %v1497 = vpop.f32.mrb[0].mxu0
  %v1498 = vadd.f32 0.0, %v1497
  %v1499 = vpop.f32.mrb[0].mxu0
  %1500 = vdwg.mxu0
  %v1501 = vmul.f32 %v1488, 1.442695
  %v1502 = vpow.pop %v1501
  %v1503 = vmul.f32 %v1493, 1.442695
  %v1504 = vpow.pop %v1503
  %v1505 = vmul.f32 %v1498, 1.442695
  %v1506 = vpow.pop %v1505
  %1507 = vmatprep.subr.mxu0 0.0
  %1508 = vmatpush1.msra.mxu0 %v1502
  %1509 = vmatprep.subr.mxu0 0.0
  %1510 = vmatpush1.msra.mxu0 %v1504
  %1511 = vmatprep.subr.mxu0 0.0
  %1512 = vmatpush1.msra.mxu0 %v1506
  %1513 = vmatprep.subr.mxu0 0.0
  %1514 = vmatpush1.msra.mxu0 0.0
  %1515 = vmatprep.subr.mxu0 0.0
  %1516 = vmatpush1.msra.mxu0 0.0
  %1517 = vmatprep.subr.mxu0 0.0
  %1518 = vmatpush1.msra.mxu0 0.0
  %1519 = vmatprep.subr.mxu0 0.0
  %1520 = vmatpush1.msra.mxu0 0.0
  %1521 = vmatprep.subr.mxu0 0.0
  %1522 = vmatpush1.msra.mxu0 0.0
  %1523 = vmatprep.subr.mxu0 0.0
  %1524 = vmatpush1.msra.mxu0 0.0
  %1525 = vmatprep.subr.mxu0 0.0
  %1526 = vmatpush1.msra.mxu0 0.0
  %1527 = vmatprep.subr.mxu0 0.0
  %1528 = vmatpush1.msra.mxu0 0.0
  %1529 = vmatprep.subr.mxu0 0.0
  %1530 = vmatpush1.msra.mxu0 0.0
  %1531 = vmatprep.subr.mxu0 0.0
  %1532 = vmatpush1.msra.mxu0 0.0
  %1533 = vmatprep.subr.mxu0 0.0
  %1534 = vmatpush1.msra.mxu0 0.0
  %1535 = vmatprep.subr.mxu0 0.0
  %1536 = vmatpush1.msra.mxu0 0.0
  %1537 = vmatprep.subr.mxu0 0.0
  %1538 = vmatpush1.msra.mxu0 0.0
  %1539 = vmatprep.subr.mxu0 0.0
  %1540 = vmatpush1.msra.mxu0 0.0
  %1541 = vmatprep.subr.mxu0 0.0
  %1542 = vmatpush1.msra.mxu0 0.0
  %1543 = vmatprep.subr.mxu0 0.0
  %1544 = vmatpush1.msra.mxu0 0.0
  %1545 = vmatprep.subr.mxu0 0.0
  %1546 = vmatpush1.msra.mxu0 0.0
  %1547 = vmatprep.subr.mxu0 0.0
  %1548 = vmatpush1.msra.mxu0 0.0
  %1549 = vmatprep.subr.mxu0 0.0
  %1550 = vmatpush1.msra.mxu0 0.0
  %1551 = vmatprep.subr.mxu0 0.0
  %1552 = vmatpush1.msra.mxu0 0.0
  %1553 = vmatprep.subr.mxu0 0.0
  %1554 = vmatpush1.msra.mxu0 0.0
  %1555 = vmatprep.subr.mxu0 0.0
  %1556 = vmatpush1.msra.mxu0 0.0
  %1557 = vmatprep.subr.mxu0 0.0
  %1558 = vmatpush1.msra.mxu0 0.0
  %1559 = vmatprep.subr.mxu0 0.0
  %1560 = vmatpush1.msra.mxu0 0.0
  %1561 = vmatprep.subr.mxu0 0.0
  %1562 = vmatpush1.msra.mxu0 0.0
  %1563 = vmatprep.subr.mxu0 0.0
  %1564 = vmatpush1.msra.mxu0 0.0
  %1565 = vmatprep.subr.mxu0 0.0
  %1566 = vmatpush1.msra.mxu0 0.0
  %1567 = vmatprep.subr.mxu0 0.0
  %1568 = vmatpush1.msra.mxu0 0.0
  %1569 = vmatprep.subr.mxu0 0.0
  %1570 = vmatpush1.msra.mxu0 0.0
  %1571 = vmatprep.mubr.f32.mxu0 0.0
  %1572 = vmatmul.mubr.f32.gmra.mrb[0].mxu0 %v682
  %v1573 = vpop.f32.mrb[0].mxu0
  %v1574 = vadd.f32 0.0, %v1573
  %v1575 = vpop.f32.mrb[0].mxu0
  %1576 = vdwg.mxu0
  %1577 = vmatprep.subr.mxu0 0.0
  %1578 = vmatpush1.msra.mxu0 %v1574
  %1579 = vmatprep.subr.mxu0 0.0
  %1580 = vmatpush1.msra.mxu0 0.0
  %1581 = vmatprep.subr.mxu0 0.0
  %1582 = vmatpush1.msra.mxu0 0.0
  %1583 = vmatprep.subr.mxu0 0.0
  %1584 = vmatpush1.msra.mxu0 0.0
  %1585 = vmatprep.subr.mxu0 0.0
  %1586 = vmatpush1.msra.mxu0 0.0
  %1587 = vmatprep.subr.mxu0 0.0
  %1588 = vmatpush1.msra.mxu0 0.0
  %1589 = vmatprep.subr.mxu0 0.0
  %1590 = vmatpush1.msra.mxu0 0.0
  %1591 = vmatprep.subr.mxu0 0.0
  %1592 = vmatpush1.msra.mxu0 0.0
  %1593 = vmatprep.subr.mxu0 0.0
  %1594 = vmatpush1.msra.mxu0 0.0
  %1595 = vmatprep.subr.mxu0 0.0
  %1596 = vmatpush1.msra.mxu0 0.0
  %1597 = vmatprep.subr.mxu0 0.0
  %1598 = vmatpush1.msra.mxu0 0.0
  %1599 = vmatprep.subr.mxu0 0.0
  %1600 = vmatpush1.msra.mxu0 0.0
  %1601 = vmatprep.subr.mxu0 0.0
  %1602 = vmatpush1.msra.mxu0 0.0
  %1603 = vmatprep.subr.mxu0 0.0
  %1604 = vmatpush1.msra.mxu0 0.0
  %1605 = vmatprep.subr.mxu0 0.0
  %1606 = vmatpush1.msra.mxu0 0.0
  %1607 = vmatprep.subr.mxu0 0.0
  %1608 = vmatpush1.msra.mxu0 0.0
  %1609 = vmatprep.subr.mxu0 0.0
  %1610 = vmatpush1.msra.mxu0 0.0
  %1611 = vmatprep.subr.mxu0 0.0
  %1612 = vmatpush1.msra.mxu0 0.0
  %1613 = vmatprep.subr.mxu0 0.0
  %1614 = vmatpush1.msra.mxu0 0.0
  %1615 = vmatprep.subr.mxu0 0.0
  %1616 = vmatpush1.msra.mxu0 0.0
  %1617 = vmatprep.subr.mxu0 0.0
  %1618 = vmatpush1.msra.mxu0 0.0
  %1619 = vmatprep.subr.mxu0 0.0
  %1620 = vmatpush1.msra.mxu0 0.0
  %1621 = vmatprep.subr.mxu0 0.0
  %1622 = vmatpush1.msra.mxu0 0.0
  %1623 = vmatprep.subr.mxu0 0.0
  %1624 = vmatpush1.msra.mxu0 0.0
  %1625 = vmatprep.subr.mxu0 0.0
  %1626 = vmatpush1.msra.mxu0 0.0
  %1627 = vmatprep.subr.mxu0 0.0
  %1628 = vmatpush1.msra.mxu0 0.0
  %1629 = vmatprep.subr.mxu0 0.0
  %1630 = vmatpush1.msra.mxu0 0.0
  %1631 = vmatprep.subr.mxu0 0.0
  %1632 = vmatpush1.msra.mxu0 0.0
  %1633 = vmatprep.subr.mxu0 0.0
  %1634 = vmatpush1.msra.mxu0 0.0
  %1635 = vmatprep.subr.mxu0 0.0
  %1636 = vmatpush1.msra.mxu0 0.0
  %1637 = vmatprep.subr.mxu0 0.0
  %1638 = vmatpush1.msra.mxu0 0.0
  %1639 = vmatprep.subr.mxu0 0.0
  %1640 = vmatpush1.msra.mxu0 0.0
  %1641 = vmatprep.mubr.f32.mxu0 0.0
  %1642 = vmatmul.mubr.f32.gmra.mrb[0].mxu0 %v162
  %v1643 = vpop.f32.mrb[0].mxu0
  %v1644 = vadd.f32 1e-16, %v1643
  %v1645 = vpop.f32.mrb[0].mxu0
  %1646 = vmatprep.mubr.f32.mxu0 0.0
  %1647 = vmatmul.mubr.f32.gmra.mrb[0].mxu0 %v165
  %v1648 = vpop.f32.mrb[0].mxu0
  %v1649 = vadd.f32 1e-16, %v1648
  %v1650 = vpop.f32.mrb[0].mxu0
  %1651 = vmatprep.mubr.f32.mxu0 0.0
  %1652 = vmatmul.mubr.f32.gmra.mrb[0].mxu0 %v168
  %v1653 = vpop.f32.mrb[0].mxu0
  %v1654 = vadd.f32 1e-16, %v1653
  %v1655 = vpop.f32.mrb[0].mxu0
  %1656 = vdwg.mxu0
  %v1657 = vrcp.pop %v1644
  %v1658 = vrcp.pop %v1649
  %v1659 = vrcp.pop %v1654
  %v1660 = vmul.f32 %v1502, %v1657
  %v1661 = vmul.f32 %v1504, %v1658
  %v1662 = vmul.f32 %v1506, %v1659
  %1666 = vrot.lane.b32.xlu0 %v1278, 96
  %v1667 = vpop.permute.xlu0 %1666
  %1668 = vrot.lane.b32.xlu0 %v1283, 96
  %v1669 = vpop.permute.xlu0 %1668
  %1670 = vrot.lane.b32.xlu0 %v1288, 96
  %v1671 = vpop.permute.xlu0 %1670
  %v1675 = vmul.f32 %v1660, %v1667
  %v1676 = vmul.f32 %v1661, %v1669
  %v1677 = vmul.f32 %v1662, %v1671
  %s1678 = scalar_lea.vmem %s12, 32
  %v1679 = vld [vmem:[%s1678] sm:$0xff]
  %v1680 = vld [vmem:[%s1678 + $0x8] sm:$0xff]
  %v1681 = vld [vmem:[%s1678 + $0x10] sm:$0xff]
  %v1682 = vld [vmem:[%s1678 + $0x18] sm:$0xff]
  %v1684 = vsel %vm351, %v1010, 0
  %1686 = vmatprep.subr.mxu0 0.0
  %1687 = vmatpush1.msra.mxu0 %v1679
  %1688 = vmatprep.subr.mxu0 0.0
  %1689 = vmatpush1.msra.mxu0 %v1680
  %1690 = vmatprep.subr.mxu0 0.0
  %1691 = vmatpush1.msra.mxu0 %v1681
  %1692 = vmatprep.subr.mxu0 0.0
  %1693 = vmatpush1.msra.mxu0 %v1682
  %1694 = vmatprep.subr.mxu0 0.0
  %1695 = vmatpush1.msra.mxu0 0.0
  %1696 = vmatprep.subr.mxu0 0.0
  %1697 = vmatpush1.msra.mxu0 0.0
  %1698 = vmatprep.subr.mxu0 0.0
  %1699 = vmatpush1.msra.mxu0 0.0
  %1700 = vmatprep.subr.mxu0 0.0
  %1701 = vmatpush1.msra.mxu0 0.0
  %1702 = vmatprep.subr.mxu0 0.0
  %1703 = vmatpush1.msra.mxu0 0.0
  %1704 = vmatprep.subr.mxu0 0.0
  %1705 = vmatpush1.msra.mxu0 0.0
  %1706 = vmatprep.subr.mxu0 0.0
  %1707 = vmatpush1.msra.mxu0 0.0
  %1708 = vmatprep.subr.mxu0 0.0
  %1709 = vmatpush1.msra.mxu0 0.0
  %1710 = vmatprep.subr.mxu0 0.0
  %1711 = vmatpush1.msra.mxu0 0.0
  %1712 = vmatprep.subr.mxu0 0.0
  %1713 = vmatpush1.msra.mxu0 0.0
  %1714 = vmatprep.subr.mxu0 0.0
  %1715 = vmatpush1.msra.mxu0 0.0
  %1716 = vmatprep.subr.mxu0 0.0
  %1717 = vmatpush1.msra.mxu0 0.0
  %1718 = vmatprep.subr.mxu0 0.0
  %1719 = vmatpush1.msra.mxu0 0.0
  %1720 = vmatprep.subr.mxu0 0.0
  %1721 = vmatpush1.msra.mxu0 0.0
  %1722 = vmatprep.subr.mxu0 0.0
  %1723 = vmatpush1.msra.mxu0 0.0
  %1724 = vmatprep.subr.mxu0 0.0
  %1725 = vmatpush1.msra.mxu0 0.0
  %1726 = vmatprep.subr.mxu0 0.0
  %1727 = vmatpush1.msra.mxu0 0.0
  %1728 = vmatprep.subr.mxu0 0.0
  %1729 = vmatpush1.msra.mxu0 0.0
  %1730 = vmatprep.subr.mxu0 0.0
  %1731 = vmatpush1.msra.mxu0 0.0
  %1732 = vmatprep.subr.mxu0 0.0
  %1733 = vmatpush1.msra.mxu0 0.0
  %1734 = vmatprep.subr.mxu0 0.0
  %1735 = vmatpush1.msra.mxu0 0.0
  %1736 = vmatprep.subr.mxu0 0.0
  %1737 = vmatpush1.msra.mxu0 0.0
  %1738 = vmatprep.subr.mxu0 0.0
  %1739 = vmatpush1.msra.mxu0 0.0
  %1740 = vmatprep.subr.mxu0 0.0
  %1741 = vmatpush1.msra.mxu0 0.0
  %1742 = vmatprep.subr.mxu0 0.0
  %1743 = vmatpush1.msra.mxu0 0.0
  %1744 = vmatprep.subr.mxu0 0.0
  %1745 = vmatpush1.msra.mxu0 0.0
  %1746 = vmatprep.subr.mxu0 0.0
  %1747 = vmatpush1.msra.mxu0 0.0
  %1748 = vmatprep.subr.mxu0 0.0
  %1749 = vmatpush1.msra.mxu0 0.0
  %1750 = vmatprep.mubr.f32.mxu0 0.0
  %1751 = vmatmul.mubr.f32.gmra.mrb[0].mxu0 %v1684
  %v1752 = vpop.f32.mrb[0].mxu0
  %v1753 = vadd.f32 0.0, %v1752
  %v1754 = vpop.f32.mrb[0].mxu0
  %1755 = vdwg.mxu0
  %1756 = vmatprep.subr.mxu0 0.0
  %1757 = vmatpush1.msra.mxu0 %v1675
  %1758 = vmatprep.subr.mxu0 0.0
  %1759 = vmatpush1.msra.mxu0 %v1676
  %1760 = vmatprep.subr.mxu0 0.0
  %1761 = vmatpush1.msra.mxu0 %v1677
  %1762 = vmatprep.subr.mxu0 0.0
  %1763 = vmatpush1.msra.mxu0 0.0
  %1764 = vmatprep.subr.mxu0 0.0
  %1765 = vmatpush1.msra.mxu0 0.0
  %1766 = vmatprep.subr.mxu0 0.0
  %1767 = vmatpush1.msra.mxu0 0.0
  %1768 = vmatprep.subr.mxu0 0.0
  %1769 = vmatpush1.msra.mxu0 0.0
  %1770 = vmatprep.subr.mxu0 0.0
  %1771 = vmatpush1.msra.mxu0 0.0
  %1772 = vmatprep.subr.mxu0 0.0
  %1773 = vmatpush1.msra.mxu0 0.0
  %1774 = vmatprep.subr.mxu0 0.0
  %1775 = vmatpush1.msra.mxu0 0.0
  %1776 = vmatprep.subr.mxu0 0.0
  %1777 = vmatpush1.msra.mxu0 0.0
  %1778 = vmatprep.subr.mxu0 0.0
  %1779 = vmatpush1.msra.mxu0 0.0
  %1780 = vmatprep.subr.mxu0 0.0
  %1781 = vmatpush1.msra.mxu0 0.0
  %1782 = vmatprep.subr.mxu0 0.0
  %1783 = vmatpush1.msra.mxu0 0.0
  %1784 = vmatprep.subr.mxu0 0.0
  %1785 = vmatpush1.msra.mxu0 0.0
  %1786 = vmatprep.subr.mxu0 0.0
  %1787 = vmatpush1.msra.mxu0 0.0
  %1788 = vmatprep.subr.mxu0 0.0
  %1789 = vmatpush1.msra.mxu0 0.0
  %1790 = vmatprep.subr.mxu0 0.0
  %1791 = vmatpush1.msra.mxu0 0.0
  %1792 = vmatprep.subr.mxu0 0.0
  %1793 = vmatpush1.msra.mxu0 0.0
  %1794 = vmatprep.subr.mxu0 0.0
  %1795 = vmatpush1.msra.mxu0 0.0
  %1796 = vmatprep.subr.mxu0 0.0
  %1797 = vmatpush1.msra.mxu0 0.0
  %1798 = vmatprep.subr.mxu0 0.0
  %1799 = vmatpush1.msra.mxu0 0.0
  %1800 = vmatprep.subr.mxu0 0.0
  %1801 = vmatpush1.msra.mxu0 0.0
  %1802 = vmatprep.subr.mxu0 0.0
  %1803 = vmatpush1.msra.mxu0 0.0
  %1804 = vmatprep.subr.mxu0 0.0
  %1805 = vmatpush1.msra.mxu0 0.0
  %1806 = vmatprep.subr.mxu0 0.0
  %1807 = vmatpush1.msra.mxu0 0.0
  %1808 = vmatprep.subr.mxu0 0.0
  %1809 = vmatpush1.msra.mxu0 0.0
  %1810 = vmatprep.subr.mxu0 0.0
  %1811 = vmatpush1.msra.mxu0 0.0
  %1812 = vmatprep.subr.mxu0 0.0
  %1813 = vmatpush1.msra.mxu0 0.0
  %1814 = vmatprep.subr.mxu0 0.0
  %1815 = vmatpush1.msra.mxu0 0.0
  %1816 = vmatprep.subr.mxu0 0.0
  %1817 = vmatpush1.msra.mxu0 0.0
  %1818 = vmatprep.subr.mxu0 0.0
  %1819 = vmatpush1.msra.mxu0 0.0
  %1820 = vmatprep.mubr.f32.mxu0 0.0
  %1821 = vmatmul.mubr.f32.gmra.mrb[0].mxu0 %v682
  %v1822 = vpop.f32.mrb[0].mxu0
  %v1823 = vadd.f32 %v1753, %v1822
  %v1824 = vpop.f32.mrb[0].mxu0
  %1825 = vdwg.mxu0
  %s1826 = scalar_lea.vmem %s13, 1
  %v1827 = vld [vmem:[%s1826] sm:$0x1]
  %v1829 = vlaneseq
  %v1830 = vshrl.u32 %v1829, 7
  %v1831 = vsub.s32 0, %v1830
  %v1832 = vrot.slane %v1827, %v1831
  %v1834 = vadd.f32 %v1823, %v1832
  %v1835 = vmax.f32 %v1834, 0.0
  %v1836 = vld [vmem:[%s7] sm:$0xff]
  %v1837 = vld [vmem:[%s7 + $0x8] sm:$0xff]
  %v1838 = vld [vmem:[%s7 + $0x10] sm:$0xff]
  %v1839 = vld [vmem:[%s7 + $0x18] sm:$0xff]
  %v1840 = vld [vmem:[%s7 + $0x20] sm:$0xff]
  %v1841 = vld [vmem:[%s7 + $0x28] sm:$0xff]
  %v1842 = vld [vmem:[%s7 + $0x30] sm:$0xff]
  %v1844 = vsel %vm160, %v1836, 0
  %v1847 = vsel %vm160, %v1837, 0
  %v1850 = vsel %vm160, %v1838, 0
  %v1853 = vsel %vm160, %v1839, 0
  %v1856 = vsel %vm160, %v1840, 0
  %v1859 = vsel %vm160, %v1841, 0
  %v1862 = vsel %vm160, %v1842, 0
  %1864 = vmatprep.subr.mxu0 0.0
  %1865 = vmatpush1.msra.mxu0 %v1835
  %1866 = vmatprep.subr.mxu0 0.0
  %1867 = vmatpush1.msra.mxu0 0.0
  %1868 = vmatprep.subr.mxu0 0.0
  %1869 = vmatpush1.msra.mxu0 0.0
  %1870 = vmatprep.subr.mxu0 0.0
  %1871 = vmatpush1.msra.mxu0 0.0
  %1872 = vmatprep.subr.mxu0 0.0
  %1873 = vmatpush1.msra.mxu0 0.0
  %1874 = vmatprep.subr.mxu0 0.0
  %1875 = vmatpush1.msra.mxu0 0.0
  %1876 = vmatprep.subr.mxu0 0.0
  %1877 = vmatpush1.msra.mxu0 0.0
  %1878 = vmatprep.subr.mxu0 0.0
  %1879 = vmatpush1.msra.mxu0 0.0
  %1880 = vmatprep.subr.mxu0 0.0
  %1881 = vmatpush1.msra.mxu0 0.0
  %1882 = vmatprep.subr.mxu0 0.0
  %1883 = vmatpush1.msra.mxu0 0.0
  %1884 = vmatprep.subr.mxu0 0.0
  %1885 = vmatpush1.msra.mxu0 0.0
  %1886 = vmatprep.subr.mxu0 0.0
  %1887 = vmatpush1.msra.mxu0 0.0
  %1888 = vmatprep.subr.mxu0 0.0
  %1889 = vmatpush1.msra.mxu0 0.0
  %1890 = vmatprep.subr.mxu0 0.0
  %1891 = vmatpush1.msra.mxu0 0.0
  %1892 = vmatprep.subr.mxu0 0.0
  %1893 = vmatpush1.msra.mxu0 0.0
  %1894 = vmatprep.subr.mxu0 0.0
  %1895 = vmatpush1.msra.mxu0 0.0
  %1896 = vmatprep.subr.mxu0 0.0
  %1897 = vmatpush1.msra.mxu0 0.0
  %1898 = vmatprep.subr.mxu0 0.0
  %1899 = vmatpush1.msra.mxu0 0.0
  %1900 = vmatprep.subr.mxu0 0.0
  %1901 = vmatpush1.msra.mxu0 0.0
  %1902 = vmatprep.subr.mxu0 0.0
  %1903 = vmatpush1.msra.mxu0 0.0
  %1904 = vmatprep.subr.mxu0 0.0
  %1905 = vmatpush1.msra.mxu0 0.0
  %1906 = vmatprep.subr.mxu0 0.0
  %1907 = vmatpush1.msra.mxu0 0.0
  %1908 = vmatprep.subr.mxu0 0.0
  %1909 = vmatpush1.msra.mxu0 0.0
  %1910 = vmatprep.subr.mxu0 0.0
  %1911 = vmatpush1.msra.mxu0 0.0
  %1912 = vmatprep.subr.mxu0 0.0
  %1913 = vmatpush1.msra.mxu0 0.0
  %1914 = vmatprep.subr.mxu0 0.0
  %1915 = vmatpush1.msra.mxu0 0.0
  %1916 = vmatprep.subr.mxu0 0.0
  %1917 = vmatpush1.msra.mxu0 0.0
  %1918 = vmatprep.subr.mxu0 0.0
  %1919 = vmatpush1.msra.mxu0 0.0
  %1920 = vmatprep.subr.mxu0 0.0
  %1921 = vmatpush1.msra.mxu0 0.0
  %1922 = vmatprep.subr.mxu0 0.0
  %1923 = vmatpush1.msra.mxu0 0.0
  %1924 = vmatprep.subr.mxu0 0.0
  %1925 = vmatpush1.msra.mxu0 0.0
  %1926 = vmatprep.subr.mxu0 0.0
  %1927 = vmatpush1.msra.mxu0 0.0
  %1928 = vmatprep.mubr.f32.mxu0 0.0
  %1929 = vmatmul.mubr.f32.gmra.mrb[0].mxu0 %v1844
  %v1930 = vpop.f32.mrb[0].mxu0
  %v1931 = vadd.f32 0.0, %v1930
  %v1932 = vpop.f32.mrb[0].mxu0
  %1933 = vmatprep.mubr.f32.mxu0 0.0
  %1934 = vmatmul.mubr.f32.gmra.mrb[0].mxu0 %v1847
  %v1935 = vpop.f32.mrb[0].mxu0
  %v1936 = vadd.f32 0.0, %v1935
  %v1937 = vpop.f32.mrb[0].mxu0
  %1938 = vmatprep.mubr.f32.mxu0 0.0
  %1939 = vmatmul.mubr.f32.gmra.mrb[0].mxu0 %v1850
  %v1940 = vpop.f32.mrb[0].mxu0
  %v1941 = vadd.f32 0.0, %v1940
  %v1942 = vpop.f32.mrb[0].mxu0
  %1943 = vmatprep.mubr.f32.mxu0 0.0
  %1944 = vmatmul.mubr.f32.gmra.mrb[0].mxu0 %v1853
  %v1945 = vpop.f32.mrb[0].mxu0
  %v1946 = vadd.f32 0.0, %v1945
  %v1947 = vpop.f32.mrb[0].mxu0
  %1948 = vmatprep.mubr.f32.mxu0 0.0
  %1949 = vmatmul.mubr.f32.gmra.mrb[0].mxu0 %v1856
  %v1950 = vpop.f32.mrb[0].mxu0
  %v1951 = vadd.f32 0.0, %v1950
  %v1952 = vpop.f32.mrb[0].mxu0
  %1953 = vmatprep.mubr.f32.mxu0 0.0
  %1954 = vmatmul.mubr.f32.gmra.mrb[0].mxu0 %v1859
  %v1955 = vpop.f32.mrb[0].mxu0
  %v1956 = vadd.f32 0.0, %v1955
  %v1957 = vpop.f32.mrb[0].mxu0
  %1958 = vmatprep.mubr.f32.mxu0 0.0
  %1959 = vmatmul.mubr.f32.gmra.mrb[0].mxu0 %v1862
  %v1960 = vpop.f32.mrb[0].mxu0
  %v1961 = vadd.f32 0.0, %v1960
  %v1962 = vpop.f32.mrb[0].mxu0
  %1963 = vdwg.mxu0
  %v1964 = vld [vmem:[%s5] sm:$0xff]
  %v1965 = vld [vmem:[%s5 + $0x8] sm:$0xff]
  %v1966 = vld [vmem:[%s5 + $0x10] sm:$0xff]
  %v1967 = vld [vmem:[%s5 + $0x18] sm:$0xff]
  %v1968 = vld [vmem:[%s5 + $0x20] sm:$0xff]
  %v1969 = vld [vmem:[%s5 + $0x28] sm:$0xff]
  %v1970 = vld [vmem:[%s5 + $0x30] sm:$0xff]
  %s1971 = scalar_lea.vmem %s5, 56
  %v1972 = vld [vmem:[%s1971] sm:$0xff]
  %v1973 = vld [vmem:[%s1971 + $0x8] sm:$0xff]
  %v1974 = vld [vmem:[%s1971 + $0x10] sm:$0xff]
  %v1975 = vld [vmem:[%s1971 + $0x18] sm:$0xff]
  %v1976 = vld [vmem:[%s1971 + $0x20] sm:$0xff]
  %v1977 = vld [vmem:[%s1971 + $0x28] sm:$0xff]
  %v1978 = vld [vmem:[%s1971 + $0x30] sm:$0xff]
  %v1979 = vld [vmem:[%s6] sm:$0xff]
  %v1980 = vld [vmem:[%s6 + $0x8] sm:$0xff]
  %vm1981 = vcmask 130048
  %v1983 = vsel %vm1981, %v1964, 0
  %v1986 = vsel %vm1981, %v1965, 0
  %v1989 = vsel %vm1981, %v1966, 0
  %v1992 = vsel %vm1981, %v1967, 0
  %v1995 = vsel %vm1981, %v1968, 0
  %v1998 = vsel %vm1981, %v1969, 0
  %v2001 = vsel %vm1981, %v1970, 0
  %2003 = vmatprep.subr.mxu0 0.0
  %2004 = vmatpush1.msra.mxu0 %v143
  %2005 = vmatprep.subr.mxu0 0.0
  %2006 = vmatpush1.msra.mxu0 %v148
  %2007 = vmatprep.subr.mxu0 0.0
  %2008 = vmatpush1.msra.mxu0 0.0
  %2009 = vmatprep.subr.mxu0 0.0
  %2010 = vmatpush1.msra.mxu0 0.0
  %2011 = vmatprep.subr.mxu0 0.0
  %2012 = vmatpush1.msra.mxu0 0.0
  %2013 = vmatprep.subr.mxu0 0.0
  %2014 = vmatpush1.msra.mxu0 0.0
  %2015 = vmatprep.subr.mxu0 0.0
  %2016 = vmatpush1.msra.mxu0 0.0
  %2017 = vmatprep.subr.mxu0 0.0
  %2018 = vmatpush1.msra.mxu0 0.0
  %2019 = vmatprep.subr.mxu0 0.0
  %2020 = vmatpush1.msra.mxu0 0.0
  %2021 = vmatprep.subr.mxu0 0.0
  %2022 = vmatpush1.msra.mxu0 0.0
  %2023 = vmatprep.subr.mxu0 0.0
  %2024 = vmatpush1.msra.mxu0 0.0
  %2025 = vmatprep.subr.mxu0 0.0
  %2026 = vmatpush1.msra.mxu0 0.0
  %2027 = vmatprep.subr.mxu0 0.0
  %2028 = vmatpush1.msra.mxu0 0.0
  %2029 = vmatprep.subr.mxu0 0.0
  %2030 = vmatpush1.msra.mxu0 0.0
  %2031 = vmatprep.subr.mxu0 0.0
  %2032 = vmatpush1.msra.mxu0 0.0
  %2033 = vmatprep.subr.mxu0 0.0
  %2034 = vmatpush1.msra.mxu0 0.0
  %2035 = vmatprep.subr.mxu0 0.0
  %2036 = vmatpush1.msra.mxu0 0.0
  %2037 = vmatprep.subr.mxu0 0.0
  %2038 = vmatpush1.msra.mxu0 0.0
  %2039 = vmatprep.subr.mxu0 0.0
  %2040 = vmatpush1.msra.mxu0 0.0
  %2041 = vmatprep.subr.mxu0 0.0
  %2042 = vmatpush1.msra.mxu0 0.0
  %2043 = vmatprep.subr.mxu0 0.0
  %2044 = vmatpush1.msra.mxu0 0.0
  %2045 = vmatprep.subr.mxu0 0.0
  %2046 = vmatpush1.msra.mxu0 0.0
  %2047 = vmatprep.subr.mxu0 0.0
  %2048 = vmatpush1.msra.mxu0 0.0
  %2049 = vmatprep.subr.mxu0 0.0
  %2050 = vmatpush1.msra.mxu0 0.0
  %2051 = vmatprep.subr.mxu0 0.0
  %2052 = vmatpush1.msra.mxu0 0.0
  %2053 = vmatprep.subr.mxu0 0.0
  %2054 = vmatpush1.msra.mxu0 0.0
  %2055 = vmatprep.subr.mxu0 0.0
  %2056 = vmatpush1.msra.mxu0 0.0
  %2057 = vmatprep.subr.mxu0 0.0
  %2058 = vmatpush1.msra.mxu0 0.0
  %2059 = vmatprep.subr.mxu0 0.0
  %2060 = vmatpush1.msra.mxu0 0.0
  %2061 = vmatprep.subr.mxu0 0.0
  %2062 = vmatpush1.msra.mxu0 0.0
  %2063 = vmatprep.subr.mxu0 0.0
  %2064 = vmatpush1.msra.mxu0 0.0
  %2065 = vmatprep.subr.mxu0 0.0
  %2066 = vmatpush1.msra.mxu0 0.0
  %2067 = vmatprep.mubr.f32.mxu0 0.0
  %2068 = vmatmul.mubr.f32.gmra.mrb[0].mxu0 %v1983
  %v2069 = vpop.f32.mrb[0].mxu0
  %v2070 = vadd.f32 0.0, %v2069
  %v2071 = vpop.f32.mrb[0].mxu0
  %2072 = vmatprep.mubr.f32.mxu0 0.0
  %2073 = vmatmul.mubr.f32.gmra.mrb[0].mxu0 %v1986
  %v2074 = vpop.f32.mrb[0].mxu0
  %v2075 = vadd.f32 0.0, %v2074
  %v2076 = vpop.f32.mrb[0].mxu0
  %2077 = vmatprep.mubr.f32.mxu0 0.0
  %2078 = vmatmul.mubr.f32.gmra.mrb[0].mxu0 %v1989
  %v2079 = vpop.f32.mrb[0].mxu0
  %v2080 = vadd.f32 0.0, %v2079
  %v2081 = vpop.f32.mrb[0].mxu0
  %2082 = vmatprep.mubr.f32.mxu0 0.0
  %2083 = vmatmul.mubr.f32.gmra.mrb[0].mxu0 %v1992
  %v2084 = vpop.f32.mrb[0].mxu0
  %v2085 = vadd.f32 0.0, %v2084
  %v2086 = vpop.f32.mrb[0].mxu0
  %2087 = vmatprep.mubr.f32.mxu0 0.0
  %2088 = vmatmul.mubr.f32.gmra.mrb[0].mxu0 %v1995
  %v2089 = vpop.f32.mrb[0].mxu0
  %v2090 = vadd.f32 0.0, %v2089
  %v2091 = vpop.f32.mrb[0].mxu0
  %2092 = vmatprep.mubr.f32.mxu0 0.0
  %2093 = vmatmul.mubr.f32.gmra.mrb[0].mxu0 %v1998
  %v2094 = vpop.f32.mrb[0].mxu0
  %v2095 = vadd.f32 0.0, %v2094
  %v2096 = vpop.f32.mrb[0].mxu0
  %2097 = vmatprep.mubr.f32.mxu0 0.0
  %2098 = vmatmul.mubr.f32.gmra.mrb[0].mxu0 %v2001
  %v2099 = vpop.f32.mrb[0].mxu0
  %v2100 = vadd.f32 0.0, %v2099
  %v2101 = vpop.f32.mrb[0].mxu0
  %2102 = vdwg.mxu0
  %v2104 = vsel %vm1981, %v1972, 0
  %v2107 = vsel %vm1981, %v1973, 0
  %v2110 = vsel %vm1981, %v1974, 0
  %v2113 = vsel %vm1981, %v1975, 0
  %v2116 = vsel %vm1981, %v1976, 0
  %v2119 = vsel %vm1981, %v1977, 0
  %v2122 = vsel %vm1981, %v1978, 0
  %2124 = vmatprep.subr.mxu0 0.0
  %2125 = vmatpush1.msra.mxu0 %v143
  %2126 = vmatprep.subr.mxu0 0.0
  %2127 = vmatpush1.msra.mxu0 %v148
  %2128 = vmatprep.subr.mxu0 0.0
  %2129 = vmatpush1.msra.mxu0 0.0
  %2130 = vmatprep.subr.mxu0 0.0
  %2131 = vmatpush1.msra.mxu0 0.0
  %2132 = vmatprep.subr.mxu0 0.0
  %2133 = vmatpush1.msra.mxu0 0.0
  %2134 = vmatprep.subr.mxu0 0.0
  %2135 = vmatpush1.msra.mxu0 0.0
  %2136 = vmatprep.subr.mxu0 0.0
  %2137 = vmatpush1.msra.mxu0 0.0
  %2138 = vmatprep.subr.mxu0 0.0
  %2139 = vmatpush1.msra.mxu0 0.0
  %2140 = vmatprep.subr.mxu0 0.0
  %2141 = vmatpush1.msra.mxu0 0.0
  %2142 = vmatprep.subr.mxu0 0.0
  %2143 = vmatpush1.msra.mxu0 0.0
  %2144 = vmatprep.subr.mxu0 0.0
  %2145 = vmatpush1.msra.mxu0 0.0
  %2146 = vmatprep.subr.mxu0 0.0
  %2147 = vmatpush1.msra.mxu0 0.0
  %2148 = vmatprep.subr.mxu0 0.0
  %2149 = vmatpush1.msra.mxu0 0.0
  %2150 = vmatprep.subr.mxu0 0.0
  %2151 = vmatpush1.msra.mxu0 0.0
  %2152 = vmatprep.subr.mxu0 0.0
  %2153 = vmatpush1.msra.mxu0 0.0
  %2154 = vmatprep.subr.mxu0 0.0
  %2155 = vmatpush1.msra.mxu0 0.0
  %2156 = vmatprep.subr.mxu0 0.0
  %2157 = vmatpush1.msra.mxu0 0.0
  %2158 = vmatprep.subr.mxu0 0.0
  %2159 = vmatpush1.msra.mxu0 0.0
  %2160 = vmatprep.subr.mxu0 0.0
  %2161 = vmatpush1.msra.mxu0 0.0
  %2162 = vmatprep.subr.mxu0 0.0
  %2163 = vmatpush1.msra.mxu0 0.0
  %2164 = vmatprep.subr.mxu0 0.0
  %2165 = vmatpush1.msra.mxu0 0.0
  %2166 = vmatprep.subr.mxu0 0.0
  %2167 = vmatpush1.msra.mxu0 0.0
  %2168 = vmatprep.subr.mxu0 0.0
  %2169 = vmatpush1.msra.mxu0 0.0
  %2170 = vmatprep.subr.mxu0 0.0
  %2171 = vmatpush1.msra.mxu0 0.0
  %2172 = vmatprep.subr.mxu0 0.0
  %2173 = vmatpush1.msra.mxu0 0.0
  %2174 = vmatprep.subr.mxu0 0.0
  %2175 = vmatpush1.msra.mxu0 0.0
  %2176 = vmatprep.subr.mxu0 0.0
  %2177 = vmatpush1.msra.mxu0 0.0
  %2178 = vmatprep.subr.mxu0 0.0
  %2179 = vmatpush1.msra.mxu0 0.0
  %2180 = vmatprep.subr.mxu0 0.0
  %2181 = vmatpush1.msra.mxu0 0.0
  %2182 = vmatprep.subr.mxu0 0.0
  %2183 = vmatpush1.msra.mxu0 0.0
  %2184 = vmatprep.subr.mxu0 0.0
  %2185 = vmatpush1.msra.mxu0 0.0
  %2186 = vmatprep.subr.mxu0 0.0
  %2187 = vmatpush1.msra.mxu0 0.0
  %2188 = vmatprep.mubr.f32.mxu0 0.0
  %2189 = vmatmul.mubr.f32.gmra.mrb[0].mxu0 %v2104
  %v2190 = vpop.f32.mrb[0].mxu0
  %v2191 = vadd.f32 0.0, %v2190
  %v2192 = vpop.f32.mrb[0].mxu0
  %2193 = vmatprep.mubr.f32.mxu0 0.0
  %2194 = vmatmul.mubr.f32.gmra.mrb[0].mxu0 %v2107
  %v2195 = vpop.f32.mrb[0].mxu0
  %v2196 = vadd.f32 0.0, %v2195
  %v2197 = vpop.f32.mrb[0].mxu0
  %2198 = vmatprep.mubr.f32.mxu0 0.0
  %2199 = vmatmul.mubr.f32.gmra.mrb[0].mxu0 %v2110
  %v2200 = vpop.f32.mrb[0].mxu0
  %v2201 = vadd.f32 0.0, %v2200
  %v2202 = vpop.f32.mrb[0].mxu0
  %2203 = vmatprep.mubr.f32.mxu0 0.0
  %2204 = vmatmul.mubr.f32.gmra.mrb[0].mxu0 %v2113
  %v2205 = vpop.f32.mrb[0].mxu0
  %v2206 = vadd.f32 0.0, %v2205
  %v2207 = vpop.f32.mrb[0].mxu0
  %2208 = vmatprep.mubr.f32.mxu0 0.0
  %2209 = vmatmul.mubr.f32.gmra.mrb[0].mxu0 %v2116
  %v2210 = vpop.f32.mrb[0].mxu0
  %v2211 = vadd.f32 0.0, %v2210
  %v2212 = vpop.f32.mrb[0].mxu0
  %2213 = vmatprep.mubr.f32.mxu0 0.0
  %2214 = vmatmul.mubr.f32.gmra.mrb[0].mxu0 %v2119
  %v2215 = vpop.f32.mrb[0].mxu0
  %v2216 = vadd.f32 0.0, %v2215
  %v2217 = vpop.f32.mrb[0].mxu0
  %2218 = vmatprep.mubr.f32.mxu0 0.0
  %2219 = vmatmul.mubr.f32.gmra.mrb[0].mxu0 %v2122
  %v2220 = vpop.f32.mrb[0].mxu0
  %v2221 = vadd.f32 0.0, %v2220
  %v2222 = vpop.f32.mrb[0].mxu0
  %2223 = vdwg.mxu0
  %2231 = vrot.lane.b32.xlu0 %v2191, 32
  %v2232 = vpop.permute.xlu0 %2231
  %2233 = vrot.lane.b32.xlu0 %v2196, 32
  %v2234 = vpop.permute.xlu0 %2233
  %2235 = vrot.lane.b32.xlu0 %v2201, 32
  %v2236 = vpop.permute.xlu0 %2235
  %2237 = vrot.lane.b32.xlu0 %v2206, 32
  %v2238 = vpop.permute.xlu0 %2237
  %2239 = vrot.lane.b32.xlu0 %v2211, 32
  %v2240 = vpop.permute.xlu0 %2239
  %2241 = vrot.lane.b32.xlu0 %v2216, 32
  %v2242 = vpop.permute.xlu0 %2241
  %2243 = vrot.lane.b32.xlu0 %v2221, 32
  %v2244 = vpop.permute.xlu0 %2243
  %2259 = vrot.lane.b32.xlu0 %v1931, 64
  %v2260 = vpop.permute.xlu0 %2259
  %2261 = vrot.lane.b32.xlu0 %v1936, 64
  %v2262 = vpop.permute.xlu0 %2261
  %2263 = vrot.lane.b32.xlu0 %v1941, 64
  %v2264 = vpop.permute.xlu0 %2263
  %2265 = vrot.lane.b32.xlu0 %v1946, 64
  %v2266 = vpop.permute.xlu0 %2265
  %2267 = vrot.lane.b32.xlu0 %v1951, 64
  %v2268 = vpop.permute.xlu0 %2267
  %2269 = vrot.lane.b32.xlu0 %v1956, 64
  %v2270 = vpop.permute.xlu0 %2269
  %2271 = vrot.lane.b32.xlu0 %v1961, 64
  %v2272 = vpop.permute.xlu0 %2271
  %v2280 = vsel %vm351, %v2070, %v2232
  %v2281 = vsel %vm351, %v2075, %v2234
  %v2282 = vsel %vm351, %v2080, %v2236
  %v2283 = vsel %vm351, %v2085, %v2238
  %v2284 = vsel %vm351, %v2090, %v2240
  %v2285 = vsel %vm351, %v2095, %v2242
  %v2286 = vsel %vm351, %v2100, %v2244
  %v2287 = vsel %vm355, %v2280, %v2260
  %v2288 = vsel %vm355, %v2281, %v2262
  %v2289 = vsel %vm355, %v2282, %v2264
  %v2290 = vsel %vm355, %v2283, %v2266
  %v2291 = vsel %vm355, %v2284, %v2268
  %v2292 = vsel %vm355, %v2285, %v2270
  %v2293 = vsel %vm355, %v2286, %v2272
  %vm2294 = vcmask 785408
  %v2295 = vsel %vm2294, %v2287, 1.0
  %v2296 = vsel %vm2294, %v2288, 1.0
  %v2297 = vsel %vm2294, %v2289, 1.0
  %v2298 = vsel %vm2294, %v2290, 1.0
  %v2299 = vsel %vm2294, %v2291, 1.0
  %v2300 = vsel %vm2294, %v2292, 1.0
  %v2301 = vsel %vm2294, %v2293, 1.0
  %v2302 = vld [vmem:[%s14] sm:$0xff]
  %v2303 = vld [vmem:[%s14 + $0x8] sm:$0xff]
  %v2304 = vld [vmem:[%s14 + $0x10] sm:$0xff]
  %v2305 = vld [vmem:[%s14 + $0x18] sm:$0xff]
  %v2306 = vld [vmem:[%s14 + $0x20] sm:$0xff]
  %v2307 = vld [vmem:[%s14 + $0x28] sm:$0xff]
  %v2308 = vld [vmem:[%s14 + $0x30] sm:$0xff]
  %v2309 = vld [vmem:[%s14 + $0x38] sm:$0xff]
  %v2310 = vld [vmem:[%s14 + $0x40] sm:$0xff]
  %v2311 = vld [vmem:[%s14 + $0x48] sm:$0xff]
  %v2312 = vld [vmem:[%s14 + $0x50] sm:$0xff]
  %v2313 = vld [vmem:[%s14 + $0x58] sm:$0xff]
  %v2314 = vld [vmem:[%s14 + $0x60] sm:$0x1]
  %vm2315 = vcmask 793600
  %v2317 = vsel %vm2315, %v2295, 0
  %v2320 = vsel %vm2315, %v2296, 0
  %v2323 = vsel %vm2315, %v2297, 0
  %v2326 = vsel %vm2315, %v2298, 0
  %v2329 = vsel %vm2315, %v2299, 0
  %v2332 = vsel %vm2315, %v2300, 0
  %v2335 = vsel %vm2315, %v2301, 0
  %v2338 = vsel %vm72, %v2314, 0
  %2340 = vmatprep.subr.mxu0 0.0
  %2341 = vmatpush1.msra.mxu0 %v2302
  %2342 = vmatprep.subr.mxu0 0.0
  %2343 = vmatpush1.msra.mxu0 %v2303
  %2344 = vmatprep.subr.mxu0 0.0
  %2345 = vmatpush1.msra.mxu0 %v2304
  %2346 = vmatprep.subr.mxu0 0.0
  %2347 = vmatpush1.msra.mxu0 %v2305
  %2348 = vmatprep.subr.mxu0 0.0
  %2349 = vmatpush1.msra.mxu0 %v2306
  %2350 = vmatprep.subr.mxu0 0.0
  %2351 = vmatpush1.msra.mxu0 %v2307
  %2352 = vmatprep.subr.mxu0 0.0
  %2353 = vmatpush1.msra.mxu0 %v2308
  %2354 = vmatprep.subr.mxu0 0.0
  %2355 = vmatpush1.msra.mxu0 %v2309
  %2356 = vmatprep.subr.mxu0 0.0
  %2357 = vmatpush1.msra.mxu0 %v2310
  %2358 = vmatprep.subr.mxu0 0.0
  %2359 = vmatpush1.msra.mxu0 %v2311
  %2360 = vmatprep.subr.mxu0 0.0
  %2361 = vmatpush1.msra.mxu0 %v2312
  %2362 = vmatprep.subr.mxu0 0.0
  %2363 = vmatpush1.msra.mxu0 %v2313
  %2364 = vmatprep.subr.mxu0 0.0
  %2365 = vmatpush1.msra.mxu0 %v2338
  %2366 = vmatprep.subr.mxu0 0.0
  %2367 = vmatpush1.msra.mxu0 0.0
  %2368 = vmatprep.subr.mxu0 0.0
  %2369 = vmatpush1.msra.mxu0 0.0
  %2370 = vmatprep.subr.mxu0 0.0
  %2371 = vmatpush1.msra.mxu0 0.0
  %2372 = vmatprep.subr.mxu0 0.0
  %2373 = vmatpush1.msra.mxu0 0.0
  %2374 = vmatprep.subr.mxu0 0.0
  %2375 = vmatpush1.msra.mxu0 0.0
  %2376 = vmatprep.subr.mxu0 0.0
  %2377 = vmatpush1.msra.mxu0 0.0
  %2378 = vmatprep.subr.mxu0 0.0
  %2379 = vmatpush1.msra.mxu0 0.0
  %2380 = vmatprep.subr.mxu0 0.0
  %2381 = vmatpush1.msra.mxu0 0.0
  %2382 = vmatprep.subr.mxu0 0.0
  %2383 = vmatpush1.msra.mxu0 0.0
  %2384 = vmatprep.subr.mxu0 0.0
  %2385 = vmatpush1.msra.mxu0 0.0
  %2386 = vmatprep.subr.mxu0 0.0
  %2387 = vmatpush1.msra.mxu0 0.0
  %2388 = vmatprep.subr.mxu0 0.0
  %2389 = vmatpush1.msra.mxu0 0.0
  %2390 = vmatprep.subr.mxu0 0.0
  %2391 = vmatpush1.msra.mxu0 0.0
  %2392 = vmatprep.subr.mxu0 0.0
  %2393 = vmatpush1.msra.mxu0 0.0
  %2394 = vmatprep.subr.mxu0 0.0
  %2395 = vmatpush1.msra.mxu0 0.0
  %2396 = vmatprep.subr.mxu0 0.0
  %2397 = vmatpush1.msra.mxu0 0.0
  %2398 = vmatprep.subr.mxu0 0.0
  %2399 = vmatpush1.msra.mxu0 0.0
  %2400 = vmatprep.subr.mxu0 0.0
  %2401 = vmatpush1.msra.mxu0 0.0
  %2402 = vmatprep.subr.mxu0 0.0
  %2403 = vmatpush1.msra.mxu0 0.0
  %2404 = vmatprep.mubr.f32.mxu0 0.0
  %2405 = vmatmul.mubr.f32.gmra.mrb[0].mxu0 %v2317
  %v2406 = vpop.f32.mrb[0].mxu0
  %v2407 = vadd.f32 0.0, %v2406
  %v2408 = vpop.f32.mrb[0].mxu0
  %2409 = vmatprep.mubr.f32.mxu0 0.0
  %2410 = vmatmul.mubr.f32.gmra.mrb[0].mxu0 %v2320
  %v2411 = vpop.f32.mrb[0].mxu0
  %v2412 = vadd.f32 0.0, %v2411
  %v2413 = vpop.f32.mrb[0].mxu0
  %2414 = vmatprep.mubr.f32.mxu0 0.0
  %2415 = vmatmul.mubr.f32.gmra.mrb[0].mxu0 %v2323
  %v2416 = vpop.f32.mrb[0].mxu0
  %v2417 = vadd.f32 0.0, %v2416
  %v2418 = vpop.f32.mrb[0].mxu0
  %2419 = vmatprep.mubr.f32.mxu0 0.0
  %2420 = vmatmul.mubr.f32.gmra.mrb[0].mxu0 %v2326
  %v2421 = vpop.f32.mrb[0].mxu0
  %v2422 = vadd.f32 0.0, %v2421
  %v2423 = vpop.f32.mrb[0].mxu0
  %2424 = vmatprep.mubr.f32.mxu0 0.0
  %2425 = vmatmul.mubr.f32.gmra.mrb[0].mxu0 %v2329
  %v2426 = vpop.f32.mrb[0].mxu0
  %v2427 = vadd.f32 0.0, %v2426
  %v2428 = vpop.f32.mrb[0].mxu0
  %2429 = vmatprep.mubr.f32.mxu0 0.0
  %2430 = vmatmul.mubr.f32.gmra.mrb[0].mxu0 %v2332
  %v2431 = vpop.f32.mrb[0].mxu0
  %v2432 = vadd.f32 0.0, %v2431
  %v2433 = vpop.f32.mrb[0].mxu0
  %2434 = vmatprep.mubr.f32.mxu0 0.0
  %2435 = vmatmul.mubr.f32.gmra.mrb[0].mxu0 %v2335
  %v2436 = vpop.f32.mrb[0].mxu0
  %v2437 = vadd.f32 0.0, %v2436
  %v2438 = vpop.f32.mrb[0].mxu0
  %2439 = vdwg.mxu0
  %vm2440 = vcmp.gt.f32.partialorder %v2407, 0.0
  %vm2441 = vcmp.gt.f32.partialorder %v2412, 0.0
  %vm2442 = vcmp.gt.f32.partialorder %v2417, 0.0
  %vm2443 = vcmp.gt.f32.partialorder %v2422, 0.0
  %vm2444 = vcmp.gt.f32.partialorder %v2427, 0.0
  %vm2445 = vcmp.gt.f32.partialorder %v2432, 0.0
  %vm2446 = vcmp.gt.f32.partialorder %v2437, 0.0
  %v2447 = vmul.f32 %v2407, 0.2
  %v2448 = vmul.f32 %v2412, 0.2
  %v2449 = vmul.f32 %v2417, 0.2
  %v2450 = vmul.f32 %v2422, 0.2
  %v2451 = vmul.f32 %v2427, 0.2
  %v2452 = vmul.f32 %v2432, 0.2
  %v2453 = vmul.f32 %v2437, 0.2
  %v2454 = vsel %vm2440, %v2407, %v2447
  %v2455 = vsel %vm2441, %v2412, %v2448
  %v2456 = vsel %vm2442, %v2417, %v2449
  %v2457 = vsel %vm2443, %v2422, %v2450
  %v2458 = vsel %vm2444, %v2427, %v2451
  %v2459 = vsel %vm2445, %v2432, %v2452
  %v2460 = vsel %vm2446, %v2437, %v2453
  %v2461 = vld [vmem:[%s15] sm:$0xff]
  %v2462 = vld [vmem:[%s15 + $0x8] sm:$0xff]
  %v2463 = vld [vmem:[%s15 + $0x10] sm:$0xff]
  %v2464 = vld [vmem:[%s15 + $0x18] sm:$0xff]
  %v2466 = vsel %vm351, %v2454, 0
  %v2469 = vsel %vm351, %v2455, 0
  %v2472 = vsel %vm351, %v2456, 0
  %v2475 = vsel %vm351, %v2457, 0
  %v2478 = vsel %vm351, %v2458, 0
  %v2481 = vsel %vm351, %v2459, 0
  %v2484 = vsel %vm351, %v2460, 0
  %2486 = vmatprep.subr.mxu0 0.0
  %2487 = vmatpush1.msra.mxu0 %v2461
  %2488 = vmatprep.subr.mxu0 0.0
  %2489 = vmatpush1.msra.mxu0 %v2462
  %2490 = vmatprep.subr.mxu0 0.0
  %2491 = vmatpush1.msra.mxu0 %v2463
  %2492 = vmatprep.subr.mxu0 0.0
  %2493 = vmatpush1.msra.mxu0 %v2464
  %2494 = vmatprep.subr.mxu0 0.0
  %2495 = vmatpush1.msra.mxu0 0.0
  %2496 = vmatprep.subr.mxu0 0.0
  %2497 = vmatpush1.msra.mxu0 0.0
  %2498 = vmatprep.subr.mxu0 0.0
  %2499 = vmatpush1.msra.mxu0 0.0
  %2500 = vmatprep.subr.mxu0 0.0
  %2501 = vmatpush1.msra.mxu0 0.0
  %2502 = vmatprep.subr.mxu0 0.0
  %2503 = vmatpush1.msra.mxu0 0.0
  %2504 = vmatprep.subr.mxu0 0.0
  %2505 = vmatpush1.msra.mxu0 0.0
  %2506 = vmatprep.subr.mxu0 0.0
  %2507 = vmatpush1.msra.mxu0 0.0
  %2508 = vmatprep.subr.mxu0 0.0
  %2509 = vmatpush1.msra.mxu0 0.0
  %2510 = vmatprep.subr.mxu0 0.0
  %2511 = vmatpush1.msra.mxu0 0.0
  %2512 = vmatprep.subr.mxu0 0.0
  %2513 = vmatpush1.msra.mxu0 0.0
  %2514 = vmatprep.subr.mxu0 0.0
  %2515 = vmatpush1.msra.mxu0 0.0
  %2516 = vmatprep.subr.mxu0 0.0
  %2517 = vmatpush1.msra.mxu0 0.0
  %2518 = vmatprep.subr.mxu0 0.0
  %2519 = vmatpush1.msra.mxu0 0.0
  %2520 = vmatprep.subr.mxu0 0.0
  %2521 = vmatpush1.msra.mxu0 0.0
  %2522 = vmatprep.subr.mxu0 0.0
  %2523 = vmatpush1.msra.mxu0 0.0
  %2524 = vmatprep.subr.mxu0 0.0
  %2525 = vmatpush1.msra.mxu0 0.0
  %2526 = vmatprep.subr.mxu0 0.0
  %2527 = vmatpush1.msra.mxu0 0.0
  %2528 = vmatprep.subr.mxu0 0.0
  %2529 = vmatpush1.msra.mxu0 0.0
  %2530 = vmatprep.subr.mxu0 0.0
  %2531 = vmatpush1.msra.mxu0 0.0
  %2532 = vmatprep.subr.mxu0 0.0
  %2533 = vmatpush1.msra.mxu0 0.0
  %2534 = vmatprep.subr.mxu0 0.0
  %2535 = vmatpush1.msra.mxu0 0.0
  %2536 = vmatprep.subr.mxu0 0.0
  %2537 = vmatpush1.msra.mxu0 0.0
  %2538 = vmatprep.subr.mxu0 0.0
  %2539 = vmatpush1.msra.mxu0 0.0
  %2540 = vmatprep.subr.mxu0 0.0
  %2541 = vmatpush1.msra.mxu0 0.0
  %2542 = vmatprep.subr.mxu0 0.0
  %2543 = vmatpush1.msra.mxu0 0.0
  %2544 = vmatprep.subr.mxu0 0.0
  %2545 = vmatpush1.msra.mxu0 0.0
  %2546 = vmatprep.subr.mxu0 0.0
  %2547 = vmatpush1.msra.mxu0 0.0
  %2548 = vmatprep.subr.mxu0 0.0
  %2549 = vmatpush1.msra.mxu0 0.0
  %2550 = vmatprep.mubr.f32.mxu0 0.0
  %2551 = vmatmul.mubr.f32.gmra.mrb[0].mxu0 %v2466
  %v2552 = vpop.f32.mrb[0].mxu0
  %v2553 = vadd.f32 0.0, %v2552
  %v2554 = vpop.f32.mrb[0].mxu0
  %2555 = vmatprep.mubr.f32.mxu0 0.0
  %2556 = vmatmul.mubr.f32.gmra.mrb[0].mxu0 %v2469
  %v2557 = vpop.f32.mrb[0].mxu0
  %v2558 = vadd.f32 0.0, %v2557
  %v2559 = vpop.f32.mrb[0].mxu0
  %2560 = vmatprep.mubr.f32.mxu0 0.0
  %2561 = vmatmul.mubr.f32.gmra.mrb[0].mxu0 %v2472
  %v2562 = vpop.f32.mrb[0].mxu0
  %v2563 = vadd.f32 0.0, %v2562
  %v2564 = vpop.f32.mrb[0].mxu0
  %2565 = vmatprep.mubr.f32.mxu0 0.0
  %2566 = vmatmul.mubr.f32.gmra.mrb[0].mxu0 %v2475
  %v2567 = vpop.f32.mrb[0].mxu0
  %v2568 = vadd.f32 0.0, %v2567
  %v2569 = vpop.f32.mrb[0].mxu0
  %2570 = vmatprep.mubr.f32.mxu0 0.0
  %2571 = vmatmul.mubr.f32.gmra.mrb[0].mxu0 %v2478
  %v2572 = vpop.f32.mrb[0].mxu0
  %v2573 = vadd.f32 0.0, %v2572
  %v2574 = vpop.f32.mrb[0].mxu0
  %2575 = vmatprep.mubr.f32.mxu0 0.0
  %2576 = vmatmul.mubr.f32.gmra.mrb[0].mxu0 %v2481
  %v2577 = vpop.f32.mrb[0].mxu0
  %v2578 = vadd.f32 0.0, %v2577
  %v2579 = vpop.f32.mrb[0].mxu0
  %2580 = vmatprep.mubr.f32.mxu0 0.0
  %2581 = vmatmul.mubr.f32.gmra.mrb[0].mxu0 %v2484
  %v2582 = vpop.f32.mrb[0].mxu0
  %v2583 = vadd.f32 0.0, %v2582
  %v2584 = vpop.f32.mrb[0].mxu0
  %2585 = vdwg.mxu0
  %v2586 = vsel %vm566, %v2553, -inf
  %v2587 = vsel %vm566, %v2558, -inf
  %v2588 = vsel %vm566, %v2563, -inf
  %v2589 = vsel %vm566, %v2568, -inf
  %v2590 = vsel %vm566, %v2573, -inf
  %v2591 = vmax.f32 %v2586, %v2590
  %v2592 = vsel %vm566, %v2578, -inf
  %v2593 = vmax.f32 %v2587, %v2592
  %v2594 = vsel %vm566, %v2583, -inf
  %v2595 = vmax.f32 %v2588, %v2594
  %v2596 = vmax.f32 %v2591, %v2593
  %v2597 = vmax.f32 %v2595, %v2589
  %v2598 = vmax.f32 %v2596, %v2597
  %v2599 = vrot.slane %v2598, 4
  %v2600 = vmax.f32 %v2598, %v2599
  %v2601 = vrot.slane %v2600, 2
  %v2602 = vmax.f32 %v2600, %v2601
  %v2603 = vrot.slane %v2602, 1
  %v2604 = vmax.f32 %v2602, %v2603
  %v2605 = vsub.f32 %v2553, %v2604
  %v2606 = vsub.f32 %v2558, %v2604
  %v2607 = vsub.f32 %v2563, %v2604
  %v2608 = vsub.f32 %v2568, %v2604
  %v2609 = vsub.f32 %v2573, %v2604
  %v2610 = vsub.f32 %v2578, %v2604
  %v2611 = vsub.f32 %v2583, %v2604
  %v2613 = vsel %vm566, %v2605, 0
  %v2616 = vsel %vm566, %v2606, 0
  %v2619 = vsel %vm566, %v2607, 0
  %v2622 = vsel %vm566, %v2608, 0
  %v2625 = vsel %vm566, %v2609, 0
  %v2628 = vsel %vm566, %v2610, 0
  %v2631 = vsel %vm566, %v2611, 0
  %2633 = vmatprep.subr.mxu0 0.0
  %2634 = vmatpush1.msra.mxu0 %v592
  %2635 = vmatprep.subr.mxu0 0.0
  %2636 = vmatpush1.msra.mxu0 0.0
  %2637 = vmatprep.subr.mxu0 0.0
  %2638 = vmatpush1.msra.mxu0 0.0
  %2639 = vmatprep.subr.mxu0 0.0
  %2640 = vmatpush1.msra.mxu0 0.0
  %2641 = vmatprep.subr.mxu0 0.0
  %2642 = vmatpush1.msra.mxu0 0.0
  %2643 = vmatprep.subr.mxu0 0.0
  %2644 = vmatpush1.msra.mxu0 0.0
  %2645 = vmatprep.subr.mxu0 0.0
  %2646 = vmatpush1.msra.mxu0 0.0
  %2647 = vmatprep.subr.mxu0 0.0
  %2648 = vmatpush1.msra.mxu0 0.0
  %2649 = vmatprep.subr.mxu0 0.0
  %2650 = vmatpush1.msra.mxu0 0.0
  %2651 = vmatprep.subr.mxu0 0.0
  %2652 = vmatpush1.msra.mxu0 0.0
  %2653 = vmatprep.subr.mxu0 0.0
  %2654 = vmatpush1.msra.mxu0 0.0
  %2655 = vmatprep.subr.mxu0 0.0
  %2656 = vmatpush1.msra.mxu0 0.0
  %2657 = vmatprep.subr.mxu0 0.0
  %2658 = vmatpush1.msra.mxu0 0.0
  %2659 = vmatprep.subr.mxu0 0.0
  %2660 = vmatpush1.msra.mxu0 0.0
  %2661 = vmatprep.subr.mxu0 0.0
  %2662 = vmatpush1.msra.mxu0 0.0
  %2663 = vmatprep.subr.mxu0 0.0
  %2664 = vmatpush1.msra.mxu0 0.0
  %2665 = vmatprep.subr.mxu0 0.0
  %2666 = vmatpush1.msra.mxu0 0.0
  %2667 = vmatprep.subr.mxu0 0.0
  %2668 = vmatpush1.msra.mxu0 0.0
  %2669 = vmatprep.subr.mxu0 0.0
  %2670 = vmatpush1.msra.mxu0 0.0
  %2671 = vmatprep.subr.mxu0 0.0
  %2672 = vmatpush1.msra.mxu0 0.0
  %2673 = vmatprep.subr.mxu0 0.0
  %2674 = vmatpush1.msra.mxu0 0.0
  %2675 = vmatprep.subr.mxu0 0.0
  %2676 = vmatpush1.msra.mxu0 0.0
  %2677 = vmatprep.subr.mxu0 0.0
  %2678 = vmatpush1.msra.mxu0 0.0
  %2679 = vmatprep.subr.mxu0 0.0
  %2680 = vmatpush1.msra.mxu0 0.0
  %2681 = vmatprep.subr.mxu0 0.0
  %2682 = vmatpush1.msra.mxu0 0.0
  %2683 = vmatprep.subr.mxu0 0.0
  %2684 = vmatpush1.msra.mxu0 0.0
  %2685 = vmatprep.subr.mxu0 0.0
  %2686 = vmatpush1.msra.mxu0 0.0
  %2687 = vmatprep.subr.mxu0 0.0
  %2688 = vmatpush1.msra.mxu0 0.0
  %2689 = vmatprep.subr.mxu0 0.0
  %2690 = vmatpush1.msra.mxu0 0.0
  %2691 = vmatprep.subr.mxu0 0.0
  %2692 = vmatpush1.msra.mxu0 0.0
  %2693 = vmatprep.subr.mxu0 0.0
  %2694 = vmatpush1.msra.mxu0 0.0
  %2695 = vmatprep.subr.mxu0 0.0
  %2696 = vmatpush1.msra.mxu0 0.0
  %2697 = vmatprep.mubr.f32.mxu0 0.0
  %2698 = vmatmul.mubr.f32.gmra.mrb[0].mxu0 %v2613
  %v2699 = vpop.f32.mrb[0].mxu0
  %v2700 = vadd.f32 0.0, %v2699
  %v2701 = vpop.f32.mrb[0].mxu0
  %2702 = vmatprep.mubr.f32.mxu0 0.0
  %2703 = vmatmul.mubr.f32.gmra.mrb[0].mxu0 %v2616
  %v2704 = vpop.f32.mrb[0].mxu0
  %v2705 = vadd.f32 0.0, %v2704
  %v2706 = vpop.f32.mrb[0].mxu0
  %2707 = vmatprep.mubr.f32.mxu0 0.0
  %2708 = vmatmul.mubr.f32.gmra.mrb[0].mxu0 %v2619
  %v2709 = vpop.f32.mrb[0].mxu0
  %v2710 = vadd.f32 0.0, %v2709
  %v2711 = vpop.f32.mrb[0].mxu0
  %2712 = vmatprep.mubr.f32.mxu0 0.0
  %2713 = vmatmul.mubr.f32.gmra.mrb[0].mxu0 %v2622
  %v2714 = vpop.f32.mrb[0].mxu0
  %v2715 = vadd.f32 0.0, %v2714
  %v2716 = vpop.f32.mrb[0].mxu0
  %2717 = vmatprep.mubr.f32.mxu0 0.0
  %2718 = vmatmul.mubr.f32.gmra.mrb[0].mxu0 %v2625
  %v2719 = vpop.f32.mrb[0].mxu0
  %v2720 = vadd.f32 0.0, %v2719
  %v2721 = vpop.f32.mrb[0].mxu0
  %2722 = vmatprep.mubr.f32.mxu0 0.0
  %2723 = vmatmul.mubr.f32.gmra.mrb[0].mxu0 %v2628
  %v2724 = vpop.f32.mrb[0].mxu0
  %v2725 = vadd.f32 0.0, %v2724
  %v2726 = vpop.f32.mrb[0].mxu0
  %2727 = vmatprep.mubr.f32.mxu0 0.0
  %2728 = vmatmul.mubr.f32.gmra.mrb[0].mxu0 %v2631
  %v2729 = vpop.f32.mrb[0].mxu0
  %v2730 = vadd.f32 0.0, %v2729
  %v2731 = vpop.f32.mrb[0].mxu0
  %2732 = vdwg.mxu0
  %v2733 = vmul.f32 %v2700, 1.442695
  %v2734 = vpow.pop %v2733
  %v2735 = vmul.f32 %v2705, 1.442695
  %v2736 = vpow.pop %v2735
  %v2737 = vmul.f32 %v2710, 1.442695
  %v2738 = vpow.pop %v2737
  %v2739 = vmul.f32 %v2715, 1.442695
  %v2740 = vpow.pop %v2739
  %v2741 = vmul.f32 %v2720, 1.442695
  %v2742 = vpow.pop %v2741
  %v2743 = vmul.f32 %v2725, 1.442695
  %v2744 = vpow.pop %v2743
  %v2745 = vmul.f32 %v2730, 1.442695
  %v2746 = vpow.pop %v2745
  %vm2747 = vcmask 457728
  %v2749 = vsel %vm2747, %v1979, 0
  %v2752 = vsel %vm2747, %v1980, 0
  %2754 = vmatprep.subr.mxu0 0.0
  %2755 = vmatpush1.msra.mxu0 %v2734
  %2756 = vmatprep.subr.mxu0 0.0
  %2757 = vmatpush1.msra.mxu0 %v2736
  %2758 = vmatprep.subr.mxu0 0.0
  %2759 = vmatpush1.msra.mxu0 %v2738
  %2760 = vmatprep.subr.mxu0 0.0
  %2761 = vmatpush1.msra.mxu0 %v2740
  %2762 = vmatprep.subr.mxu0 0.0
  %2763 = vmatpush1.msra.mxu0 %v2742
  %2764 = vmatprep.subr.mxu0 0.0
  %2765 = vmatpush1.msra.mxu0 %v2744
  %2766 = vmatprep.subr.mxu0 0.0
  %2767 = vmatpush1.msra.mxu0 %v2746
  %2768 = vmatprep.subr.mxu0 0.0
  %2769 = vmatpush1.msra.mxu0 0.0
  %2770 = vmatprep.subr.mxu0 0.0
  %2771 = vmatpush1.msra.mxu0 0.0
  %2772 = vmatprep.subr.mxu0 0.0
  %2773 = vmatpush1.msra.mxu0 0.0
  %2774 = vmatprep.subr.mxu0 0.0
  %2775 = vmatpush1.msra.mxu0 0.0
  %2776 = vmatprep.subr.mxu0 0.0
  %2777 = vmatpush1.msra.mxu0 0.0
  %2778 = vmatprep.subr.mxu0 0.0
  %2779 = vmatpush1.msra.mxu0 0.0
  %2780 = vmatprep.subr.mxu0 0.0
  %2781 = vmatpush1.msra.mxu0 0.0
  %2782 = vmatprep.subr.mxu0 0.0
  %2783 = vmatpush1.msra.mxu0 0.0
  %2784 = vmatprep.subr.mxu0 0.0
  %2785 = vmatpush1.msra.mxu0 0.0
  %2786 = vmatprep.subr.mxu0 0.0
  %2787 = vmatpush1.msra.mxu0 0.0
  %2788 = vmatprep.subr.mxu0 0.0
  %2789 = vmatpush1.msra.mxu0 0.0
  %2790 = vmatprep.subr.mxu0 0.0
  %2791 = vmatpush1.msra.mxu0 0.0
  %2792 = vmatprep.subr.mxu0 0.0
  %2793 = vmatpush1.msra.mxu0 0.0
  %2794 = vmatprep.subr.mxu0 0.0
  %2795 = vmatpush1.msra.mxu0 0.0
  %2796 = vmatprep.subr.mxu0 0.0
  %2797 = vmatpush1.msra.mxu0 0.0
  %2798 = vmatprep.subr.mxu0 0.0
  %2799 = vmatpush1.msra.mxu0 0.0
  %2800 = vmatprep.subr.mxu0 0.0
  %2801 = vmatpush1.msra.mxu0 0.0
  %2802 = vmatprep.subr.mxu0 0.0
  %2803 = vmatpush1.msra.mxu0 0.0
  %2804 = vmatprep.subr.mxu0 0.0
  %2805 = vmatpush1.msra.mxu0 0.0
  %2806 = vmatprep.subr.mxu0 0.0
  %2807 = vmatpush1.msra.mxu0 0.0
  %2808 = vmatprep.subr.mxu0 0.0
  %2809 = vmatpush1.msra.mxu0 0.0
  %2810 = vmatprep.subr.mxu0 0.0
  %2811 = vmatpush1.msra.mxu0 0.0
  %2812 = vmatprep.subr.mxu0 0.0
  %2813 = vmatpush1.msra.mxu0 0.0
  %2814 = vmatprep.subr.mxu0 0.0
  %2815 = vmatpush1.msra.mxu0 0.0
  %2816 = vmatprep.subr.mxu0 0.0
  %2817 = vmatpush1.msra.mxu0 0.0
  %2818 = vmatprep.mubr.f32.mxu0 0.0
  %2819 = vmatmul.mubr.f32.gmra.mrb[0].mxu0 %v2749
  %v2820 = vpop.f32.mrb[0].mxu0
  %v2821 = vadd.f32 0.0, %v2820
  %v2822 = vpop.f32.mrb[0].mxu0
  %2823 = vmatprep.mubr.f32.mxu0 0.0
  %2824 = vmatmul.mubr.f32.gmra.mrb[0].mxu0 %v2752
  %v2825 = vpop.f32.mrb[0].mxu0
  %v2826 = vadd.f32 0.0, %v2825
  %v2827 = vpop.f32.mrb[0].mxu0
  %2828 = vdwg.mxu0
  %2829 = vmatprep.subr.mxu0 0.0
  %2830 = vmatpush1.msra.mxu0 %v2821
  %2831 = vmatprep.subr.mxu0 0.0
  %2832 = vmatpush1.msra.mxu0 %v2826
  %2833 = vmatprep.subr.mxu0 0.0
  %2834 = vmatpush1.msra.mxu0 0.0
  %2835 = vmatprep.subr.mxu0 0.0
  %2836 = vmatpush1.msra.mxu0 0.0
  %2837 = vmatprep.subr.mxu0 0.0
  %2838 = vmatpush1.msra.mxu0 0.0
  %2839 = vmatprep.subr.mxu0 0.0
  %2840 = vmatpush1.msra.mxu0 0.0
  %2841 = vmatprep.subr.mxu0 0.0
  %2842 = vmatpush1.msra.mxu0 0.0
  %2843 = vmatprep.subr.mxu0 0.0
  %2844 = vmatpush1.msra.mxu0 0.0
  %2845 = vmatprep.subr.mxu0 0.0
  %2846 = vmatpush1.msra.mxu0 0.0
  %2847 = vmatprep.subr.mxu0 0.0
  %2848 = vmatpush1.msra.mxu0 0.0
  %2849 = vmatprep.subr.mxu0 0.0
  %2850 = vmatpush1.msra.mxu0 0.0
  %2851 = vmatprep.subr.mxu0 0.0
  %2852 = vmatpush1.msra.mxu0 0.0
  %2853 = vmatprep.subr.mxu0 0.0
  %2854 = vmatpush1.msra.mxu0 0.0
  %2855 = vmatprep.subr.mxu0 0.0
  %2856 = vmatpush1.msra.mxu0 0.0
  %2857 = vmatprep.subr.mxu0 0.0
  %2858 = vmatpush1.msra.mxu0 0.0
  %2859 = vmatprep.subr.mxu0 0.0
  %2860 = vmatpush1.msra.mxu0 0.0
  %2861 = vmatprep.subr.mxu0 0.0
  %2862 = vmatpush1.msra.mxu0 0.0
  %2863 = vmatprep.subr.mxu0 0.0
  %2864 = vmatpush1.msra.mxu0 0.0
  %2865 = vmatprep.subr.mxu0 0.0
  %2866 = vmatpush1.msra.mxu0 0.0
  %2867 = vmatprep.subr.mxu0 0.0
  %2868 = vmatpush1.msra.mxu0 0.0
  %2869 = vmatprep.subr.mxu0 0.0
  %2870 = vmatpush1.msra.mxu0 0.0
  %2871 = vmatprep.subr.mxu0 0.0
  %2872 = vmatpush1.msra.mxu0 0.0
  %2873 = vmatprep.subr.mxu0 0.0
  %2874 = vmatpush1.msra.mxu0 0.0
  %2875 = vmatprep.subr.mxu0 0.0
  %2876 = vmatpush1.msra.mxu0 0.0
  %2877 = vmatprep.subr.mxu0 0.0
  %2878 = vmatpush1.msra.mxu0 0.0
  %2879 = vmatprep.subr.mxu0 0.0
  %2880 = vmatpush1.msra.mxu0 0.0
  %2881 = vmatprep.subr.mxu0 0.0
  %2882 = vmatpush1.msra.mxu0 0.0
  %2883 = vmatprep.subr.mxu0 0.0
  %2884 = vmatpush1.msra.mxu0 0.0
  %2885 = vmatprep.subr.mxu0 0.0
  %2886 = vmatpush1.msra.mxu0 0.0
  %2887 = vmatprep.subr.mxu0 0.0
  %2888 = vmatpush1.msra.mxu0 0.0
  %2889 = vmatprep.subr.mxu0 0.0
  %2890 = vmatpush1.msra.mxu0 0.0
  %2891 = vmatprep.subr.mxu0 0.0
  %2892 = vmatpush1.msra.mxu0 0.0
  %2893 = vmatprep.mubr.f32.mxu0 0.0
  %2894 = vmatmul.mubr.f32.gmra.mrb[0].mxu0 %v1983
  %v2895 = vpop.f32.mrb[0].mxu0
  %v2896 = vadd.f32 1e-16, %v2895
  %v2897 = vpop.f32.mrb[0].mxu0
  %2898 = vmatprep.mubr.f32.mxu0 0.0
  %2899 = vmatmul.mubr.f32.gmra.mrb[0].mxu0 %v1986
  %v2900 = vpop.f32.mrb[0].mxu0
  %v2901 = vadd.f32 1e-16, %v2900
  %v2902 = vpop.f32.mrb[0].mxu0
  %2903 = vmatprep.mubr.f32.mxu0 0.0
  %2904 = vmatmul.mubr.f32.gmra.mrb[0].mxu0 %v1989
  %v2905 = vpop.f32.mrb[0].mxu0
  %v2906 = vadd.f32 1e-16, %v2905
  %v2907 = vpop.f32.mrb[0].mxu0
  %2908 = vmatprep.mubr.f32.mxu0 0.0
  %2909 = vmatmul.mubr.f32.gmra.mrb[0].mxu0 %v1992
  %v2910 = vpop.f32.mrb[0].mxu0
  %v2911 = vadd.f32 1e-16, %v2910
  %v2912 = vpop.f32.mrb[0].mxu0
  %2913 = vmatprep.mubr.f32.mxu0 0.0
  %2914 = vmatmul.mubr.f32.gmra.mrb[0].mxu0 %v1995
  %v2915 = vpop.f32.mrb[0].mxu0
  %v2916 = vadd.f32 1e-16, %v2915
  %v2917 = vpop.f32.mrb[0].mxu0
  %2918 = vmatprep.mubr.f32.mxu0 0.0
  %2919 = vmatmul.mubr.f32.gmra.mrb[0].mxu0 %v1998
  %v2920 = vpop.f32.mrb[0].mxu0
  %v2921 = vadd.f32 1e-16, %v2920
  %v2922 = vpop.f32.mrb[0].mxu0
  %2923 = vmatprep.mubr.f32.mxu0 0.0
  %2924 = vmatmul.mubr.f32.gmra.mrb[0].mxu0 %v2001
  %v2925 = vpop.f32.mrb[0].mxu0
  %v2926 = vadd.f32 1e-16, %v2925
  %v2927 = vpop.f32.mrb[0].mxu0
  %2928 = vdwg.mxu0
  %v2929 = vrcp.pop %v2896
  %v2930 = vrcp.pop %v2901
  %v2931 = vrcp.pop %v2906
  %v2932 = vrcp.pop %v2911
  %v2933 = vrcp.pop %v2916
  %v2934 = vrcp.pop %v2921
  %v2935 = vrcp.pop %v2926
  %v2936 = vmul.f32 %v2734, %v2929
  %v2937 = vmul.f32 %v2736, %v2930
  %v2938 = vmul.f32 %v2738, %v2931
  %v2939 = vmul.f32 %v2740, %v2932
  %v2940 = vmul.f32 %v2742, %v2933
  %v2941 = vmul.f32 %v2744, %v2934
  %v2942 = vmul.f32 %v2746, %v2935
  %2950 = vrot.lane.b32.xlu0 %v2407, 96
  %v2951 = vpop.permute.xlu0 %2950
  %2952 = vrot.lane.b32.xlu0 %v2412, 96
  %v2953 = vpop.permute.xlu0 %2952
  %2954 = vrot.lane.b32.xlu0 %v2417, 96
  %v2955 = vpop.permute.xlu0 %2954
  %2956 = vrot.lane.b32.xlu0 %v2422, 96
  %v2957 = vpop.permute.xlu0 %2956
  %2958 = vrot.lane.b32.xlu0 %v2427, 96
  %v2959 = vpop.permute.xlu0 %2958
  %2960 = vrot.lane.b32.xlu0 %v2432, 96
  %v2961 = vpop.permute.xlu0 %2960
  %2962 = vrot.lane.b32.xlu0 %v2437, 96
  %v2963 = vpop.permute.xlu0 %2962
  %v2971 = vmul.f32 %v2936, %v2951
  %v2972 = vmul.f32 %v2937, %v2953
  %v2973 = vmul.f32 %v2938, %v2955
  %v2974 = vmul.f32 %v2939, %v2957
  %v2975 = vmul.f32 %v2940, %v2959
  %v2976 = vmul.f32 %v2941, %v2961
  %v2977 = vmul.f32 %v2942, %v2963
  %v2978 = vld [vmem:[%s16] sm:$0xff]
  %v2979 = vld [vmem:[%s16 + $0x8] sm:$0xff]
  %v2980 = vld [vmem:[%s16 + $0x10] sm:$0xff]
  %v2981 = vld [vmem:[%s16 + $0x18] sm:$0xff]
  %v2983 = vsel %vm351, %v143, 0
  %v2986 = vsel %vm351, %v148, 0
  %2988 = vmatprep.subr.mxu0 0.0
  %2989 = vmatpush1.msra.mxu0 %v2978
  %2990 = vmatprep.subr.mxu0 0.0
  %2991 = vmatpush1.msra.mxu0 %v2979
  %2992 = vmatprep.subr.mxu0 0.0
  %2993 = vmatpush1.msra.mxu0 %v2980
  %2994 = vmatprep.subr.mxu0 0.0
  %2995 = vmatpush1.msra.mxu0 %v2981
  %2996 = vmatprep.subr.mxu0 0.0
  %2997 = vmatpush1.msra.mxu0 0.0
  %2998 = vmatprep.subr.mxu0 0.0
  %2999 = vmatpush1.msra.mxu0 0.0
  %3000 = vmatprep.subr.mxu0 0.0
  %3001 = vmatpush1.msra.mxu0 0.0
  %3002 = vmatprep.subr.mxu0 0.0
  %3003 = vmatpush1.msra.mxu0 0.0
  %3004 = vmatprep.subr.mxu0 0.0
  %3005 = vmatpush1.msra.mxu0 0.0
  %3006 = vmatprep.subr.mxu0 0.0
  %3007 = vmatpush1.msra.mxu0 0.0
  %3008 = vmatprep.subr.mxu0 0.0
  %3009 = vmatpush1.msra.mxu0 0.0
  %3010 = vmatprep.subr.mxu0 0.0
  %3011 = vmatpush1.msra.mxu0 0.0
  %3012 = vmatprep.subr.mxu0 0.0
  %3013 = vmatpush1.msra.mxu0 0.0
  %3014 = vmatprep.subr.mxu0 0.0
  %3015 = vmatpush1.msra.mxu0 0.0
  %3016 = vmatprep.subr.mxu0 0.0
  %3017 = vmatpush1.msra.mxu0 0.0
  %3018 = vmatprep.subr.mxu0 0.0
  %3019 = vmatpush1.msra.mxu0 0.0
  %3020 = vmatprep.subr.mxu0 0.0
  %3021 = vmatpush1.msra.mxu0 0.0
  %3022 = vmatprep.subr.mxu0 0.0
  %3023 = vmatpush1.msra.mxu0 0.0
  %3024 = vmatprep.subr.mxu0 0.0
  %3025 = vmatpush1.msra.mxu0 0.0
  %3026 = vmatprep.subr.mxu0 0.0
  %3027 = vmatpush1.msra.mxu0 0.0
  %3028 = vmatprep.subr.mxu0 0.0
  %3029 = vmatpush1.msra.mxu0 0.0
  %3030 = vmatprep.subr.mxu0 0.0
  %3031 = vmatpush1.msra.mxu0 0.0
  %3032 = vmatprep.subr.mxu0 0.0
  %3033 = vmatpush1.msra.mxu0 0.0
  %3034 = vmatprep.subr.mxu0 0.0
  %3035 = vmatpush1.msra.mxu0 0.0
  %3036 = vmatprep.subr.mxu0 0.0
  %3037 = vmatpush1.msra.mxu0 0.0
  %3038 = vmatprep.subr.mxu0 0.0
  %3039 = vmatpush1.msra.mxu0 0.0
  %3040 = vmatprep.subr.mxu0 0.0
  %3041 = vmatpush1.msra.mxu0 0.0
  %3042 = vmatprep.subr.mxu0 0.0
  %3043 = vmatpush1.msra.mxu0 0.0
  %3044 = vmatprep.subr.mxu0 0.0
  %3045 = vmatpush1.msra.mxu0 0.0
  %3046 = vmatprep.subr.mxu0 0.0
  %3047 = vmatpush1.msra.mxu0 0.0
  %3048 = vmatprep.subr.mxu0 0.0
  %3049 = vmatpush1.msra.mxu0 0.0
  %3050 = vmatprep.subr.mxu0 0.0
  %3051 = vmatpush1.msra.mxu0 0.0
  %3052 = vmatprep.mubr.f32.mxu0 0.0
  %3053 = vmatmul.mubr.f32.gmra.mrb[0].mxu0 %v2983
  %v3054 = vpop.f32.mrb[0].mxu0
  %v3055 = vadd.f32 0.0, %v3054
  %v3056 = vpop.f32.mrb[0].mxu0
  %3057 = vmatprep.mubr.f32.mxu0 0.0
  %3058 = vmatmul.mubr.f32.gmra.mrb[0].mxu0 %v2986
  %v3059 = vpop.f32.mrb[0].mxu0
  %v3060 = vadd.f32 0.0, %v3059
  %v3061 = vpop.f32.mrb[0].mxu0
  %3062 = vdwg.mxu0
  %3063 = vmatprep.subr.mxu0 0.0
  %3064 = vmatpush1.msra.mxu0 %v2971
  %3065 = vmatprep.subr.mxu0 0.0
  %3066 = vmatpush1.msra.mxu0 %v2972
  %3067 = vmatprep.subr.mxu0 0.0
  %3068 = vmatpush1.msra.mxu0 %v2973
  %3069 = vmatprep.subr.mxu0 0.0
  %3070 = vmatpush1.msra.mxu0 %v2974
  %3071 = vmatprep.subr.mxu0 0.0
  %3072 = vmatpush1.msra.mxu0 %v2975
  %3073 = vmatprep.subr.mxu0 0.0
  %3074 = vmatpush1.msra.mxu0 %v2976
  %3075 = vmatprep.subr.mxu0 0.0
  %3076 = vmatpush1.msra.mxu0 %v2977
  %3077 = vmatprep.subr.mxu0 0.0
  %3078 = vmatpush1.msra.mxu0 0.0
  %3079 = vmatprep.subr.mxu0 0.0
  %3080 = vmatpush1.msra.mxu0 0.0
  %3081 = vmatprep.subr.mxu0 0.0
  %3082 = vmatpush1.msra.mxu0 0.0
  %3083 = vmatprep.subr.mxu0 0.0
  %3084 = vmatpush1.msra.mxu0 0.0
  %3085 = vmatprep.subr.mxu0 0.0
  %3086 = vmatpush1.msra.mxu0 0.0
  %3087 = vmatprep.subr.mxu0 0.0
  %3088 = vmatpush1.msra.mxu0 0.0
  %3089 = vmatprep.subr.mxu0 0.0
  %3090 = vmatpush1.msra.mxu0 0.0
  %3091 = vmatprep.subr.mxu0 0.0
  %3092 = vmatpush1.msra.mxu0 0.0
  %3093 = vmatprep.subr.mxu0 0.0
  %3094 = vmatpush1.msra.mxu0 0.0
  %3095 = vmatprep.subr.mxu0 0.0
  %3096 = vmatpush1.msra.mxu0 0.0
  %3097 = vmatprep.subr.mxu0 0.0
  %3098 = vmatpush1.msra.mxu0 0.0
  %3099 = vmatprep.subr.mxu0 0.0
  %3100 = vmatpush1.msra.mxu0 0.0
  %3101 = vmatprep.subr.mxu0 0.0
  %3102 = vmatpush1.msra.mxu0 0.0
  %3103 = vmatprep.subr.mxu0 0.0
  %3104 = vmatpush1.msra.mxu0 0.0
  %3105 = vmatprep.subr.mxu0 0.0
  %3106 = vmatpush1.msra.mxu0 0.0
  %3107 = vmatprep.subr.mxu0 0.0
  %3108 = vmatpush1.msra.mxu0 0.0
  %3109 = vmatprep.subr.mxu0 0.0
  %3110 = vmatpush1.msra.mxu0 0.0
  %3111 = vmatprep.subr.mxu0 0.0
  %3112 = vmatpush1.msra.mxu0 0.0
  %3113 = vmatprep.subr.mxu0 0.0
  %3114 = vmatpush1.msra.mxu0 0.0
  %3115 = vmatprep.subr.mxu0 0.0
  %3116 = vmatpush1.msra.mxu0 0.0
  %3117 = vmatprep.subr.mxu0 0.0
  %3118 = vmatpush1.msra.mxu0 0.0
  %3119 = vmatprep.subr.mxu0 0.0
  %3120 = vmatpush1.msra.mxu0 0.0
  %3121 = vmatprep.subr.mxu0 0.0
  %3122 = vmatpush1.msra.mxu0 0.0
  %3123 = vmatprep.subr.mxu0 0.0
  %3124 = vmatpush1.msra.mxu0 0.0
  %3125 = vmatprep.subr.mxu0 0.0
  %3126 = vmatpush1.msra.mxu0 0.0
  %3127 = vmatprep.mubr.f32.mxu0 0.0
  %3128 = vmatmul.mubr.f32.gmra.mrb[0].mxu0 %v2749
  %v3129 = vpop.f32.mrb[0].mxu0
  %v3130 = vadd.f32 %v3055, %v3129
  %v3131 = vpop.f32.mrb[0].mxu0
  %3132 = vmatprep.mubr.f32.mxu0 0.0
  %3133 = vmatmul.mubr.f32.gmra.mrb[0].mxu0 %v2752
  %v3134 = vpop.f32.mrb[0].mxu0
  %v3135 = vadd.f32 %v3060, %v3134
  %v3136 = vpop.f32.mrb[0].mxu0
  %3137 = vdwg.mxu0
  %v3138 = vld [vmem:[%s17] sm:$0x1]
  %v3140 = vlaneseq
  %v3141 = vshrl.u32 %v3140, 7
  %v3142 = vsub.s32 0, %v3141
  %v3143 = vrot.slane %v3138, %v3142
  %v3145 = vadd.f32 %v3130, %v3143
  %v3146 = vadd.f32 %v3135, %v3143
  %v3147 = vmax.f32 %v3145, 0.0
  %v3148 = vmax.f32 %v3146, 0.0
  %3149 = vmatprep.subr.mxu0 0.0
  %3150 = vmatpush1.msra.mxu0 %v3147
  %3151 = vmatprep.subr.mxu0 0.0
  %3152 = vmatpush1.msra.mxu0 %v3148
  %3153 = vmatprep.subr.mxu0 0.0
  %3154 = vmatpush1.msra.mxu0 0.0
  %3155 = vmatprep.subr.mxu0 0.0
  %3156 = vmatpush1.msra.mxu0 0.0
  %3157 = vmatprep.subr.mxu0 0.0
  %3158 = vmatpush1.msra.mxu0 0.0
  %3159 = vmatprep.subr.mxu0 0.0
  %3160 = vmatpush1.msra.mxu0 0.0
  %3161 = vmatprep.subr.mxu0 0.0
  %3162 = vmatpush1.msra.mxu0 0.0
  %3163 = vmatprep.subr.mxu0 0.0
  %3164 = vmatpush1.msra.mxu0 0.0
  %3165 = vmatprep.subr.mxu0 0.0
  %3166 = vmatpush1.msra.mxu0 0.0
  %3167 = vmatprep.subr.mxu0 0.0
  %3168 = vmatpush1.msra.mxu0 0.0
  %3169 = vmatprep.subr.mxu0 0.0
  %3170 = vmatpush1.msra.mxu0 0.0
  %3171 = vmatprep.subr.mxu0 0.0
  %3172 = vmatpush1.msra.mxu0 0.0
  %3173 = vmatprep.subr.mxu0 0.0
  %3174 = vmatpush1.msra.mxu0 0.0
  %3175 = vmatprep.subr.mxu0 0.0
  %3176 = vmatpush1.msra.mxu0 0.0
  %3177 = vmatprep.subr.mxu0 0.0
  %3178 = vmatpush1.msra.mxu0 0.0
  %3179 = vmatprep.subr.mxu0 0.0
  %3180 = vmatpush1.msra.mxu0 0.0
  %3181 = vmatprep.subr.mxu0 0.0
  %3182 = vmatpush1.msra.mxu0 0.0
  %3183 = vmatprep.subr.mxu0 0.0
  %3184 = vmatpush1.msra.mxu0 0.0
  %3185 = vmatprep.subr.mxu0 0.0
  %3186 = vmatpush1.msra.mxu0 0.0
  %3187 = vmatprep.subr.mxu0 0.0
  %3188 = vmatpush1.msra.mxu0 0.0
  %3189 = vmatprep.subr.mxu0 0.0
  %3190 = vmatpush1.msra.mxu0 0.0
  %3191 = vmatprep.subr.mxu0 0.0
  %3192 = vmatpush1.msra.mxu0 0.0
  %3193 = vmatprep.subr.mxu0 0.0
  %3194 = vmatpush1.msra.mxu0 0.0
  %3195 = vmatprep.subr.mxu0 0.0
  %3196 = vmatpush1.msra.mxu0 0.0
  %3197 = vmatprep.subr.mxu0 0.0
  %3198 = vmatpush1.msra.mxu0 0.0
  %3199 = vmatprep.subr.mxu0 0.0
  %3200 = vmatpush1.msra.mxu0 0.0
  %3201 = vmatprep.subr.mxu0 0.0
  %3202 = vmatpush1.msra.mxu0 0.0
  %3203 = vmatprep.subr.mxu0 0.0
  %3204 = vmatpush1.msra.mxu0 0.0
  %3205 = vmatprep.subr.mxu0 0.0
  %3206 = vmatpush1.msra.mxu0 0.0
  %3207 = vmatprep.subr.mxu0 0.0
  %3208 = vmatpush1.msra.mxu0 0.0
  %3209 = vmatprep.subr.mxu0 0.0
  %3210 = vmatpush1.msra.mxu0 0.0
  %3211 = vmatprep.subr.mxu0 0.0
  %3212 = vmatpush1.msra.mxu0 0.0
  %3213 = vmatprep.mubr.f32.mxu0 0.0
  %3214 = vmatmul.mubr.f32.gmra.mrb[0].mxu0 %v1983
  %v3215 = vpop.f32.mrb[0].mxu0
  %v3216 = vadd.f32 0.0, %v3215
  %v3217 = vpop.f32.mrb[0].mxu0
  %3218 = vmatprep.mubr.f32.mxu0 0.0
  %3219 = vmatmul.mubr.f32.gmra.mrb[0].mxu0 %v1986
  %v3220 = vpop.f32.mrb[0].mxu0
  %v3221 = vadd.f32 0.0, %v3220
  %v3222 = vpop.f32.mrb[0].mxu0
  %3223 = vmatprep.mubr.f32.mxu0 0.0
  %3224 = vmatmul.mubr.f32.gmra.mrb[0].mxu0 %v1989
  %v3225 = vpop.f32.mrb[0].mxu0
  %v3226 = vadd.f32 0.0, %v3225
  %v3227 = vpop.f32.mrb[0].mxu0
  %3228 = vmatprep.mubr.f32.mxu0 0.0
  %3229 = vmatmul.mubr.f32.gmra.mrb[0].mxu0 %v1992
  %v3230 = vpop.f32.mrb[0].mxu0
  %v3231 = vadd.f32 0.0, %v3230
  %v3232 = vpop.f32.mrb[0].mxu0
  %3233 = vmatprep.mubr.f32.mxu0 0.0
  %3234 = vmatmul.mubr.f32.gmra.mrb[0].mxu0 %v1995
  %v3235 = vpop.f32.mrb[0].mxu0
  %v3236 = vadd.f32 0.0, %v3235
  %v3237 = vpop.f32.mrb[0].mxu0
  %3238 = vmatprep.mubr.f32.mxu0 0.0
  %3239 = vmatmul.mubr.f32.gmra.mrb[0].mxu0 %v1998
  %v3240 = vpop.f32.mrb[0].mxu0
  %v3241 = vadd.f32 0.0, %v3240
  %v3242 = vpop.f32.mrb[0].mxu0
  %3243 = vmatprep.mubr.f32.mxu0 0.0
  %3244 = vmatmul.mubr.f32.gmra.mrb[0].mxu0 %v2001
  %v3245 = vpop.f32.mrb[0].mxu0
  %v3246 = vadd.f32 0.0, %v3245
  %v3247 = vpop.f32.mrb[0].mxu0
  %3248 = vdwg.mxu0
  %3249 = vmatprep.subr.mxu0 0.0
  %3250 = vmatpush1.msra.mxu0 %v3147
  %3251 = vmatprep.subr.mxu0 0.0
  %3252 = vmatpush1.msra.mxu0 %v3148
  %3253 = vmatprep.subr.mxu0 0.0
  %3254 = vmatpush1.msra.mxu0 0.0
  %3255 = vmatprep.subr.mxu0 0.0
  %3256 = vmatpush1.msra.mxu0 0.0
  %3257 = vmatprep.subr.mxu0 0.0
  %3258 = vmatpush1.msra.mxu0 0.0
  %3259 = vmatprep.subr.mxu0 0.0
  %3260 = vmatpush1.msra.mxu0 0.0
  %3261 = vmatprep.subr.mxu0 0.0
  %3262 = vmatpush1.msra.mxu0 0.0
  %3263 = vmatprep.subr.mxu0 0.0
  %3264 = vmatpush1.msra.mxu0 0.0
  %3265 = vmatprep.subr.mxu0 0.0
  %3266 = vmatpush1.msra.mxu0 0.0
  %3267 = vmatprep.subr.mxu0 0.0
  %3268 = vmatpush1.msra.mxu0 0.0
  %3269 = vmatprep.subr.mxu0 0.0
  %3270 = vmatpush1.msra.mxu0 0.0
  %3271 = vmatprep.subr.mxu0 0.0
  %3272 = vmatpush1.msra.mxu0 0.0
  %3273 = vmatprep.subr.mxu0 0.0
  %3274 = vmatpush1.msra.mxu0 0.0
  %3275 = vmatprep.subr.mxu0 0.0
  %3276 = vmatpush1.msra.mxu0 0.0
  %3277 = vmatprep.subr.mxu0 0.0
  %3278 = vmatpush1.msra.mxu0 0.0
  %3279 = vmatprep.subr.mxu0 0.0
  %3280 = vmatpush1.msra.mxu0 0.0
  %3281 = vmatprep.subr.mxu0 0.0
  %3282 = vmatpush1.msra.mxu0 0.0
  %3283 = vmatprep.subr.mxu0 0.0
  %3284 = vmatpush1.msra.mxu0 0.0
  %3285 = vmatprep.subr.mxu0 0.0
  %3286 = vmatpush1.msra.mxu0 0.0
  %3287 = vmatprep.subr.mxu0 0.0
  %3288 = vmatpush1.msra.mxu0 0.0
  %3289 = vmatprep.subr.mxu0 0.0
  %3290 = vmatpush1.msra.mxu0 0.0
  %3291 = vmatprep.subr.mxu0 0.0
  %3292 = vmatpush1.msra.mxu0 0.0
  %3293 = vmatprep.subr.mxu0 0.0
  %3294 = vmatpush1.msra.mxu0 0.0
  %3295 = vmatprep.subr.mxu0 0.0
  %3296 = vmatpush1.msra.mxu0 0.0
  %3297 = vmatprep.subr.mxu0 0.0
  %3298 = vmatpush1.msra.mxu0 0.0
  %3299 = vmatprep.subr.mxu0 0.0
  %3300 = vmatpush1.msra.mxu0 0.0
  %3301 = vmatprep.subr.mxu0 0.0
  %3302 = vmatpush1.msra.mxu0 0.0
  %3303 = vmatprep.subr.mxu0 0.0
  %3304 = vmatpush1.msra.mxu0 0.0
  %3305 = vmatprep.subr.mxu0 0.0
  %3306 = vmatpush1.msra.mxu0 0.0
  %3307 = vmatprep.subr.mxu0 0.0
  %3308 = vmatpush1.msra.mxu0 0.0
  %3309 = vmatprep.subr.mxu0 0.0
  %3310 = vmatpush1.msra.mxu0 0.0
  %3311 = vmatprep.subr.mxu0 0.0
  %3312 = vmatpush1.msra.mxu0 0.0
  %3313 = vmatprep.mubr.f32.mxu0 0.0
  %3314 = vmatmul.mubr.f32.gmra.mrb[0].mxu0 %v2104
  %v3315 = vpop.f32.mrb[0].mxu0
  %v3316 = vadd.f32 0.0, %v3315
  %v3317 = vpop.f32.mrb[0].mxu0
  %3318 = vmatprep.mubr.f32.mxu0 0.0
  %3319 = vmatmul.mubr.f32.gmra.mrb[0].mxu0 %v2107
  %v3320 = vpop.f32.mrb[0].mxu0
  %v3321 = vadd.f32 0.0, %v3320
  %v3322 = vpop.f32.mrb[0].mxu0
  %3323 = vmatprep.mubr.f32.mxu0 0.0
  %3324 = vmatmul.mubr.f32.gmra.mrb[0].mxu0 %v2110
  %v3325 = vpop.f32.mrb[0].mxu0
  %v3326 = vadd.f32 0.0, %v3325
  %v3327 = vpop.f32.mrb[0].mxu0
  %3328 = vmatprep.mubr.f32.mxu0 0.0
  %3329 = vmatmul.mubr.f32.gmra.mrb[0].mxu0 %v2113
  %v3330 = vpop.f32.mrb[0].mxu0
  %v3331 = vadd.f32 0.0, %v3330
  %v3332 = vpop.f32.mrb[0].mxu0
  %3333 = vmatprep.mubr.f32.mxu0 0.0
  %3334 = vmatmul.mubr.f32.gmra.mrb[0].mxu0 %v2116
  %v3335 = vpop.f32.mrb[0].mxu0
  %v3336 = vadd.f32 0.0, %v3335
  %v3337 = vpop.f32.mrb[0].mxu0
  %3338 = vmatprep.mubr.f32.mxu0 0.0
  %3339 = vmatmul.mubr.f32.gmra.mrb[0].mxu0 %v2119
  %v3340 = vpop.f32.mrb[0].mxu0
  %v3341 = vadd.f32 0.0, %v3340
  %v3342 = vpop.f32.mrb[0].mxu0
  %3343 = vmatprep.mubr.f32.mxu0 0.0
  %3344 = vmatmul.mubr.f32.gmra.mrb[0].mxu0 %v2122
  %v3345 = vpop.f32.mrb[0].mxu0
  %v3346 = vadd.f32 0.0, %v3345
  %v3347 = vpop.f32.mrb[0].mxu0
  %3348 = vdwg.mxu0
  %3356 = vrot.lane.b32.xlu0 %v3316, 32
  %v3357 = vpop.permute.xlu0 %3356
  %3358 = vrot.lane.b32.xlu0 %v3321, 32
  %v3359 = vpop.permute.xlu0 %3358
  %3360 = vrot.lane.b32.xlu0 %v3326, 32
  %v3361 = vpop.permute.xlu0 %3360
  %3362 = vrot.lane.b32.xlu0 %v3331, 32
  %v3363 = vpop.permute.xlu0 %3362
  %3364 = vrot.lane.b32.xlu0 %v3336, 32
  %v3365 = vpop.permute.xlu0 %3364
  %3366 = vrot.lane.b32.xlu0 %v3341, 32
  %v3367 = vpop.permute.xlu0 %3366
  %3368 = vrot.lane.b32.xlu0 %v3346, 32
  %v3369 = vpop.permute.xlu0 %3368
  %v3377 = vsel %vm351, %v3216, %v3357
  %v3378 = vsel %vm351, %v3221, %v3359
  %v3379 = vsel %vm351, %v3226, %v3361
  %v3380 = vsel %vm351, %v3231, %v3363
  %v3381 = vsel %vm351, %v3236, %v3365
  %v3382 = vsel %vm351, %v3241, %v3367
  %v3383 = vsel %vm351, %v3246, %v3369
  %v3384 = vsel %vm355, %v3377, %v2260
  %v3385 = vsel %vm355, %v3378, %v2262
  %v3386 = vsel %vm355, %v3379, %v2264
  %v3387 = vsel %vm355, %v3380, %v2266
  %v3388 = vsel %vm355, %v3381, %v2268
  %v3389 = vsel %vm355, %v3382, %v2270
  %v3390 = vsel %vm355, %v3383, %v2272
  %v3391 = vsel %vm2294, %v3384, 1.0
  %v3392 = vsel %vm2294, %v3385, 1.0
  %v3393 = vsel %vm2294, %v3386, 1.0
  %v3394 = vsel %vm2294, %v3387, 1.0
  %v3395 = vsel %vm2294, %v3388, 1.0
  %v3396 = vsel %vm2294, %v3389, 1.0
  %v3397 = vsel %vm2294, %v3390, 1.0
  %s3398 = scalar_lea.vmem %s14, 104
  %v3399 = vld [vmem:[%s3398] sm:$0xff]
  %v3400 = vld [vmem:[%s3398 + $0x8] sm:$0xff]
  %v3401 = vld [vmem:[%s3398 + $0x10] sm:$0xff]
  %v3402 = vld [vmem:[%s3398 + $0x18] sm:$0xff]
  %v3403 = vld [vmem:[%s3398 + $0x20] sm:$0xff]
  %v3404 = vld [vmem:[%s3398 + $0x28] sm:$0xff]
  %v3405 = vld [vmem:[%s3398 + $0x30] sm:$0xff]
  %v3406 = vld [vmem:[%s3398 + $0x38] sm:$0xff]
  %v3407 = vld [vmem:[%s3398 + $0x40] sm:$0xff]
  %v3408 = vld [vmem:[%s3398 + $0x48] sm:$0xff]
  %v3409 = vld [vmem:[%s3398 + $0x50] sm:$0xff]
  %v3410 = vld [vmem:[%s3398 + $0x58] sm:$0xff]
  %v3411 = vld [vmem:[%s3398 + $0x60] sm:$0x1]
  %v3413 = vsel %vm2315, %v3391, 0
  %v3416 = vsel %vm2315, %v3392, 0
  %v3419 = vsel %vm2315, %v3393, 0
  %v3422 = vsel %vm2315, %v3394, 0
  %v3425 = vsel %vm2315, %v3395, 0
  %v3428 = vsel %vm2315, %v3396, 0
  %v3431 = vsel %vm2315, %v3397, 0
  %v3434 = vsel %vm72, %v3411, 0
  %3436 = vmatprep.subr.mxu0 0.0
  %3437 = vmatpush1.msra.mxu0 %v3399
  %3438 = vmatprep.subr.mxu0 0.0
  %3439 = vmatpush1.msra.mxu0 %v3400
  %3440 = vmatprep.subr.mxu0 0.0
  %3441 = vmatpush1.msra.mxu0 %v3401
  %3442 = vmatprep.subr.mxu0 0.0
  %3443 = vmatpush1.msra.mxu0 %v3402
  %3444 = vmatprep.subr.mxu0 0.0
  %3445 = vmatpush1.msra.mxu0 %v3403
  %3446 = vmatprep.subr.mxu0 0.0
  %3447 = vmatpush1.msra.mxu0 %v3404
  %3448 = vmatprep.subr.mxu0 0.0
  %3449 = vmatpush1.msra.mxu0 %v3405
  %3450 = vmatprep.subr.mxu0 0.0
  %3451 = vmatpush1.msra.mxu0 %v3406
  %3452 = vmatprep.subr.mxu0 0.0
  %3453 = vmatpush1.msra.mxu0 %v3407
  %3454 = vmatprep.subr.mxu0 0.0
  %3455 = vmatpush1.msra.mxu0 %v3408
  %3456 = vmatprep.subr.mxu0 0.0
  %3457 = vmatpush1.msra.mxu0 %v3409
  %3458 = vmatprep.subr.mxu0 0.0
  %3459 = vmatpush1.msra.mxu0 %v3410
  %3460 = vmatprep.subr.mxu0 0.0
  %3461 = vmatpush1.msra.mxu0 %v3434
  %3462 = vmatprep.subr.mxu0 0.0
  %3463 = vmatpush1.msra.mxu0 0.0
  %3464 = vmatprep.subr.mxu0 0.0
  %3465 = vmatpush1.msra.mxu0 0.0
  %3466 = vmatprep.subr.mxu0 0.0
  %3467 = vmatpush1.msra.mxu0 0.0
  %3468 = vmatprep.subr.mxu0 0.0
  %3469 = vmatpush1.msra.mxu0 0.0
  %3470 = vmatprep.subr.mxu0 0.0
  %3471 = vmatpush1.msra.mxu0 0.0
  %3472 = vmatprep.subr.mxu0 0.0
  %3473 = vmatpush1.msra.mxu0 0.0
  %3474 = vmatprep.subr.mxu0 0.0
  %3475 = vmatpush1.msra.mxu0 0.0
  %3476 = vmatprep.subr.mxu0 0.0
  %3477 = vmatpush1.msra.mxu0 0.0
  %3478 = vmatprep.subr.mxu0 0.0
  %3479 = vmatpush1.msra.mxu0 0.0
  %3480 = vmatprep.subr.mxu0 0.0
  %3481 = vmatpush1.msra.mxu0 0.0
  %3482 = vmatprep.subr.mxu0 0.0
  %3483 = vmatpush1.msra.mxu0 0.0
  %3484 = vmatprep.subr.mxu0 0.0
  %3485 = vmatpush1.msra.mxu0 0.0
  %3486 = vmatprep.subr.mxu0 0.0
  %3487 = vmatpush1.msra.mxu0 0.0
  %3488 = vmatprep.subr.mxu0 0.0
  %3489 = vmatpush1.msra.mxu0 0.0
  %3490 = vmatprep.subr.mxu0 0.0
  %3491 = vmatpush1.msra.mxu0 0.0
  %3492 = vmatprep.subr.mxu0 0.0
  %3493 = vmatpush1.msra.mxu0 0.0
  %3494 = vmatprep.subr.mxu0 0.0
  %3495 = vmatpush1.msra.mxu0 0.0
  %3496 = vmatprep.subr.mxu0 0.0
  %3497 = vmatpush1.msra.mxu0 0.0
  %3498 = vmatprep.subr.mxu0 0.0
  %3499 = vmatpush1.msra.mxu0 0.0
  %3500 = vmatprep.mubr.f32.mxu0 0.0
  %3501 = vmatmul.mubr.f32.gmra.mrb[0].mxu0 %v3413
  %v3502 = vpop.f32.mrb[0].mxu0
  %v3503 = vadd.f32 0.0, %v3502
  %v3504 = vpop.f32.mrb[0].mxu0
  %3505 = vmatprep.mubr.f32.mxu0 0.0
  %3506 = vmatmul.mubr.f32.gmra.mrb[0].mxu0 %v3416
  %v3507 = vpop.f32.mrb[0].mxu0
  %v3508 = vadd.f32 0.0, %v3507
  %v3509 = vpop.f32.mrb[0].mxu0
  %3510 = vmatprep.mubr.f32.mxu0 0.0
  %3511 = vmatmul.mubr.f32.gmra.mrb[0].mxu0 %v3419
  %v3512 = vpop.f32.mrb[0].mxu0
  %v3513 = vadd.f32 0.0, %v3512
  %v3514 = vpop.f32.mrb[0].mxu0
  %3515 = vmatprep.mubr.f32.mxu0 0.0
  %3516 = vmatmul.mubr.f32.gmra.mrb[0].mxu0 %v3422
  %v3517 = vpop.f32.mrb[0].mxu0
  %v3518 = vadd.f32 0.0, %v3517
  %v3519 = vpop.f32.mrb[0].mxu0
  %3520 = vmatprep.mubr.f32.mxu0 0.0
  %3521 = vmatmul.mubr.f32.gmra.mrb[0].mxu0 %v3425
  %v3522 = vpop.f32.mrb[0].mxu0
  %v3523 = vadd.f32 0.0, %v3522
  %v3524 = vpop.f32.mrb[0].mxu0
  %3525 = vmatprep.mubr.f32.mxu0 0.0
  %3526 = vmatmul.mubr.f32.gmra.mrb[0].mxu0 %v3428
  %v3527 = vpop.f32.mrb[0].mxu0
  %v3528 = vadd.f32 0.0, %v3527
  %v3529 = vpop.f32.mrb[0].mxu0
  %3530 = vmatprep.mubr.f32.mxu0 0.0
  %3531 = vmatmul.mubr.f32.gmra.mrb[0].mxu0 %v3431
  %v3532 = vpop.f32.mrb[0].mxu0
  %v3533 = vadd.f32 0.0, %v3532
  %v3534 = vpop.f32.mrb[0].mxu0
  %3535 = vdwg.mxu0
  %vm3536 = vcmp.gt.f32.partialorder %v3503, 0.0
  %vm3537 = vcmp.gt.f32.partialorder %v3508, 0.0
  %vm3538 = vcmp.gt.f32.partialorder %v3513, 0.0
  %vm3539 = vcmp.gt.f32.partialorder %v3518, 0.0
  %vm3540 = vcmp.gt.f32.partialorder %v3523, 0.0
  %vm3541 = vcmp.gt.f32.partialorder %v3528, 0.0
  %vm3542 = vcmp.gt.f32.partialorder %v3533, 0.0
  %v3543 = vmul.f32 %v3503, 0.2
  %v3544 = vmul.f32 %v3508, 0.2
  %v3545 = vmul.f32 %v3513, 0.2
  %v3546 = vmul.f32 %v3518, 0.2
  %v3547 = vmul.f32 %v3523, 0.2
  %v3548 = vmul.f32 %v3528, 0.2
  %v3549 = vmul.f32 %v3533, 0.2
  %v3550 = vsel %vm3536, %v3503, %v3543
  %v3551 = vsel %vm3537, %v3508, %v3544
  %v3552 = vsel %vm3538, %v3513, %v3545
  %v3553 = vsel %vm3539, %v3518, %v3546
  %v3554 = vsel %vm3540, %v3523, %v3547
  %v3555 = vsel %vm3541, %v3528, %v3548
  %v3556 = vsel %vm3542, %v3533, %v3549
  %s3557 = scalar_lea.vmem %s15, 32
  %v3558 = vld [vmem:[%s3557] sm:$0xff]
  %v3559 = vld [vmem:[%s3557 + $0x8] sm:$0xff]
  %v3560 = vld [vmem:[%s3557 + $0x10] sm:$0xff]
  %v3561 = vld [vmem:[%s3557 + $0x18] sm:$0xff]
  %v3563 = vsel %vm351, %v3550, 0
  %v3566 = vsel %vm351, %v3551, 0
  %v3569 = vsel %vm351, %v3552, 0
  %v3572 = vsel %vm351, %v3553, 0
  %v3575 = vsel %vm351, %v3554, 0
  %v3578 = vsel %vm351, %v3555, 0
  %v3581 = vsel %vm351, %v3556, 0
  %3583 = vmatprep.subr.mxu0 0.0
  %3584 = vmatpush1.msra.mxu0 %v3558
  %3585 = vmatprep.subr.mxu0 0.0
  %3586 = vmatpush1.msra.mxu0 %v3559
  %3587 = vmatprep.subr.mxu0 0.0
  %3588 = vmatpush1.msra.mxu0 %v3560
  %3589 = vmatprep.subr.mxu0 0.0
  %3590 = vmatpush1.msra.mxu0 %v3561
  %3591 = vmatprep.subr.mxu0 0.0
  %3592 = vmatpush1.msra.mxu0 0.0
  %3593 = vmatprep.subr.mxu0 0.0
  %3594 = vmatpush1.msra.mxu0 0.0
  %3595 = vmatprep.subr.mxu0 0.0
  %3596 = vmatpush1.msra.mxu0 0.0
  %3597 = vmatprep.subr.mxu0 0.0
  %3598 = vmatpush1.msra.mxu0 0.0
  %3599 = vmatprep.subr.mxu0 0.0
  %3600 = vmatpush1.msra.mxu0 0.0
  %3601 = vmatprep.subr.mxu0 0.0
  %3602 = vmatpush1.msra.mxu0 0.0
  %3603 = vmatprep.subr.mxu0 0.0
  %3604 = vmatpush1.msra.mxu0 0.0
  %3605 = vmatprep.subr.mxu0 0.0
  %3606 = vmatpush1.msra.mxu0 0.0
  %3607 = vmatprep.subr.mxu0 0.0
  %3608 = vmatpush1.msra.mxu0 0.0
  %3609 = vmatprep.subr.mxu0 0.0
  %3610 = vmatpush1.msra.mxu0 0.0
  %3611 = vmatprep.subr.mxu0 0.0
  %3612 = vmatpush1.msra.mxu0 0.0
  %3613 = vmatprep.subr.mxu0 0.0
  %3614 = vmatpush1.msra.mxu0 0.0
  %3615 = vmatprep.subr.mxu0 0.0
  %3616 = vmatpush1.msra.mxu0 0.0
  %3617 = vmatprep.subr.mxu0 0.0
  %3618 = vmatpush1.msra.mxu0 0.0
  %3619 = vmatprep.subr.mxu0 0.0
  %3620 = vmatpush1.msra.mxu0 0.0
  %3621 = vmatprep.subr.mxu0 0.0
  %3622 = vmatpush1.msra.mxu0 0.0
  %3623 = vmatprep.subr.mxu0 0.0
  %3624 = vmatpush1.msra.mxu0 0.0
  %3625 = vmatprep.subr.mxu0 0.0
  %3626 = vmatpush1.msra.mxu0 0.0
  %3627 = vmatprep.subr.mxu0 0.0
  %3628 = vmatpush1.msra.mxu0 0.0
  %3629 = vmatprep.subr.mxu0 0.0
  %3630 = vmatpush1.msra.mxu0 0.0
  %3631 = vmatprep.subr.mxu0 0.0
  %3632 = vmatpush1.msra.mxu0 0.0
  %3633 = vmatprep.subr.mxu0 0.0
  %3634 = vmatpush1.msra.mxu0 0.0
  %3635 = vmatprep.subr.mxu0 0.0
  %3636 = vmatpush1.msra.mxu0 0.0
  %3637 = vmatprep.subr.mxu0 0.0
  %3638 = vmatpush1.msra.mxu0 0.0
  %3639 = vmatprep.subr.mxu0 0.0
  %3640 = vmatpush1.msra.mxu0 0.0
  %3641 = vmatprep.subr.mxu0 0.0
  %3642 = vmatpush1.msra.mxu0 0.0
  %3643 = vmatprep.subr.mxu0 0.0
  %3644 = vmatpush1.msra.mxu0 0.0
  %3645 = vmatprep.subr.mxu0 0.0
  %3646 = vmatpush1.msra.mxu0 0.0
  %3647 = vmatprep.mubr.f32.mxu0 0.0
  %3648 = vmatmul.mubr.f32.gmra.mrb[0].mxu0 %v3563
  %v3649 = vpop.f32.mrb[0].mxu0
  %v3650 = vadd.f32 0.0, %v3649
  %v3651 = vpop.f32.mrb[0].mxu0
  %3652 = vmatprep.mubr.f32.mxu0 0.0
  %3653 = vmatmul.mubr.f32.gmra.mrb[0].mxu0 %v3566
  %v3654 = vpop.f32.mrb[0].mxu0
  %v3655 = vadd.f32 0.0, %v3654
  %v3656 = vpop.f32.mrb[0].mxu0
  %3657 = vmatprep.mubr.f32.mxu0 0.0
  %3658 = vmatmul.mubr.f32.gmra.mrb[0].mxu0 %v3569
  %v3659 = vpop.f32.mrb[0].mxu0
  %v3660 = vadd.f32 0.0, %v3659
  %v3661 = vpop.f32.mrb[0].mxu0
  %3662 = vmatprep.mubr.f32.mxu0 0.0
  %3663 = vmatmul.mubr.f32.gmra.mrb[0].mxu0 %v3572
  %v3664 = vpop.f32.mrb[0].mxu0
  %v3665 = vadd.f32 0.0, %v3664
  %v3666 = vpop.f32.mrb[0].mxu0
  %3667 = vmatprep.mubr.f32.mxu0 0.0
  %3668 = vmatmul.mubr.f32.gmra.mrb[0].mxu0 %v3575
  %v3669 = vpop.f32.mrb[0].mxu0
  %v3670 = vadd.f32 0.0, %v3669
  %v3671 = vpop.f32.mrb[0].mxu0
  %3672 = vmatprep.mubr.f32.mxu0 0.0
  %3673 = vmatmul.mubr.f32.gmra.mrb[0].mxu0 %v3578
  %v3674 = vpop.f32.mrb[0].mxu0
  %v3675 = vadd.f32 0.0, %v3674
  %v3676 = vpop.f32.mrb[0].mxu0
  %3677 = vmatprep.mubr.f32.mxu0 0.0
  %3678 = vmatmul.mubr.f32.gmra.mrb[0].mxu0 %v3581
  %v3679 = vpop.f32.mrb[0].mxu0
  %v3680 = vadd.f32 0.0, %v3679
  %v3681 = vpop.f32.mrb[0].mxu0
  %3682 = vdwg.mxu0
  %v3683 = vsel %vm566, %v3650, -inf
  %v3684 = vsel %vm566, %v3655, -inf
  %v3685 = vsel %vm566, %v3660, -inf
  %v3686 = vsel %vm566, %v3665, -inf
  %v3687 = vsel %vm566, %v3670, -inf
  %v3688 = vmax.f32 %v3683, %v3687
  %v3689 = vsel %vm566, %v3675, -inf
  %v3690 = vmax.f32 %v3684, %v3689
  %v3691 = vsel %vm566, %v3680, -inf
  %v3692 = vmax.f32 %v3685, %v3691
  %v3693 = vmax.f32 %v3688, %v3690
  %v3694 = vmax.f32 %v3692, %v3686
  %v3695 = vmax.f32 %v3693, %v3694
  %v3696 = vrot.slane %v3695, 4
  %v3697 = vmax.f32 %v3695, %v3696
  %v3698 = vrot.slane %v3697, 2
  %v3699 = vmax.f32 %v3697, %v3698
  %v3700 = vrot.slane %v3699, 1
  %v3701 = vmax.f32 %v3699, %v3700
  %v3702 = vsub.f32 %v3650, %v3701
  %v3703 = vsub.f32 %v3655, %v3701
  %v3704 = vsub.f32 %v3660, %v3701
  %v3705 = vsub.f32 %v3665, %v3701
  %v3706 = vsub.f32 %v3670, %v3701
  %v3707 = vsub.f32 %v3675, %v3701
  %v3708 = vsub.f32 %v3680, %v3701
  %v3710 = vsel %vm566, %v3702, 0
  %v3713 = vsel %vm566, %v3703, 0
  %v3716 = vsel %vm566, %v3704, 0
  %v3719 = vsel %vm566, %v3705, 0
  %v3722 = vsel %vm566, %v3706, 0
  %v3725 = vsel %vm566, %v3707, 0
  %v3728 = vsel %vm566, %v3708, 0
  %3730 = vmatprep.subr.mxu0 0.0
  %3731 = vmatpush1.msra.mxu0 %v592
  %3732 = vmatprep.subr.mxu0 0.0
  %3733 = vmatpush1.msra.mxu0 0.0
  %3734 = vmatprep.subr.mxu0 0.0
  %3735 = vmatpush1.msra.mxu0 0.0
  %3736 = vmatprep.subr.mxu0 0.0
  %3737 = vmatpush1.msra.mxu0 0.0
  %3738 = vmatprep.subr.mxu0 0.0
  %3739 = vmatpush1.msra.mxu0 0.0
  %3740 = vmatprep.subr.mxu0 0.0
  %3741 = vmatpush1.msra.mxu0 0.0
  %3742 = vmatprep.subr.mxu0 0.0
  %3743 = vmatpush1.msra.mxu0 0.0
  %3744 = vmatprep.subr.mxu0 0.0
  %3745 = vmatpush1.msra.mxu0 0.0
  %3746 = vmatprep.subr.mxu0 0.0
  %3747 = vmatpush1.msra.mxu0 0.0
  %3748 = vmatprep.subr.mxu0 0.0
  %3749 = vmatpush1.msra.mxu0 0.0
  %3750 = vmatprep.subr.mxu0 0.0
  %3751 = vmatpush1.msra.mxu0 0.0
  %3752 = vmatprep.subr.mxu0 0.0
  %3753 = vmatpush1.msra.mxu0 0.0
  %3754 = vmatprep.subr.mxu0 0.0
  %3755 = vmatpush1.msra.mxu0 0.0
  %3756 = vmatprep.subr.mxu0 0.0
  %3757 = vmatpush1.msra.mxu0 0.0
  %3758 = vmatprep.subr.mxu0 0.0
  %3759 = vmatpush1.msra.mxu0 0.0
  %3760 = vmatprep.subr.mxu0 0.0
  %3761 = vmatpush1.msra.mxu0 0.0
  %3762 = vmatprep.subr.mxu0 0.0
  %3763 = vmatpush1.msra.mxu0 0.0
  %3764 = vmatprep.subr.mxu0 0.0
  %3765 = vmatpush1.msra.mxu0 0.0
  %3766 = vmatprep.subr.mxu0 0.0
  %3767 = vmatpush1.msra.mxu0 0.0
  %3768 = vmatprep.subr.mxu0 0.0
  %3769 = vmatpush1.msra.mxu0 0.0
  %3770 = vmatprep.subr.mxu0 0.0
  %3771 = vmatpush1.msra.mxu0 0.0
  %3772 = vmatprep.subr.mxu0 0.0
  %3773 = vmatpush1.msra.mxu0 0.0
  %3774 = vmatprep.subr.mxu0 0.0
  %3775 = vmatpush1.msra.mxu0 0.0
  %3776 = vmatprep.subr.mxu0 0.0
  %3777 = vmatpush1.msra.mxu0 0.0
  %3778 = vmatprep.subr.mxu0 0.0
  %3779 = vmatpush1.msra.mxu0 0.0
  %3780 = vmatprep.subr.mxu0 0.0
  %3781 = vmatpush1.msra.mxu0 0.0
  %3782 = vmatprep.subr.mxu0 0.0
  %3783 = vmatpush1.msra.mxu0 0.0
  %3784 = vmatprep.subr.mxu0 0.0
  %3785 = vmatpush1.msra.mxu0 0.0
  %3786 = vmatprep.subr.mxu0 0.0
  %3787 = vmatpush1.msra.mxu0 0.0
  %3788 = vmatprep.subr.mxu0 0.0
  %3789 = vmatpush1.msra.mxu0 0.0
  %3790 = vmatprep.subr.mxu0 0.0
  %3791 = vmatpush1.msra.mxu0 0.0
  %3792 = vmatprep.subr.mxu0 0.0
  %3793 = vmatpush1.msra.mxu0 0.0
  %3794 = vmatprep.mubr.f32.mxu0 0.0
  %3795 = vmatmul.mubr.f32.gmra.mrb[0].mxu0 %v3710
  %v3796 = vpop.f32.mrb[0].mxu0
  %v3797 = vadd.f32 0.0, %v3796
  %v3798 = vpop.f32.mrb[0].mxu0
  %3799 = vmatprep.mubr.f32.mxu0 0.0
  %3800 = vmatmul.mubr.f32.gmra.mrb[0].mxu0 %v3713
  %v3801 = vpop.f32.mrb[0].mxu0
  %v3802 = vadd.f32 0.0, %v3801
  %v3803 = vpop.f32.mrb[0].mxu0
  %3804 = vmatprep.mubr.f32.mxu0 0.0
  %3805 = vmatmul.mubr.f32.gmra.mrb[0].mxu0 %v3716
  %v3806 = vpop.f32.mrb[0].mxu0
  %v3807 = vadd.f32 0.0, %v3806
  %v3808 = vpop.f32.mrb[0].mxu0
  %3809 = vmatprep.mubr.f32.mxu0 0.0
  %3810 = vmatmul.mubr.f32.gmra.mrb[0].mxu0 %v3719
  %v3811 = vpop.f32.mrb[0].mxu0
  %v3812 = vadd.f32 0.0, %v3811
  %v3813 = vpop.f32.mrb[0].mxu0
  %3814 = vmatprep.mubr.f32.mxu0 0.0
  %3815 = vmatmul.mubr.f32.gmra.mrb[0].mxu0 %v3722
  %v3816 = vpop.f32.mrb[0].mxu0
  %v3817 = vadd.f32 0.0, %v3816
  %v3818 = vpop.f32.mrb[0].mxu0
  %3819 = vmatprep.mubr.f32.mxu0 0.0
  %3820 = vmatmul.mubr.f32.gmra.mrb[0].mxu0 %v3725
  %v3821 = vpop.f32.mrb[0].mxu0
  %v3822 = vadd.f32 0.0, %v3821
  %v3823 = vpop.f32.mrb[0].mxu0
  %3824 = vmatprep.mubr.f32.mxu0 0.0
  %3825 = vmatmul.mubr.f32.gmra.mrb[0].mxu0 %v3728
  %v3826 = vpop.f32.mrb[0].mxu0
  %v3827 = vadd.f32 0.0, %v3826
  %v3828 = vpop.f32.mrb[0].mxu0
  %3829 = vdwg.mxu0
  %v3830 = vmul.f32 %v3797, 1.442695
  %v3831 = vpow.pop %v3830
  %v3832 = vmul.f32 %v3802, 1.442695
  %v3833 = vpow.pop %v3832
  %v3834 = vmul.f32 %v3807, 1.442695
  %v3835 = vpow.pop %v3834
  %v3836 = vmul.f32 %v3812, 1.442695
  %v3837 = vpow.pop %v3836
  %v3838 = vmul.f32 %v3817, 1.442695
  %v3839 = vpow.pop %v3838
  %v3840 = vmul.f32 %v3822, 1.442695
  %v3841 = vpow.pop %v3840
  %v3842 = vmul.f32 %v3827, 1.442695
  %v3843 = vpow.pop %v3842
  %3844 = vmatprep.subr.mxu0 0.0
  %3845 = vmatpush1.msra.mxu0 %v3831
  %3846 = vmatprep.subr.mxu0 0.0
  %3847 = vmatpush1.msra.mxu0 %v3833
  %3848 = vmatprep.subr.mxu0 0.0
  %3849 = vmatpush1.msra.mxu0 %v3835
  %3850 = vmatprep.subr.mxu0 0.0
  %3851 = vmatpush1.msra.mxu0 %v3837
  %3852 = vmatprep.subr.mxu0 0.0
  %3853 = vmatpush1.msra.mxu0 %v3839
  %3854 = vmatprep.subr.mxu0 0.0
  %3855 = vmatpush1.msra.mxu0 %v3841
  %3856 = vmatprep.subr.mxu0 0.0
  %3857 = vmatpush1.msra.mxu0 %v3843
  %3858 = vmatprep.subr.mxu0 0.0
  %3859 = vmatpush1.msra.mxu0 0.0
  %3860 = vmatprep.subr.mxu0 0.0
  %3861 = vmatpush1.msra.mxu0 0.0
  %3862 = vmatprep.subr.mxu0 0.0
  %3863 = vmatpush1.msra.mxu0 0.0
  %3864 = vmatprep.subr.mxu0 0.0
  %3865 = vmatpush1.msra.mxu0 0.0
  %3866 = vmatprep.subr.mxu0 0.0
  %3867 = vmatpush1.msra.mxu0 0.0
  %3868 = vmatprep.subr.mxu0 0.0
  %3869 = vmatpush1.msra.mxu0 0.0
  %3870 = vmatprep.subr.mxu0 0.0
  %3871 = vmatpush1.msra.mxu0 0.0
  %3872 = vmatprep.subr.mxu0 0.0
  %3873 = vmatpush1.msra.mxu0 0.0
  %3874 = vmatprep.subr.mxu0 0.0
  %3875 = vmatpush1.msra.mxu0 0.0
  %3876 = vmatprep.subr.mxu0 0.0
  %3877 = vmatpush1.msra.mxu0 0.0
  %3878 = vmatprep.subr.mxu0 0.0
  %3879 = vmatpush1.msra.mxu0 0.0
  %3880 = vmatprep.subr.mxu0 0.0
  %3881 = vmatpush1.msra.mxu0 0.0
  %3882 = vmatprep.subr.mxu0 0.0
  %3883 = vmatpush1.msra.mxu0 0.0
  %3884 = vmatprep.subr.mxu0 0.0
  %3885 = vmatpush1.msra.mxu0 0.0
  %3886 = vmatprep.subr.mxu0 0.0
  %3887 = vmatpush1.msra.mxu0 0.0
  %3888 = vmatprep.subr.mxu0 0.0
  %3889 = vmatpush1.msra.mxu0 0.0
  %3890 = vmatprep.subr.mxu0 0.0
  %3891 = vmatpush1.msra.mxu0 0.0
  %3892 = vmatprep.subr.mxu0 0.0
  %3893 = vmatpush1.msra.mxu0 0.0
  %3894 = vmatprep.subr.mxu0 0.0
  %3895 = vmatpush1.msra.mxu0 0.0
  %3896 = vmatprep.subr.mxu0 0.0
  %3897 = vmatpush1.msra.mxu0 0.0
  %3898 = vmatprep.subr.mxu0 0.0
  %3899 = vmatpush1.msra.mxu0 0.0
  %3900 = vmatprep.subr.mxu0 0.0
  %3901 = vmatpush1.msra.mxu0 0.0
  %3902 = vmatprep.subr.mxu0 0.0
  %3903 = vmatpush1.msra.mxu0 0.0
  %3904 = vmatprep.subr.mxu0 0.0
  %3905 = vmatpush1.msra.mxu0 0.0
  %3906 = vmatprep.subr.mxu0 0.0
  %3907 = vmatpush1.msra.mxu0 0.0
  %3908 = vmatprep.mubr.f32.mxu0 0.0
  %3909 = vmatmul.mubr.f32.gmra.mrb[0].mxu0 %v2749
  %v3910 = vpop.f32.mrb[0].mxu0
  %v3911 = vadd.f32 0.0, %v3910
  %v3912 = vpop.f32.mrb[0].mxu0
  %3913 = vmatprep.mubr.f32.mxu0 0.0
  %3914 = vmatmul.mubr.f32.gmra.mrb[0].mxu0 %v2752
  %v3915 = vpop.f32.mrb[0].mxu0
  %v3916 = vadd.f32 0.0, %v3915
  %v3917 = vpop.f32.mrb[0].mxu0
  %3918 = vdwg.mxu0
  %3919 = vmatprep.subr.mxu0 0.0
  %3920 = vmatpush1.msra.mxu0 %v3911
  %3921 = vmatprep.subr.mxu0 0.0
  %3922 = vmatpush1.msra.mxu0 %v3916
  %3923 = vmatprep.subr.mxu0 0.0
  %3924 = vmatpush1.msra.mxu0 0.0
  %3925 = vmatprep.subr.mxu0 0.0
  %3926 = vmatpush1.msra.mxu0 0.0
  %3927 = vmatprep.subr.mxu0 0.0
  %3928 = vmatpush1.msra.mxu0 0.0
  %3929 = vmatprep.subr.mxu0 0.0
  %3930 = vmatpush1.msra.mxu0 0.0
  %3931 = vmatprep.subr.mxu0 0.0
  %3932 = vmatpush1.msra.mxu0 0.0
  %3933 = vmatprep.subr.mxu0 0.0
  %3934 = vmatpush1.msra.mxu0 0.0
  %3935 = vmatprep.subr.mxu0 0.0
  %3936 = vmatpush1.msra.mxu0 0.0
  %3937 = vmatprep.subr.mxu0 0.0
  %3938 = vmatpush1.msra.mxu0 0.0
  %3939 = vmatprep.subr.mxu0 0.0
  %3940 = vmatpush1.msra.mxu0 0.0
  %3941 = vmatprep.subr.mxu0 0.0
  %3942 = vmatpush1.msra.mxu0 0.0
  %3943 = vmatprep.subr.mxu0 0.0
  %3944 = vmatpush1.msra.mxu0 0.0
  %3945 = vmatprep.subr.mxu0 0.0
  %3946 = vmatpush1.msra.mxu0 0.0
  %3947 = vmatprep.subr.mxu0 0.0
  %3948 = vmatpush1.msra.mxu0 0.0
  %3949 = vmatprep.subr.mxu0 0.0
  %3950 = vmatpush1.msra.mxu0 0.0
  %3951 = vmatprep.subr.mxu0 0.0
  %3952 = vmatpush1.msra.mxu0 0.0
  %3953 = vmatprep.subr.mxu0 0.0
  %3954 = vmatpush1.msra.mxu0 0.0
  %3955 = vmatprep.subr.mxu0 0.0
  %3956 = vmatpush1.msra.mxu0 0.0
  %3957 = vmatprep.subr.mxu0 0.0
  %3958 = vmatpush1.msra.mxu0 0.0
  %3959 = vmatprep.subr.mxu0 0.0
  %3960 = vmatpush1.msra.mxu0 0.0
  %3961 = vmatprep.subr.mxu0 0.0
  %3962 = vmatpush1.msra.mxu0 0.0
  %3963 = vmatprep.subr.mxu0 0.0
  %3964 = vmatpush1.msra.mxu0 0.0
  %3965 = vmatprep.subr.mxu0 0.0
  %3966 = vmatpush1.msra.mxu0 0.0
  %3967 = vmatprep.subr.mxu0 0.0
  %3968 = vmatpush1.msra.mxu0 0.0
  %3969 = vmatprep.subr.mxu0 0.0
  %3970 = vmatpush1.msra.mxu0 0.0
  %3971 = vmatprep.subr.mxu0 0.0
  %3972 = vmatpush1.msra.mxu0 0.0
  %3973 = vmatprep.subr.mxu0 0.0
  %3974 = vmatpush1.msra.mxu0 0.0
  %3975 = vmatprep.subr.mxu0 0.0
  %3976 = vmatpush1.msra.mxu0 0.0
  %3977 = vmatprep.subr.mxu0 0.0
  %3978 = vmatpush1.msra.mxu0 0.0
  %3979 = vmatprep.subr.mxu0 0.0
  %3980 = vmatpush1.msra.mxu0 0.0
  %3981 = vmatprep.subr.mxu0 0.0
  %3982 = vmatpush1.msra.mxu0 0.0
  %3983 = vmatprep.mubr.f32.mxu0 0.0
  %3984 = vmatmul.mubr.f32.gmra.mrb[0].mxu0 %v1983
  %v3985 = vpop.f32.mrb[0].mxu0
  %v3986 = vadd.f32 1e-16, %v3985
  %v3987 = vpop.f32.mrb[0].mxu0
  %3988 = vmatprep.mubr.f32.mxu0 0.0
  %3989 = vmatmul.mubr.f32.gmra.mrb[0].mxu0 %v1986
  %v3990 = vpop.f32.mrb[0].mxu0
  %v3991 = vadd.f32 1e-16, %v3990
  %v3992 = vpop.f32.mrb[0].mxu0
  %3993 = vmatprep.mubr.f32.mxu0 0.0
  %3994 = vmatmul.mubr.f32.gmra.mrb[0].mxu0 %v1989
  %v3995 = vpop.f32.mrb[0].mxu0
  %v3996 = vadd.f32 1e-16, %v3995
  %v3997 = vpop.f32.mrb[0].mxu0
  %3998 = vmatprep.mubr.f32.mxu0 0.0
  %3999 = vmatmul.mubr.f32.gmra.mrb[0].mxu0 %v1992
  %v4000 = vpop.f32.mrb[0].mxu0
  %v4001 = vadd.f32 1e-16, %v4000
  %v4002 = vpop.f32.mrb[0].mxu0
  %4003 = vmatprep.mubr.f32.mxu0 0.0
  %4004 = vmatmul.mubr.f32.gmra.mrb[0].mxu0 %v1995
  %v4005 = vpop.f32.mrb[0].mxu0
  %v4006 = vadd.f32 1e-16, %v4005
  %v4007 = vpop.f32.mrb[0].mxu0
  %4008 = vmatprep.mubr.f32.mxu0 0.0
  %4009 = vmatmul.mubr.f32.gmra.mrb[0].mxu0 %v1998
  %v4010 = vpop.f32.mrb[0].mxu0
  %v4011 = vadd.f32 1e-16, %v4010
  %v4012 = vpop.f32.mrb[0].mxu0
  %4013 = vmatprep.mubr.f32.mxu0 0.0
  %4014 = vmatmul.mubr.f32.gmra.mrb[0].mxu0 %v2001
  %v4015 = vpop.f32.mrb[0].mxu0
  %v4016 = vadd.f32 1e-16, %v4015
  %v4017 = vpop.f32.mrb[0].mxu0
  %4018 = vdwg.mxu0
  %v4019 = vrcp.pop %v3986
  %v4020 = vrcp.pop %v3991
  %v4021 = vrcp.pop %v3996
  %v4022 = vrcp.pop %v4001
  %v4023 = vrcp.pop %v4006
  %v4024 = vrcp.pop %v4011
  %v4025 = vrcp.pop %v4016
  %v4026 = vmul.f32 %v3831, %v4019
  %v4027 = vmul.f32 %v3833, %v4020
  %v4028 = vmul.f32 %v3835, %v4021
  %v4029 = vmul.f32 %v3837, %v4022
  %v4030 = vmul.f32 %v3839, %v4023
  %v4031 = vmul.f32 %v3841, %v4024
  %v4032 = vmul.f32 %v3843, %v4025
  %4040 = vrot.lane.b32.xlu0 %v3503, 96
  %v4041 = vpop.permute.xlu0 %4040
  %4042 = vrot.lane.b32.xlu0 %v3508, 96
  %v4043 = vpop.permute.xlu0 %4042
  %4044 = vrot.lane.b32.xlu0 %v3513, 96
  %v4045 = vpop.permute.xlu0 %4044
  %4046 = vrot.lane.b32.xlu0 %v3518, 96
  %v4047 = vpop.permute.xlu0 %4046
  %4048 = vrot.lane.b32.xlu0 %v3523, 96
  %v4049 = vpop.permute.xlu0 %4048
  %4050 = vrot.lane.b32.xlu0 %v3528, 96
  %v4051 = vpop.permute.xlu0 %4050
  %4052 = vrot.lane.b32.xlu0 %v3533, 96
  %v4053 = vpop.permute.xlu0 %4052
  %v4061 = vmul.f32 %v4026, %v4041
  %v4062 = vmul.f32 %v4027, %v4043
  %v4063 = vmul.f32 %v4028, %v4045
  %v4064 = vmul.f32 %v4029, %v4047
  %v4065 = vmul.f32 %v4030, %v4049
  %v4066 = vmul.f32 %v4031, %v4051
  %v4067 = vmul.f32 %v4032, %v4053
  %s4068 = scalar_lea.vmem %s16, 32
  %v4069 = vld [vmem:[%s4068] sm:$0xff]
  %v4070 = vld [vmem:[%s4068 + $0x8] sm:$0xff]
  %v4071 = vld [vmem:[%s4068 + $0x10] sm:$0xff]
  %v4072 = vld [vmem:[%s4068 + $0x18] sm:$0xff]
  %v4074 = vsel %vm351, %v3147, 0
  %v4077 = vsel %vm351, %v3148, 0
  %4079 = vmatprep.subr.mxu0 0.0
  %4080 = vmatpush1.msra.mxu0 %v4069
  %4081 = vmatprep.subr.mxu0 0.0
  %4082 = vmatpush1.msra.mxu0 %v4070
  %4083 = vmatprep.subr.mxu0 0.0
  %4084 = vmatpush1.msra.mxu0 %v4071
  %4085 = vmatprep.subr.mxu0 0.0
  %4086 = vmatpush1.msra.mxu0 %v4072
  %4087 = vmatprep.subr.mxu0 0.0
  %4088 = vmatpush1.msra.mxu0 0.0
  %4089 = vmatprep.subr.mxu0 0.0
  %4090 = vmatpush1.msra.mxu0 0.0
  %4091 = vmatprep.subr.mxu0 0.0
  %4092 = vmatpush1.msra.mxu0 0.0
  %4093 = vmatprep.subr.mxu0 0.0
  %4094 = vmatpush1.msra.mxu0 0.0
  %4095 = vmatprep.subr.mxu0 0.0
  %4096 = vmatpush1.msra.mxu0 0.0
  %4097 = vmatprep.subr.mxu0 0.0
  %4098 = vmatpush1.msra.mxu0 0.0
  %4099 = vmatprep.subr.mxu0 0.0
  %4100 = vmatpush1.msra.mxu0 0.0
  %4101 = vmatprep.subr.mxu0 0.0
  %4102 = vmatpush1.msra.mxu0 0.0
  %4103 = vmatprep.subr.mxu0 0.0
  %4104 = vmatpush1.msra.mxu0 0.0
  %4105 = vmatprep.subr.mxu0 0.0
  %4106 = vmatpush1.msra.mxu0 0.0
  %4107 = vmatprep.subr.mxu0 0.0
  %4108 = vmatpush1.msra.mxu0 0.0
  %4109 = vmatprep.subr.mxu0 0.0
  %4110 = vmatpush1.msra.mxu0 0.0
  %4111 = vmatprep.subr.mxu0 0.0
  %4112 = vmatpush1.msra.mxu0 0.0
  %4113 = vmatprep.subr.mxu0 0.0
  %4114 = vmatpush1.msra.mxu0 0.0
  %4115 = vmatprep.subr.mxu0 0.0
  %4116 = vmatpush1.msra.mxu0 0.0
  %4117 = vmatprep.subr.mxu0 0.0
  %4118 = vmatpush1.msra.mxu0 0.0
  %4119 = vmatprep.subr.mxu0 0.0
  %4120 = vmatpush1.msra.mxu0 0.0
  %4121 = vmatprep.subr.mxu0 0.0
  %4122 = vmatpush1.msra.mxu0 0.0
  %4123 = vmatprep.subr.mxu0 0.0
  %4124 = vmatpush1.msra.mxu0 0.0
  %4125 = vmatprep.subr.mxu0 0.0
  %4126 = vmatpush1.msra.mxu0 0.0
  %4127 = vmatprep.subr.mxu0 0.0
  %4128 = vmatpush1.msra.mxu0 0.0
  %4129 = vmatprep.subr.mxu0 0.0
  %4130 = vmatpush1.msra.mxu0 0.0
  %4131 = vmatprep.subr.mxu0 0.0
  %4132 = vmatpush1.msra.mxu0 0.0
  %4133 = vmatprep.subr.mxu0 0.0
  %4134 = vmatpush1.msra.mxu0 0.0
  %4135 = vmatprep.subr.mxu0 0.0
  %4136 = vmatpush1.msra.mxu0 0.0
  %4137 = vmatprep.subr.mxu0 0.0
  %4138 = vmatpush1.msra.mxu0 0.0
  %4139 = vmatprep.subr.mxu0 0.0
  %4140 = vmatpush1.msra.mxu0 0.0
  %4141 = vmatprep.subr.mxu0 0.0
  %4142 = vmatpush1.msra.mxu0 0.0
  %4143 = vmatprep.mubr.f32.mxu0 0.0
  %4144 = vmatmul.mubr.f32.gmra.mrb[0].mxu0 %v4074
  %v4145 = vpop.f32.mrb[0].mxu0
  %v4146 = vadd.f32 0.0, %v4145
  %v4147 = vpop.f32.mrb[0].mxu0
  %4148 = vmatprep.mubr.f32.mxu0 0.0
  %4149 = vmatmul.mubr.f32.gmra.mrb[0].mxu0 %v4077
  %v4150 = vpop.f32.mrb[0].mxu0
  %v4151 = vadd.f32 0.0, %v4150
  %v4152 = vpop.f32.mrb[0].mxu0
  %4153 = vdwg.mxu0
  %4154 = vmatprep.subr.mxu0 0.0
  %4155 = vmatpush1.msra.mxu0 %v4061
  %4156 = vmatprep.subr.mxu0 0.0
  %4157 = vmatpush1.msra.mxu0 %v4062
  %4158 = vmatprep.subr.mxu0 0.0
  %4159 = vmatpush1.msra.mxu0 %v4063
  %4160 = vmatprep.subr.mxu0 0.0
  %4161 = vmatpush1.msra.mxu0 %v4064
  %4162 = vmatprep.subr.mxu0 0.0
  %4163 = vmatpush1.msra.mxu0 %v4065
  %4164 = vmatprep.subr.mxu0 0.0
  %4165 = vmatpush1.msra.mxu0 %v4066
  %4166 = vmatprep.subr.mxu0 0.0
  %4167 = vmatpush1.msra.mxu0 %v4067
  %4168 = vmatprep.subr.mxu0 0.0
  %4169 = vmatpush1.msra.mxu0 0.0
  %4170 = vmatprep.subr.mxu0 0.0
  %4171 = vmatpush1.msra.mxu0 0.0
  %4172 = vmatprep.subr.mxu0 0.0
  %4173 = vmatpush1.msra.mxu0 0.0
  %4174 = vmatprep.subr.mxu0 0.0
  %4175 = vmatpush1.msra.mxu0 0.0
  %4176 = vmatprep.subr.mxu0 0.0
  %4177 = vmatpush1.msra.mxu0 0.0
  %4178 = vmatprep.subr.mxu0 0.0
  %4179 = vmatpush1.msra.mxu0 0.0
  %4180 = vmatprep.subr.mxu0 0.0
  %4181 = vmatpush1.msra.mxu0 0.0
  %4182 = vmatprep.subr.mxu0 0.0
  %4183 = vmatpush1.msra.mxu0 0.0
  %4184 = vmatprep.subr.mxu0 0.0
  %4185 = vmatpush1.msra.mxu0 0.0
  %4186 = vmatprep.subr.mxu0 0.0
  %4187 = vmatpush1.msra.mxu0 0.0
  %4188 = vmatprep.subr.mxu0 0.0
  %4189 = vmatpush1.msra.mxu0 0.0
  %4190 = vmatprep.subr.mxu0 0.0
  %4191 = vmatpush1.msra.mxu0 0.0
  %4192 = vmatprep.subr.mxu0 0.0
  %4193 = vmatpush1.msra.mxu0 0.0
  %4194 = vmatprep.subr.mxu0 0.0
  %4195 = vmatpush1.msra.mxu0 0.0
  %4196 = vmatprep.subr.mxu0 0.0
  %4197 = vmatpush1.msra.mxu0 0.0
  %4198 = vmatprep.subr.mxu0 0.0
  %4199 = vmatpush1.msra.mxu0 0.0
  %4200 = vmatprep.subr.mxu0 0.0
  %4201 = vmatpush1.msra.mxu0 0.0
  %4202 = vmatprep.subr.mxu0 0.0
  %4203 = vmatpush1.msra.mxu0 0.0
  %4204 = vmatprep.subr.mxu0 0.0
  %4205 = vmatpush1.msra.mxu0 0.0
  %4206 = vmatprep.subr.mxu0 0.0
  %4207 = vmatpush1.msra.mxu0 0.0
  %4208 = vmatprep.subr.mxu0 0.0
  %4209 = vmatpush1.msra.mxu0 0.0
  %4210 = vmatprep.subr.mxu0 0.0
  %4211 = vmatpush1.msra.mxu0 0.0
  %4212 = vmatprep.subr.mxu0 0.0
  %4213 = vmatpush1.msra.mxu0 0.0
  %4214 = vmatprep.subr.mxu0 0.0
  %4215 = vmatpush1.msra.mxu0 0.0
  %4216 = vmatprep.subr.mxu0 0.0
  %4217 = vmatpush1.msra.mxu0 0.0
  %4218 = vmatprep.mubr.f32.mxu0 0.0
  %4219 = vmatmul.mubr.f32.gmra.mrb[0].mxu0 %v2749
  %v4220 = vpop.f32.mrb[0].mxu0
  %v4221 = vadd.f32 %v4146, %v4220
  %v4222 = vpop.f32.mrb[0].mxu0
  %4223 = vmatprep.mubr.f32.mxu0 0.0
  %4224 = vmatmul.mubr.f32.gmra.mrb[0].mxu0 %v2752
  %v4225 = vpop.f32.mrb[0].mxu0
  %v4226 = vadd.f32 %v4151, %v4225
  %v4227 = vpop.f32.mrb[0].mxu0
  %4228 = vdwg.mxu0
  %s4229 = scalar_lea.vmem %s17, 1
  %v4230 = vld [vmem:[%s4229] sm:$0x1]
  %v4232 = vlaneseq
  %v4233 = vshrl.u32 %v4232, 7
  %v4234 = vsub.s32 0, %v4233
  %v4235 = vrot.slane %v4230, %v4234
  %v4237 = vadd.f32 %v4221, %v4235
  %v4238 = vadd.f32 %v4226, %v4235
  %v4239 = vmax.f32 %v4237, 0.0
  %v4240 = vmax.f32 %v4238, 0.0
  %4241 = vst.msk [vmem:[%s18] sm:$0xff] %vm351, %v4239
  %4242 = vst.msk [vmem:[%s18 + $0x8] sm:$0xff] %vm351, %v4240
  %4243 = vst.msk [vmem:[%s18 + $0x10] sm:$0xff] %vm351, %v1835
  // Predicated region
  $region74: #{encoder_forward.1} parent=0 // pred_check
    _
  $region75: #{encoder_forward.1} parent=0 // pred_check_branch
    %4245 = sbr.rel (0) target = $region77
  $region76: #{encoder_forward.1} parent=0 // pred_region
    _
  $region77: #{encoder_forward.1} parent=0 // pred_fallthru
    _
  // Predicated region
  $region78: #{encoder_forward.1} parent=0 // pred_check
    _
  $region79: #{encoder_forward.1} parent=0 // pred_check_branch
    %4247 = sbr.rel (0) target = $region81
  $region80: #{encoder_forward.1} parent=0 // pred_region
    _
  $region81: #{encoder_forward.1} parent=0 // pred_fallthru
    _

</llo_original>
